<compile_context>
chip_gen: v5e
topology: v5e:2x2
jax: 0.10.0
libtpu: 0.0.40
codegen_flags: <defaults>
</compile_context>

<pallas_src>
import functools

import numpy as np

import jax
import jax.numpy as jnp
from jax.experimental import pallas as pl
from jax.experimental.pallas import tpu as pltpu


# --------------------------- Fused Pallas kernel -----------------------------

def _patch_merging_kernel(x_ref, pavg_ref, pbc_ref, gamma_ref, w_ref, bias_ref,
                          o_ref, *, p, c_in, block_bt, eps):
    """LayerNorm + Conv3d(kernel=stride=p) for BLOCK_BT slabs, all in VMEM.

    Per-grid-step shapes:
      x_ref    : (BLOCK_BT, K, S2)   tap-major im2col slab, K = p^3*C,
                                     rows ordered (kd, kh, kw, c),
                                     lanes ordered (d2, h2, w2)
      pavg_ref : (S2, G2)            0/1 lane-group sum matrix, G2 = D2*H2
      pbc_ref  : (G2, S2)            0/1 lane-group broadcast matrix
      gamma_ref: (1, p, C, S2)       LayerNorm gamma slab (per kw, per w2)
      w_ref    : (2C, K)  bf16       flattened conv weight (tap-major columns)
      bias_ref : (2C, S2) f32        conv bias + folded LayerNorm beta term
      o_ref    : (BLOCK_BT, 2C, S2)  output slab (module's layout, no transpose)
    """
    K = x_ref.shape[1]
    S2 = x_ref.shape[2]
    G2 = pavg_ref.shape[1]
    W2 = S2 // G2
    GL = block_bt * p * p            # leading groups: (b_local, kd, kh)
    M2 = block_bt * K                # fattened M for the LN reductions
    inv_w = 1.0 / (p * W2)           # 1 / W  (LayerNorm group size)

    # (BLOCK_BT, K, S2) -> (GL, kw, C, S2): the LN group for a fixed row is
    # "all kw (axis 1) x all w2 (within a contiguous W2-lane chunk)".
    x4 = x_ref[...].astype(jnp.float32).reshape(GL, p, c_in, S2)
    x2 = x4.reshape(M2, S2)

    pavg = pavg_ref[...]             # (S2, G2) f32
    pbc = pbc_ref[...]               # (G2, S2) f32

    def group_sums(v2):
        # v2: (M2, S2) -> per-LN-group sums, shape (GL, 1, C, G2).
        part = jnp.dot(v2, pavg, preferred_element_type=jnp.float32)   # lane reduce
        r4 = part.reshape(GL, p, c_in, G2)
        s = r4[:, 0:1]
        for i in range(1, p):                                          # kw reduce
            s = s + r4[:, i:i + 1]
        return s

    def group_bcast(g):
        # (GL, 1, C, G2) -> (GL, 1, C, S2): repeat each group over its W2 lanes;
        # the kw broadcast happens for free via axis-1 broadcasting below.
        return jnp.dot(g.reshape(GL * c_in, G2), pbc,
                       preferred_element_type=jnp.float32).reshape(GL, 1, c_in, S2)

    # LayerNorm (biased variance, eps) over the trailing-W groups.
    mean_g = group_sums(x2) * inv_w
    xc4 = x4 - group_bcast(mean_g)
    var_g = group_sums((xc4 * xc4).reshape(M2, S2)) * inv_w
    scale4 = group_bcast(jax.lax.rsqrt(var_g + eps))

    # gamma applied here; beta is folded into bias_ref in the wrapper.
    xn4 = xc4 * scale4 * gamma_ref[...]
    xn = xn4.reshape(block_bt, K, S2).astype(jnp.bfloat16)

    # Conv3d(kernel=stride=p, padding=0) as one fused (2C, K) @ (K, S2) GEMM
    # per slab (bf16 operands, f32 accumulation).
    w_bf = w_ref[...]                # (2C, K) bf16
    bias = bias_ref[...]             # (2C, S2) f32
    for b in range(block_bt):        # static unroll; weight stays MXU-resident
        acc = jnp.dot(w_bf, xn[b], preferred_element_type=jnp.float32)
        o_ref[b] = (acc + bias).astype(o_ref.dtype)


# --------------------------- Tiny compile-time constants ----------------------

@functools.lru_cache(maxsize=None)
def _ln_group_matrices(s2, g2):
    """0/1 lane-group sum / broadcast matrices for the grouped LayerNorm."""
    w2 = s2 // g2
    g_of_s = np.arange(s2) // w2
    pavg = (g_of_s[:, None] == np.arange(g2)[None, :]).astype(np.float32)  # (S2, G2)
    pbc = np.ascontiguousarray(pavg.T)                                     # (G2, S2)
    return pavg, pbc


def _pick_block_bt(bt, target):
    bb = min(target, bt)
    while bt % bb:
        bb -= 1
    return bb


# --------------------------- Forward wrapper ----------------------------------

@functools.partial(jax.jit, static_argnums=(2, 3, 4))
def patch_merging_forward(x, params, input_resolution, patch_size=2, block_bt=16):
    B, T, D, H, W, C = x.shape
    assert (D, H, W) == tuple(input_resolution), "input feature has wrong size"
    p = patch_size
    assert D % p == 0 and H % p == 0 and W % p == 0
    # The reference applies LayerNorm(dim) to the (B*T, C, D, H, W) view, i.e.
    # over the trailing W axis -> requires W == dim (same quirk as PyTorch).
    assert params["ln_gamma"].shape[-1] == W

    D2, H2, W2 = D // p, H // p, W // p
    S2 = D2 * H2 * W2
    G2 = D2 * H2
    K = p ** 3 * C
    C2 = 2 * C
    BT = B * T
    bbt = _pick_block_bt(BT, block_bt)

    # --- activation rearrangement (one XLA pass over x) ------------------------
    # Mirrors x.permute(0,5,2,3,4,1).contiguous().view(B*T, C, D, H, W), then
    # splits every spatial axis into (outer, tap) so the kernel sees tap-major
    # rows (kd, kh, kw, c) and lane-dense spatial columns (d2, h2, w2).
    # TODO(synk): at production widths (C >= 128) flip to channels-last and fold
    # this permute into the BlockSpec index_map to remove the extra HBM pass.
    xperm = jnp.transpose(x, (0, 5, 2, 3, 4, 1))                # (B, C, D, H, W, T)
    xcol = xperm.reshape(BT, C, D2, p, H2, p, W2, p)            # raw reinterpretation
    xr = jnp.transpose(xcol, (0, 3, 5, 7, 1, 2, 4, 6)).reshape(BT, K, S2)

    # --- tiny constants (trace-time numpy / a few KiB of param reshuffling) ----
    pavg, pbc = _ln_group_matrices(S2, G2)

    gamma = params["ln_gamma"].astype(jnp.float32)
    beta = params["ln_beta"].astype(jnp.float32)
    conv_w = params["conv_w"].astype(jnp.float32)               # (2C, C, p, p, p)
    conv_b = params["conv_b"].astype(jnp.float32)

    w_idx = p * np.arange(W2)[None, :] + np.arange(p)[:, None]  # (kw, w2) -> w
    gamma_kw = gamma[w_idx]                                     # (p, W2)
    gamma_slab = jnp.broadcast_to(
        gamma_kw[:, None, None, None, :], (p, C, D2, H2, W2)).reshape(1, p, C, S2)

    # Conv weight, tap-major columns: k = ((kd*p + kh)*p + kw)*C + c (bf16 MXU operand).
    w_flat = jnp.transpose(conv_w, (0, 2, 3, 4, 1)).reshape(C2, K).astype(jnp.bfloat16)

    # LayerNorm beta folded into the conv bias (data-independent):
    #   bias[o, (d2,h2,w2)] = conv_b[o] + sum_kw beta[p*w2+kw] * sum_{c,kd,kh} W[o,c,kd,kh,kw]
    w_kw_sum = jnp.sum(conv_w, axis=(1, 2, 3))                  # (2C, p)
    beta_contrib = jnp.dot(w_kw_sum, beta[w_idx])               # (2C, W2)
    bias_slab = conv_b[:, None] + jnp.broadcast_to(
        beta_contrib[:, None, None, :], (C2, D2, H2, W2)).reshape(C2, S2)

    kernel = functools.partial(_patch_merging_kernel, p=p, c_in=C,
                               block_bt=bbt, eps=1e-5)

    # NOTE: at scaled-up shapes, size bbt so that
    #   2 * bbt*K*S2*4 (x) + 2 * bbt*C2*S2*4 (out) + constants  fits the VMEM
    # budget of the target generation (~64 MiB on v7x, 128 MiB on v5e/v6e);
    # the resident constants could additionally be single-buffered.
    out = pl.pallas_call(
        kernel,
        out_shape=jax.ShapeDtypeStruct((BT, C2, S2), x.dtype),
        grid=(BT // bbt,),
        in_specs=[
            pl.BlockSpec((bbt, K, S2), lambda n: (n, 0, 0)),      # activation slabs
            pl.BlockSpec((S2, G2), lambda n: (0, 0)),             # LN lane-group sum (resident)
            pl.BlockSpec((G2, S2), lambda n: (0, 0)),             # LN lane-group bcast (resident)
            pl.BlockSpec((1, p, C, S2), lambda n: (0, 0, 0, 0)),  # gamma slab (resident)
            pl.BlockSpec((C2, K), lambda n: (0, 0)),              # fused conv weight (resident)
            pl.BlockSpec((C2, S2), lambda n: (0, 0)),             # bias + folded beta (resident)
        ],
        out_specs=pl.BlockSpec((bbt, C2, S2), lambda n: (n, 0, 0)),
        compiler_params=pltpu.CompilerParams(
            dimension_semantics=("parallel",),
        ),
    )(xr, pavg, pbc, gamma_slab, w_flat, bias_slab)

    # (BT, 2C, S2) -> (B, T, 2C, D2, H2, W2): metadata-only reshape, no copy.
    return out.reshape(B, T, C2, D2, H2, W2)


# --------------------------- Pure-JAX reference (sanity check) ----------------

def _reference(x, params, patch_size=2):
    B, T, D, H, W, C = x.shape
    p = patch_size
    xp = jnp.transpose(x, (0, 5, 2, 3, 4, 1)).reshape(B * T, C, D, H, W)
    mean = jnp.mean(xp, axis=-1, keepdims=True)
    var = jnp.mean((xp - mean) ** 2, axis=-1, keepdims=True)
    xn = (xp - mean) * jax.lax.rsqrt(var + 1e-5) * params["ln_gamma"] + params["ln_beta"]
    y = jax.lax.conv_general_dilated(
        xn, params["conv_w"],
        window_strides=(p,) * 3, padding="VALID",
        dimension_numbers=("NCDHW", "OIDHW", "NCDHW"),
    ) + params["conv_b"][None, :, None, None, None]
    return y.reshape(B, T, 2 * C, D // p, H // p, W // p)


# ------------------------------- Main ------------------------------------------

if __name__ == "__main__":
    # LayerNorm(dim) over the trailing (W) axis requires W == dim -> D=H=W=C=8.
    # T=16 so B*T=32 exercises BLOCK_BT=16 batching with a 2-step grid.
    B, T, D, H, W, C = 2, 16, 8, 8, 8, 8
    dim = C
    patch_size = 2

    key = jax.random.PRNGKey(0)
    kx, kw_, kb, kg, kbt = jax.random.split(key, 5)

    x = jax.random.normal(kx, (B, T, D, H, W, C), dtype=jnp.float32)

    params = {
        "ln_gamma": 1.0 + 0.1 * jax.random.normal(kg, (dim,), dtype=jnp.float32),
        "ln_beta": 0.1 * jax.random.normal(kbt, (dim,), dtype=jnp.float32),
        # Conv3d(dim, 2*dim, kernel=2, stride=2, padding=0)
        "conv_w": 0.05 * jax.random.normal(
            kw_, (2 * dim, dim, patch_size, patch_size, patch_size), dtype=jnp.float32),
        "conv_b": 0.05 * jax.random.normal(kb, (2 * dim,), dtype=jnp.float32),
    }

    out = jax.block_until_ready(
        patch_merging_forward(x, params, (D, H, W), patch_size, 16))
    ref = jax.block_until_ready(_reference(x, params, patch_size))

    assert out.shape == (B, T, 2 * dim, D // 2, H // 2, W // 2), out.shape
    # bf16 MXU operands on the conv GEMM bound per-element error at ~3e-3.
    max_err = float(jnp.max(jnp.abs(out - ref)))
    assert jnp.allclose(out, ref, rtol=5e-3, atol=5e-3), max_err

    print("KERNEL_OK")
</pallas_src>

<mosaic_0001>
module attributes {stable_mosaic.version = 11 : i64} {
  func.func @_patch_merging_kernel(%arg0: i32, %arg1: memref<16x64x64xf32, #tpu.memory_space<vmem>>, %arg2: memref<64x16xf32, #tpu.memory_space<vmem>>, %arg3: memref<16x64xf32, #tpu.memory_space<vmem>>, %arg4: memref<1x2x8x64xf32, #tpu.memory_space<vmem>>, %arg5: memref<16x64xbf16, #tpu.memory_space<vmem>>, %arg6: memref<16x64xf32, #tpu.memory_space<vmem>>, %arg7: memref<16x16x64xf32, #tpu.memory_space<vmem>>) attributes {dimension_semantics = [#tpu.dimension_semantics<parallel>], iteration_bounds = array<i64: 2>, scalar_prefetch = 0 : i64, scratch_operands = 0 : i64, tpu.core_type = #tpu.core_type<tc>, window_params = [{transform_indices = @transform_0, window_bounds = array<i64: 16, 64, 64>}, {pipeline_mode = #tpu.pipeline_mode<synchronous>, transform_indices = @transform_1, window_bounds = array<i64: 64, 16>}, {pipeline_mode = #tpu.pipeline_mode<synchronous>, transform_indices = @transform_2, window_bounds = array<i64: 16, 64>}, {pipeline_mode = #tpu.pipeline_mode<synchronous>, transform_indices = @transform_3, window_bounds = array<i64: 1, 2, 8, 64>}, {pipeline_mode = #tpu.pipeline_mode<synchronous>, transform_indices = @transform_4, window_bounds = array<i64: 16, 64>}, {pipeline_mode = #tpu.pipeline_mode<synchronous>, transform_indices = @transform_5, window_bounds = array<i64: 16, 64>}, {transform_indices = @transform_6, window_bounds = array<i64: 16, 16, 64>}]} {
    %c0 = arith.constant 0 : index
    %c0_0 = arith.constant 0 : index
    %c0_1 = arith.constant 0 : index
    %0 = vector.load %arg1[%c0, %c0_0, %c0_1] : memref<16x64x64xf32, #tpu.memory_space<vmem>>, vector<16x64x64xf32>
    %1 = vector.shape_cast %0 : vector<16x64x64xf32> to vector<64x2x8x64xf32>
    %2 = vector.shape_cast %1 : vector<64x2x8x64xf32> to vector<1024x64xf32>
    %c0_2 = arith.constant 0 : index
    %c0_3 = arith.constant 0 : index
    %3 = vector.load %arg2[%c0_2, %c0_3] : memref<64x16xf32, #tpu.memory_space<vmem>>, vector<64x16xf32>
    %c0_4 = arith.constant 0 : index
    %c0_5 = arith.constant 0 : index
    %4 = vector.load %arg3[%c0_4, %c0_5] : memref<16x64xf32, #tpu.memory_space<vmem>>, vector<16x64xf32>
    %cst = arith.constant dense<0.000000e+00> : vector<1024x16xf32>
    %5 = tpu.matmul %2, %3, %cst {dimension_numbers = #tpu.dot_dimension_numbers<[1], [0], [0], [1], [0, 0, 1, 1], [], []>} : vector<1024x64xf32>, vector<64x16xf32>, vector<1024x16xf32> -> vector<1024x16xf32>
    %6 = vector.shape_cast %5 : vector<1024x16xf32> to vector<64x2x8x16xf32>
    %7 = vector.extract_strided_slice %6 {offsets = [0, 0, 0, 0], sizes = [64, 1, 8, 16], strides = [1, 1, 1, 1]} : vector<64x2x8x16xf32> to vector<64x1x8x16xf32>
    %8 = vector.extract_strided_slice %6 {offsets = [0, 1, 0, 0], sizes = [64, 1, 8, 16], strides = [1, 1, 1, 1]} : vector<64x2x8x16xf32> to vector<64x1x8x16xf32>
    %9 = arith.addf %7, %8 : vector<64x1x8x16xf32>
    %cst_6 = arith.constant 1.250000e-01 : f32
    %10 = vector.broadcast %cst_6 : f32 to vector<64x1x8x16xf32>
    %11 = arith.mulf %9, %10 : vector<64x1x8x16xf32>
    %12 = vector.shape_cast %11 : vector<64x1x8x16xf32> to vector<512x16xf32>
    %cst_7 = arith.constant dense<0.000000e+00> : vector<512x64xf32>
    %13 = tpu.matmul %12, %4, %cst_7 {dimension_numbers = #tpu.dot_dimension_numbers<[1], [0], [0], [1], [0, 0, 1, 1], [], []>} : vector<512x16xf32>, vector<16x64xf32>, vector<512x64xf32> -> vector<512x64xf32>
    %14 = vector.shape_cast %13 : vector<512x64xf32> to vector<64x1x8x64xf32>
    %15 = vector.broadcast %14 : vector<64x1x8x64xf32> to vector<64x2x8x64xf32>
    %16 = arith.subf %1, %15 : vector<64x2x8x64xf32>
    %17 = arith.mulf %16, %16 : vector<64x2x8x64xf32>
    %18 = vector.shape_cast %17 : vector<64x2x8x64xf32> to vector<1024x64xf32>
    %cst_8 = arith.constant dense<0.000000e+00> : vector<1024x16xf32>
    %19 = tpu.matmul %18, %3, %cst_8 {dimension_numbers = #tpu.dot_dimension_numbers<[1], [0], [0], [1], [0, 0, 1, 1], [], []>} : vector<1024x64xf32>, vector<64x16xf32>, vector<1024x16xf32> -> vector<1024x16xf32>
    %20 = vector.shape_cast %19 : vector<1024x16xf32> to vector<64x2x8x16xf32>
    %21 = vector.extract_strided_slice %20 {offsets = [0, 0, 0, 0], sizes = [64, 1, 8, 16], strides = [1, 1, 1, 1]} : vector<64x2x8x16xf32> to vector<64x1x8x16xf32>
    %22 = vector.extract_strided_slice %20 {offsets = [0, 1, 0, 0], sizes = [64, 1, 8, 16], strides = [1, 1, 1, 1]} : vector<64x2x8x16xf32> to vector<64x1x8x16xf32>
    %23 = arith.addf %21, %22 : vector<64x1x8x16xf32>
    %cst_9 = arith.constant 1.250000e-01 : f32
    %24 = vector.broadcast %cst_9 : f32 to vector<64x1x8x16xf32>
    %25 = arith.mulf %23, %24 : vector<64x1x8x16xf32>
    %cst_10 = arith.constant 9.99999974E-6 : f32
    %26 = vector.broadcast %cst_10 : f32 to vector<64x1x8x16xf32>
    %27 = arith.addf %25, %26 : vector<64x1x8x16xf32>
    %28 = math.rsqrt %27 : vector<64x1x8x16xf32>
    %29 = vector.shape_cast %28 : vector<64x1x8x16xf32> to vector<512x16xf32>
    %cst_11 = arith.constant dense<0.000000e+00> : vector<512x64xf32>
    %30 = tpu.matmul %29, %4, %cst_11 {dimension_numbers = #tpu.dot_dimension_numbers<[1], [0], [0], [1], [0, 0, 1, 1], [], []>} : vector<512x16xf32>, vector<16x64xf32>, vector<512x64xf32> -> vector<512x64xf32>
    %31 = vector.shape_cast %30 : vector<512x64xf32> to vector<64x1x8x64xf32>
    %32 = vector.broadcast %31 : vector<64x1x8x64xf32> to vector<64x2x8x64xf32>
    %33 = arith.mulf %16, %32 : vector<64x2x8x64xf32>
    %c0_12 = arith.constant 0 : index
    %c0_13 = arith.constant 0 : index
    %c0_14 = arith.constant 0 : index
    %c0_15 = arith.constant 0 : index
    %34 = vector.load %arg4[%c0_12, %c0_13, %c0_14, %c0_15] : memref<1x2x8x64xf32, #tpu.memory_space<vmem>>, vector<1x2x8x64xf32>
    %35 = vector.broadcast %34 : vector<1x2x8x64xf32> to vector<64x2x8x64xf32>
    %36 = arith.mulf %33, %35 : vector<64x2x8x64xf32>
    %37 = vector.shape_cast %36 : vector<64x2x8x64xf32> to vector<16x64x64xf32>
    %38 = arith.truncf %37 : vector<16x64x64xf32> to vector<16x64x64xbf16>
    %c0_16 = arith.constant 0 : index
    %c0_17 = arith.constant 0 : index
    %39 = vector.load %arg5[%c0_16, %c0_17] : memref<16x64xbf16, #tpu.memory_space<vmem>>, vector<16x64xbf16>
    %c0_18 = arith.constant 0 : index
    %c0_19 = arith.constant 0 : index
    %40 = vector.load %arg6[%c0_18, %c0_19] : memref<16x64xf32, #tpu.memory_space<vmem>>, vector<16x64xf32>
    %41 = vector.extract_strided_slice %38 {offsets = [0, 0, 0], sizes = [1, 64, 64], strides = [1, 1, 1]} : vector<16x64x64xbf16> to vector<1x64x64xbf16>
    %42 = vector.shape_cast %41 : vector<1x64x64xbf16> to vector<64x64xbf16>
    %cst_20 = arith.constant dense<0.000000e+00> : vector<16x64xf32>
    %43 = tpu.matmul %39, %42, %cst_20 {dimension_numbers = #tpu.dot_dimension_numbers<[1], [0], [0], [1], [0, 0, 1, 1], [], []>} : vector<16x64xbf16>, vector<64x64xbf16>, vector<16x64xf32> -> vector<16x64xf32>
    %44 = arith.addf %43, %40 : vector<16x64xf32>
    %c0_21 = arith.constant 0 : index
    %c0_22 = arith.constant 0 : index
    %c0_23 = arith.constant 0 : index
    %45 = vector.load %arg7[%c0_21, %c0_22, %c0_23] : memref<16x16x64xf32, #tpu.memory_space<vmem>>, vector<1x16x64xf32>
    %46 = vector.shape_cast %45 : vector<1x16x64xf32> to vector<16x64xf32>
    %47 = vector.shape_cast %44 : vector<16x64xf32> to vector<1x16x64xf32>
    tpu.vector_store %arg7[%c0_21, %c0_22, %c0_23], %47 {strides = array<i32>} : memref<16x16x64xf32, #tpu.memory_space<vmem>>, vector<1x16x64xf32>,
    %48 = vector.extract_strided_slice %38 {offsets = [1, 0, 0], sizes = [1, 64, 64], strides = [1, 1, 1]} : vector<16x64x64xbf16> to vector<1x64x64xbf16>
    %49 = vector.shape_cast %48 : vector<1x64x64xbf16> to vector<64x64xbf16>
    %cst_24 = arith.constant dense<0.000000e+00> : vector<16x64xf32>
    %50 = tpu.matmul %39, %49, %cst_24 {dimension_numbers = #tpu.dot_dimension_numbers<[1], [0], [0], [1], [0, 0, 1, 1], [], []>} : vector<16x64xbf16>, vector<64x64xbf16>, vector<16x64xf32> -> vector<16x64xf32>
    %51 = arith.addf %50, %40 : vector<16x64xf32>
    %c1 = arith.constant 1 : index
    %c0_25 = arith.constant 0 : index
    %c0_26 = arith.constant 0 : index
    %52 = vector.load %arg7[%c1, %c0_25, %c0_26] : memref<16x16x64xf32, #tpu.memory_space<vmem>>, vector<1x16x64xf32>
    %53 = vector.shape_cast %52 : vector<1x16x64xf32> to vector<16x64xf32>
    %54 = vector.shape_cast %51 : vector<16x64xf32> to vector<1x16x64xf32>
    tpu.vector_store %arg7[%c1, %c0_25, %c0_26], %54 {strides = array<i32>} : memref<16x16x64xf32, #tpu.memory_space<vmem>>, vector<1x16x64xf32>,
    %55 = vector.extract_strided_slice %38 {offsets = [2, 0, 0], sizes = [1, 64, 64], strides = [1, 1, 1]} : vector<16x64x64xbf16> to vector<1x64x64xbf16>
    %56 = vector.shape_cast %55 : vector<1x64x64xbf16> to vector<64x64xbf16>
    %cst_27 = arith.constant dense<0.000000e+00> : vector<16x64xf32>
    %57 = tpu.matmul %39, %56, %cst_27 {dimension_numbers = #tpu.dot_dimension_numbers<[1], [0], [0], [1], [0, 0, 1, 1], [], []>} : vector<16x64xbf16>, vector<64x64xbf16>, vector<16x64xf32> -> vector<16x64xf32>
    %58 = arith.addf %57, %40 : vector<16x64xf32>
    %c2 = arith.constant 2 : index
    %c0_28 = arith.constant 0 : index
    %c0_29 = arith.constant 0 : index
    %59 = vector.load %arg7[%c2, %c0_28, %c0_29] : memref<16x16x64xf32, #tpu.memory_space<vmem>>, vector<1x16x64xf32>
    %60 = vector.shape_cast %59 : vector<1x16x64xf32> to vector<16x64xf32>
    %61 = vector.shape_cast %58 : vector<16x64xf32> to vector<1x16x64xf32>
    tpu.vector_store %arg7[%c2, %c0_28, %c0_29], %61 {strides = array<i32>} : memref<16x16x64xf32, #tpu.memory_space<vmem>>, vector<1x16x64xf32>,
    %62 = vector.extract_strided_slice %38 {offsets = [3, 0, 0], sizes = [1, 64, 64], strides = [1, 1, 1]} : vector<16x64x64xbf16> to vector<1x64x64xbf16>
    %63 = vector.shape_cast %62 : vector<1x64x64xbf16> to vector<64x64xbf16>
    %cst_30 = arith.constant dense<0.000000e+00> : vector<16x64xf32>
    %64 = tpu.matmul %39, %63, %cst_30 {dimension_numbers = #tpu.dot_dimension_numbers<[1], [0], [0], [1], [0, 0, 1, 1], [], []>} : vector<16x64xbf16>, vector<64x64xbf16>, vector<16x64xf32> -> vector<16x64xf32>
    %65 = arith.addf %64, %40 : vector<16x64xf32>
    %c3 = arith.constant 3 : index
    %c0_31 = arith.constant 0 : index
    %c0_32 = arith.constant 0 : index
    %66 = vector.load %arg7[%c3, %c0_31, %c0_32] : memref<16x16x64xf32, #tpu.memory_space<vmem>>, vector<1x16x64xf32>
    %67 = vector.shape_cast %66 : vector<1x16x64xf32> to vector<16x64xf32>
    %68 = vector.shape_cast %65 : vector<16x64xf32> to vector<1x16x64xf32>
    tpu.vector_store %arg7[%c3, %c0_31, %c0_32], %68 {strides = array<i32>} : memref<16x16x64xf32, #tpu.memory_space<vmem>>, vector<1x16x64xf32>,
    %69 = vector.extract_strided_slice %38 {offsets = [4, 0, 0], sizes = [1, 64, 64], strides = [1, 1, 1]} : vector<16x64x64xbf16> to vector<1x64x64xbf16>
    %70 = vector.shape_cast %69 : vector<1x64x64xbf16> to vector<64x64xbf16>
    %cst_33 = arith.constant dense<0.000000e+00> : vector<16x64xf32>
    %71 = tpu.matmul %39, %70, %cst_33 {dimension_numbers = #tpu.dot_dimension_numbers<[1], [0], [0], [1], [0, 0, 1, 1], [], []>} : vector<16x64xbf16>, vector<64x64xbf16>, vector<16x64xf32> -> vector<16x64xf32>
    %72 = arith.addf %71, %40 : vector<16x64xf32>
    %c4 = arith.constant 4 : index
    %c0_34 = arith.constant 0 : index
    %c0_35 = arith.constant 0 : index
    %73 = vector.load %arg7[%c4, %c0_34, %c0_35] : memref<16x16x64xf32, #tpu.memory_space<vmem>>, vector<1x16x64xf32>
    %74 = vector.shape_cast %73 : vector<1x16x64xf32> to vector<16x64xf32>
    %75 = vector.shape_cast %72 : vector<16x64xf32> to vector<1x16x64xf32>
    tpu.vector_store %arg7[%c4, %c0_34, %c0_35], %75 {strides = array<i32>} : memref<16x16x64xf32, #tpu.memory_space<vmem>>, vector<1x16x64xf32>,
    %76 = vector.extract_strided_slice %38 {offsets = [5, 0, 0], sizes = [1, 64, 64], strides = [1, 1, 1]} : vector<16x64x64xbf16> to vector<1x64x64xbf16>
    %77 = vector.shape_cast %76 : vector<1x64x64xbf16> to vector<64x64xbf16>
    %cst_36 = arith.constant dense<0.000000e+00> : vector<16x64xf32>
    %78 = tpu.matmul %39, %77, %cst_36 {dimension_numbers = #tpu.dot_dimension_numbers<[1], [0], [0], [1], [0, 0, 1, 1], [], []>} : vector<16x64xbf16>, vector<64x64xbf16>, vector<16x64xf32> -> vector<16x64xf32>
    %79 = arith.addf %78, %40 : vector<16x64xf32>
    %c5 = arith.constant 5 : index
    %c0_37 = arith.constant 0 : index
    %c0_38 = arith.constant 0 : index
    %80 = vector.load %arg7[%c5, %c0_37, %c0_38] : memref<16x16x64xf32, #tpu.memory_space<vmem>>, vector<1x16x64xf32>
    %81 = vector.shape_cast %80 : vector<1x16x64xf32> to vector<16x64xf32>
    %82 = vector.shape_cast %79 : vector<16x64xf32> to vector<1x16x64xf32>
    tpu.vector_store %arg7[%c5, %c0_37, %c0_38], %82 {strides = array<i32>} : memref<16x16x64xf32, #tpu.memory_space<vmem>>, vector<1x16x64xf32>,
    %83 = vector.extract_strided_slice %38 {offsets = [6, 0, 0], sizes = [1, 64, 64], strides = [1, 1, 1]} : vector<16x64x64xbf16> to vector<1x64x64xbf16>
    %84 = vector.shape_cast %83 : vector<1x64x64xbf16> to vector<64x64xbf16>
    %cst_39 = arith.constant dense<0.000000e+00> : vector<16x64xf32>
    %85 = tpu.matmul %39, %84, %cst_39 {dimension_numbers = #tpu.dot_dimension_numbers<[1], [0], [0], [1], [0, 0, 1, 1], [], []>} : vector<16x64xbf16>, vector<64x64xbf16>, vector<16x64xf32> -> vector<16x64xf32>
    %86 = arith.addf %85, %40 : vector<16x64xf32>
    %c6 = arith.constant 6 : index
    %c0_40 = arith.constant 0 : index
    %c0_41 = arith.constant 0 : index
    %87 = vector.load %arg7[%c6, %c0_40, %c0_41] : memref<16x16x64xf32, #tpu.memory_space<vmem>>, vector<1x16x64xf32>
    %88 = vector.shape_cast %87 : vector<1x16x64xf32> to vector<16x64xf32>
    %89 = vector.shape_cast %86 : vector<16x64xf32> to vector<1x16x64xf32>
    tpu.vector_store %arg7[%c6, %c0_40, %c0_41], %89 {strides = array<i32>} : memref<16x16x64xf32, #tpu.memory_space<vmem>>, vector<1x16x64xf32>,
    %90 = vector.extract_strided_slice %38 {offsets = [7, 0, 0], sizes = [1, 64, 64], strides = [1, 1, 1]} : vector<16x64x64xbf16> to vector<1x64x64xbf16>
    %91 = vector.shape_cast %90 : vector<1x64x64xbf16> to vector<64x64xbf16>
    %cst_42 = arith.constant dense<0.000000e+00> : vector<16x64xf32>
    %92 = tpu.matmul %39, %91, %cst_42 {dimension_numbers = #tpu.dot_dimension_numbers<[1], [0], [0], [1], [0, 0, 1, 1], [], []>} : vector<16x64xbf16>, vector<64x64xbf16>, vector<16x64xf32> -> vector<16x64xf32>
    %93 = arith.addf %92, %40 : vector<16x64xf32>
    %c7 = arith.constant 7 : index
    %c0_43 = arith.constant 0 : index
    %c0_44 = arith.constant 0 : index
    %94 = vector.load %arg7[%c7, %c0_43, %c0_44] : memref<16x16x64xf32, #tpu.memory_space<vmem>>, vector<1x16x64xf32>
    %95 = vector.shape_cast %94 : vector<1x16x64xf32> to vector<16x64xf32>
    %96 = vector.shape_cast %93 : vector<16x64xf32> to vector<1x16x64xf32>
    tpu.vector_store %arg7[%c7, %c0_43, %c0_44], %96 {strides = array<i32>} : memref<16x16x64xf32, #tpu.memory_space<vmem>>, vector<1x16x64xf32>,
    %97 = vector.extract_strided_slice %38 {offsets = [8, 0, 0], sizes = [1, 64, 64], strides = [1, 1, 1]} : vector<16x64x64xbf16> to vector<1x64x64xbf16>
    %98 = vector.shape_cast %97 : vector<1x64x64xbf16> to vector<64x64xbf16>
    %cst_45 = arith.constant dense<0.000000e+00> : vector<16x64xf32>
    %99 = tpu.matmul %39, %98, %cst_45 {dimension_numbers = #tpu.dot_dimension_numbers<[1], [0], [0], [1], [0, 0, 1, 1], [], []>} : vector<16x64xbf16>, vector<64x64xbf16>, vector<16x64xf32> -> vector<16x64xf32>
    %100 = arith.addf %99, %40 : vector<16x64xf32>
    %c8 = arith.constant 8 : index
    %c0_46 = arith.constant 0 : index
    %c0_47 = arith.constant 0 : index
    %101 = vector.load %arg7[%c8, %c0_46, %c0_47] : memref<16x16x64xf32, #tpu.memory_space<vmem>>, vector<1x16x64xf32>
    %102 = vector.shape_cast %101 : vector<1x16x64xf32> to vector<16x64xf32>
    %103 = vector.shape_cast %100 : vector<16x64xf32> to vector<1x16x64xf32>
    tpu.vector_store %arg7[%c8, %c0_46, %c0_47], %103 {strides = array<i32>} : memref<16x16x64xf32, #tpu.memory_space<vmem>>, vector<1x16x64xf32>,
    %104 = vector.extract_strided_slice %38 {offsets = [9, 0, 0], sizes = [1, 64, 64], strides = [1, 1, 1]} : vector<16x64x64xbf16> to vector<1x64x64xbf16>
    %105 = vector.shape_cast %104 : vector<1x64x64xbf16> to vector<64x64xbf16>
    %cst_48 = arith.constant dense<0.000000e+00> : vector<16x64xf32>
    %106 = tpu.matmul %39, %105, %cst_48 {dimension_numbers = #tpu.dot_dimension_numbers<[1], [0], [0], [1], [0, 0, 1, 1], [], []>} : vector<16x64xbf16>, vector<64x64xbf16>, vector<16x64xf32> -> vector<16x64xf32>
    %107 = arith.addf %106, %40 : vector<16x64xf32>
    %c9 = arith.constant 9 : index
    %c0_49 = arith.constant 0 : index
    %c0_50 = arith.constant 0 : index
    %108 = vector.load %arg7[%c9, %c0_49, %c0_50] : memref<16x16x64xf32, #tpu.memory_space<vmem>>, vector<1x16x64xf32>
    %109 = vector.shape_cast %108 : vector<1x16x64xf32> to vector<16x64xf32>
    %110 = vector.shape_cast %107 : vector<16x64xf32> to vector<1x16x64xf32>
    tpu.vector_store %arg7[%c9, %c0_49, %c0_50], %110 {strides = array<i32>} : memref<16x16x64xf32, #tpu.memory_space<vmem>>, vector<1x16x64xf32>,
    %111 = vector.extract_strided_slice %38 {offsets = [10, 0, 0], sizes = [1, 64, 64], strides = [1, 1, 1]} : vector<16x64x64xbf16> to vector<1x64x64xbf16>
    %112 = vector.shape_cast %111 : vector<1x64x64xbf16> to vector<64x64xbf16>
    %cst_51 = arith.constant dense<0.000000e+00> : vector<16x64xf32>
    %113 = tpu.matmul %39, %112, %cst_51 {dimension_numbers = #tpu.dot_dimension_numbers<[1], [0], [0], [1], [0, 0, 1, 1], [], []>} : vector<16x64xbf16>, vector<64x64xbf16>, vector<16x64xf32> -> vector<16x64xf32>
    %114 = arith.addf %113, %40 : vector<16x64xf32>
    %c10 = arith.constant 10 : index
    %c0_52 = arith.constant 0 : index
    %c0_53 = arith.constant 0 : index
    %115 = vector.load %arg7[%c10, %c0_52, %c0_53] : memref<16x16x64xf32, #tpu.memory_space<vmem>>, vector<1x16x64xf32>
    %116 = vector.shape_cast %115 : vector<1x16x64xf32> to vector<16x64xf32>
    %117 = vector.shape_cast %114 : vector<16x64xf32> to vector<1x16x64xf32>
    tpu.vector_store %arg7[%c10, %c0_52, %c0_53], %117 {strides = array<i32>} : memref<16x16x64xf32, #tpu.memory_space<vmem>>, vector<1x16x64xf32>,
    %118 = vector.extract_strided_slice %38 {offsets = [11, 0, 0], sizes = [1, 64, 64], strides = [1, 1, 1]} : vector<16x64x64xbf16> to vector<1x64x64xbf16>
    %119 = vector.shape_cast %118 : vector<1x64x64xbf16> to vector<64x64xbf16>
    %cst_54 = arith.constant dense<0.000000e+00> : vector<16x64xf32>
    %120 = tpu.matmul %39, %119, %cst_54 {dimension_numbers = #tpu.dot_dimension_numbers<[1], [0], [0], [1], [0, 0, 1, 1], [], []>} : vector<16x64xbf16>, vector<64x64xbf16>, vector<16x64xf32> -> vector<16x64xf32>
    %121 = arith.addf %120, %40 : vector<16x64xf32>
    %c11 = arith.constant 11 : index
    %c0_55 = arith.constant 0 : index
    %c0_56 = arith.constant 0 : index
    %122 = vector.load %arg7[%c11, %c0_55, %c0_56] : memref<16x16x64xf32, #tpu.memory_space<vmem>>, vector<1x16x64xf32>
    %123 = vector.shape_cast %122 : vector<1x16x64xf32> to vector<16x64xf32>
    %124 = vector.shape_cast %121 : vector<16x64xf32> to vector<1x16x64xf32>
    tpu.vector_store %arg7[%c11, %c0_55, %c0_56], %124 {strides = array<i32>} : memref<16x16x64xf32, #tpu.memory_space<vmem>>, vector<1x16x64xf32>,
    %125 = vector.extract_strided_slice %38 {offsets = [12, 0, 0], sizes = [1, 64, 64], strides = [1, 1, 1]} : vector<16x64x64xbf16> to vector<1x64x64xbf16>
    %126 = vector.shape_cast %125 : vector<1x64x64xbf16> to vector<64x64xbf16>
    %cst_57 = arith.constant dense<0.000000e+00> : vector<16x64xf32>
    %127 = tpu.matmul %39, %126, %cst_57 {dimension_numbers = #tpu.dot_dimension_numbers<[1], [0], [0], [1], [0, 0, 1, 1], [], []>} : vector<16x64xbf16>, vector<64x64xbf16>, vector<16x64xf32> -> vector<16x64xf32>
    %128 = arith.addf %127, %40 : vector<16x64xf32>
    %c12 = arith.constant 12 : index
    %c0_58 = arith.constant 0 : index
    %c0_59 = arith.constant 0 : index
    %129 = vector.load %arg7[%c12, %c0_58, %c0_59] : memref<16x16x64xf32, #tpu.memory_space<vmem>>, vector<1x16x64xf32>
    %130 = vector.shape_cast %129 : vector<1x16x64xf32> to vector<16x64xf32>
    %131 = vector.shape_cast %128 : vector<16x64xf32> to vector<1x16x64xf32>
    tpu.vector_store %arg7[%c12, %c0_58, %c0_59], %131 {strides = array<i32>} : memref<16x16x64xf32, #tpu.memory_space<vmem>>, vector<1x16x64xf32>,
    %132 = vector.extract_strided_slice %38 {offsets = [13, 0, 0], sizes = [1, 64, 64], strides = [1, 1, 1]} : vector<16x64x64xbf16> to vector<1x64x64xbf16>
    %133 = vector.shape_cast %132 : vector<1x64x64xbf16> to vector<64x64xbf16>
    %cst_60 = arith.constant dense<0.000000e+00> : vector<16x64xf32>
    %134 = tpu.matmul %39, %133, %cst_60 {dimension_numbers = #tpu.dot_dimension_numbers<[1], [0], [0], [1], [0, 0, 1, 1], [], []>} : vector<16x64xbf16>, vector<64x64xbf16>, vector<16x64xf32> -> vector<16x64xf32>
    %135 = arith.addf %134, %40 : vector<16x64xf32>
    %c13 = arith.constant 13 : index
    %c0_61 = arith.constant 0 : index
    %c0_62 = arith.constant 0 : index
    %136 = vector.load %arg7[%c13, %c0_61, %c0_62] : memref<16x16x64xf32, #tpu.memory_space<vmem>>, vector<1x16x64xf32>
    %137 = vector.shape_cast %136 : vector<1x16x64xf32> to vector<16x64xf32>
    %138 = vector.shape_cast %135 : vector<16x64xf32> to vector<1x16x64xf32>
    tpu.vector_store %arg7[%c13, %c0_61, %c0_62], %138 {strides = array<i32>} : memref<16x16x64xf32, #tpu.memory_space<vmem>>, vector<1x16x64xf32>,
    %139 = vector.extract_strided_slice %38 {offsets = [14, 0, 0], sizes = [1, 64, 64], strides = [1, 1, 1]} : vector<16x64x64xbf16> to vector<1x64x64xbf16>
    %140 = vector.shape_cast %139 : vector<1x64x64xbf16> to vector<64x64xbf16>
    %cst_63 = arith.constant dense<0.000000e+00> : vector<16x64xf32>
    %141 = tpu.matmul %39, %140, %cst_63 {dimension_numbers = #tpu.dot_dimension_numbers<[1], [0], [0], [1], [0, 0, 1, 1], [], []>} : vector<16x64xbf16>, vector<64x64xbf16>, vector<16x64xf32> -> vector<16x64xf32>
    %142 = arith.addf %141, %40 : vector<16x64xf32>
    %c14 = arith.constant 14 : index
    %c0_64 = arith.constant 0 : index
    %c0_65 = arith.constant 0 : index
    %143 = vector.load %arg7[%c14, %c0_64, %c0_65] : memref<16x16x64xf32, #tpu.memory_space<vmem>>, vector<1x16x64xf32>
    %144 = vector.shape_cast %143 : vector<1x16x64xf32> to vector<16x64xf32>
    %145 = vector.shape_cast %142 : vector<16x64xf32> to vector<1x16x64xf32>
    tpu.vector_store %arg7[%c14, %c0_64, %c0_65], %145 {strides = array<i32>} : memref<16x16x64xf32, #tpu.memory_space<vmem>>, vector<1x16x64xf32>,
    %146 = vector.extract_strided_slice %38 {offsets = [15, 0, 0], sizes = [1, 64, 64], strides = [1, 1, 1]} : vector<16x64x64xbf16> to vector<1x64x64xbf16>
    %147 = vector.shape_cast %146 : vector<1x64x64xbf16> to vector<64x64xbf16>
    %cst_66 = arith.constant dense<0.000000e+00> : vector<16x64xf32>
    %148 = tpu.matmul %39, %147, %cst_66 {dimension_numbers = #tpu.dot_dimension_numbers<[1], [0], [0], [1], [0, 0, 1, 1], [], []>} : vector<16x64xbf16>, vector<64x64xbf16>, vector<16x64xf32> -> vector<16x64xf32>
    %149 = arith.addf %148, %40 : vector<16x64xf32>
    %c15 = arith.constant 15 : index
    %c0_67 = arith.constant 0 : index
    %c0_68 = arith.constant 0 : index
    %150 = vector.load %arg7[%c15, %c0_67, %c0_68] : memref<16x16x64xf32, #tpu.memory_space<vmem>>, vector<1x16x64xf32>
    %151 = vector.shape_cast %150 : vector<1x16x64xf32> to vector<16x64xf32>
    %152 = vector.shape_cast %149 : vector<16x64xf32> to vector<1x16x64xf32>
    tpu.vector_store %arg7[%c15, %c0_67, %c0_68], %152 {strides = array<i32>} : memref<16x16x64xf32, #tpu.memory_space<vmem>>, vector<1x16x64xf32>,
    return
  }
  func.func @transform_0(%arg0: i32) -> (i32, i32, i32) {
    %c0_i32 = arith.constant 0 : i32
    %c0_i32_0 = arith.constant 0 : i32
    %c0_i32_1 = arith.constant 0 : i32
    return %arg0, %c0_i32, %c0_i32_0 : i32, i32, i32
  }
  func.func @transform_1(%arg0: i32) -> (i32, i32) {
    %c0_i32 = arith.constant 0 : i32
    %c0_i32_0 = arith.constant 0 : i32
    %c0_i32_1 = arith.constant 0 : i32
    return %c0_i32, %c0_i32_0 : i32, i32
  }
  func.func @transform_2(%arg0: i32) -> (i32, i32) {
    %c0_i32 = arith.constant 0 : i32
    %c0_i32_0 = arith.constant 0 : i32
    %c0_i32_1 = arith.constant 0 : i32
    return %c0_i32, %c0_i32_0 : i32, i32
  }
  func.func @transform_3(%arg0: i32) -> (i32, i32, i32, i32) {
    %c0_i32 = arith.constant 0 : i32
    %c0_i32_0 = arith.constant 0 : i32
    %c0_i32_1 = arith.constant 0 : i32
    %c0_i32_2 = arith.constant 0 : i32
    %c0_i32_3 = arith.constant 0 : i32
    return %c0_i32, %c0_i32_0, %c0_i32_1, %c0_i32_2 : i32, i32, i32, i32
  }
  func.func @transform_4(%arg0: i32) -> (i32, i32) {
    %c0_i32 = arith.constant 0 : i32
    %c0_i32_0 = arith.constant 0 : i32
    %c0_i32_1 = arith.constant 0 : i32
    return %c0_i32, %c0_i32_0 : i32, i32
  }
  func.func @transform_5(%arg0: i32) -> (i32, i32) {
    %c0_i32 = arith.constant 0 : i32
    %c0_i32_0 = arith.constant 0 : i32
    %c0_i32_1 = arith.constant 0 : i32
    return %c0_i32, %c0_i32_0 : i32, i32
  }
  func.func @transform_6(%arg0: i32) -> (i32, i32, i32) {
    %c0_i32 = arith.constant 0 : i32
    %c0_i32_0 = arith.constant 0 : i32
    %c0_i32_1 = arith.constant 0 : i32
    return %arg0, %c0_i32, %c0_i32_0 : i32, i32, i32
  }
}

</mosaic_0001>

<llo_original>
// kernel: patch_merging_forward.1
$region0: #{patch_merging_forward.1}
  #allocation0 [shape = 'u32[]', space=smem, size = 0x4, offset = 0x4, fixed_abs, tag = 'smem constant byte address 0x4 - core index']
  #allocation1 [shape = 'u32[72,128]{1,0:T(1,128)}', space=vmem, size = 0x9000, scoped, tag = 'internal scratch']
  %s0 = inlined_call_operand.vmem [shape: f32[32,64,64], index: 0, kind: input, shape index: {}]
  %s1 = inlined_call_operand.vmem [shape: f32[64,16], index: 1, kind: input, shape index: {}]
  %s2 = inlined_call_operand.vmem [shape: f32[16,64], index: 2, kind: input, shape index: {}]
  %s3 = inlined_call_operand.vmem [shape: f32[1,2,8,64], index: 3, kind: input, shape index: {}]
  %s4 = inlined_call_operand.vmem [shape: bf16[16,64], index: 4, kind: input, shape index: {}]
  %s5 = inlined_call_operand.vmem [shape: f32[16,64], index: 5, kind: input, shape index: {}]
  %s6 = inlined_call_operand.vmem [shape: f32[32,16,64], index: 6, kind: output, shape index: {}]
  %s7 = sld [smem:[#allocation0]]
  $region57: #{patch_merging_forward.1} parent=0
    _
  %s9 = ssub.s32 1, %s7
  %s10 = scalar_select 0, %s9, %s7
  loop: start=0, step=1, limit=4
  $region2: #{patch_merging_forward.1} parent=0 // loop_pre_header
    _
  $region3: #{patch_merging_forward.1} parent=0 // loop_header
    %s12 = sphi 0, %s16
    %p13 = scmp.ge.s32.totalorder %s12, 4
    %s22 = sphi 0, %s24
    %s25 = sphi 0, %s22
    %s26 = sphi 0, %s25
    %s42 = sphi 0, %s26
    %s46 = sphi 0, %s46
    %s48 = sphi 0, %s46
    %s49 = sphi 0, %s48
    %s63 = sphi 0, %s49
    %s67 = sphi 0, %s67
    %s69 = sphi 0, %s67
    %s70 = sphi 0, %s69
    %s84 = sphi 0, %s70
    %s88 = sphi 0, %s88
    %s90 = sphi 0, %s88
    %s91 = sphi 0, %s90
    %s105 = sphi 0, %s91
    %s109 = sphi 0, %s109
    %s111 = sphi 0, %s109
    %s112 = sphi 0, %s111
    %s126 = sphi 0, %s112
    %s130 = sphi 0, %s130
    %s132 = sphi 0, %s130
    %s133 = sphi 0, %s132
    %s147 = sphi 0, %s133
    %s153 = sphi 0, %s155
    %s156 = sphi 0, %s153
    %s157 = sphi 0, %s156
    %s173 = sphi 0, %s157
  $region4: #{patch_merging_forward.1} parent=0 // loop_header_branch
    %15 = sbr.rel (%p13) target = $region8
  $region5: #{patch_merging_forward.1} parent=0 // loop_body
    %s17 = ssub.s32 %s12, 1
    %s18 = ssub.s32 %s12, 2
    %s19 = sadd.s32 %s12, 1
    %s20 = ssub.s32 %s12, %s19
    %p21 = scmp.eq.s32.totalorder %s20, 0
    %s23 = sadd.s32 %s22, 1
    %s24 = scalar_select %p21, %s22, %s23
    %p27 = pneg %p21
    %p28 = scmp.eq.s32.totalorder %s12, 1
    %p29 = por %p27, %p28
    %p30 = scmp.ne.s32.totalorder %s22, %s25
    %p31 = scmp.eq.s32.totalorder %s12, 0
    %p32 = por %p30, %p31
    %p33 = scmp.ne.s32.totalorder %s22, %s25
    %p34 = scmp.eq.s32.totalorder %s17, 1
    %p35 = por %p33, %p34
    %p36 = scmp.ne.s32.totalorder %s25, %s26
    %p37 = scmp.eq.s32.totalorder %s17, 0
    %p38 = por %p36, %p37
    %p39 = scmp.ne.s32.totalorder %s25, %s26
    %p40 = scmp.eq.s32.totalorder %s18, 1
    %p41 = por %p39, %p40
    %p43 = scmp.ne.s32.totalorder %s26, %s42
    %p44 = scmp.eq.s32.totalorder %s18, 0
    %p45 = por %p43, %p44
    %s47 = sadd.s32 %s46, 1
    %p50 = scmp.eq.s32.totalorder %s12, 1
    %p51 = scmp.ne.s32.totalorder %s46, %s48
    %p52 = scmp.eq.s32.totalorder %s12, 0
    %p53 = por %p51, %p52
    %p54 = scmp.ne.s32.totalorder %s46, %s48
    %p55 = scmp.eq.s32.totalorder %s17, 1
    %p56 = por %p54, %p55
    %p57 = scmp.ne.s32.totalorder %s48, %s49
    %p58 = scmp.eq.s32.totalorder %s17, 0
    %p59 = por %p57, %p58
    %p60 = scmp.ne.s32.totalorder %s48, %s49
    %p61 = scmp.eq.s32.totalorder %s18, 1
    %p62 = por %p60, %p61
    %p64 = scmp.ne.s32.totalorder %s49, %s63
    %p65 = scmp.eq.s32.totalorder %s18, 0
    %p66 = por %p64, %p65
    %s68 = sadd.s32 %s67, 1
    %p71 = scmp.eq.s32.totalorder %s12, 1
    %p72 = scmp.ne.s32.totalorder %s67, %s69
    %p73 = scmp.eq.s32.totalorder %s12, 0
    %p74 = por %p72, %p73
    %p75 = scmp.ne.s32.totalorder %s67, %s69
    %p76 = scmp.eq.s32.totalorder %s17, 1
    %p77 = por %p75, %p76
    %p78 = scmp.ne.s32.totalorder %s69, %s70
    %p79 = scmp.eq.s32.totalorder %s17, 0
    %p80 = por %p78, %p79
    %p81 = scmp.ne.s32.totalorder %s69, %s70
    %p82 = scmp.eq.s32.totalorder %s18, 1
    %p83 = por %p81, %p82
    %p85 = scmp.ne.s32.totalorder %s70, %s84
    %p86 = scmp.eq.s32.totalorder %s18, 0
    %p87 = por %p85, %p86
    %s89 = sadd.s32 %s88, 1
    %p92 = scmp.eq.s32.totalorder %s12, 1
    %p93 = scmp.ne.s32.totalorder %s88, %s90
    %p94 = scmp.eq.s32.totalorder %s12, 0
    %p95 = por %p93, %p94
    %p96 = scmp.ne.s32.totalorder %s88, %s90
    %p97 = scmp.eq.s32.totalorder %s17, 1
    %p98 = por %p96, %p97
    %p99 = scmp.ne.s32.totalorder %s90, %s91
    %p100 = scmp.eq.s32.totalorder %s17, 0
    %p101 = por %p99, %p100
    %p102 = scmp.ne.s32.totalorder %s90, %s91
    %p103 = scmp.eq.s32.totalorder %s18, 1
    %p104 = por %p102, %p103
    %p106 = scmp.ne.s32.totalorder %s91, %s105
    %p107 = scmp.eq.s32.totalorder %s18, 0
    %p108 = por %p106, %p107
    %s110 = sadd.s32 %s109, 1
    %p113 = scmp.eq.s32.totalorder %s12, 1
    %p114 = scmp.ne.s32.totalorder %s109, %s111
    %p115 = scmp.eq.s32.totalorder %s12, 0
    %p116 = por %p114, %p115
    %p117 = scmp.ne.s32.totalorder %s109, %s111
    %p118 = scmp.eq.s32.totalorder %s17, 1
    %p119 = por %p117, %p118
    %p120 = scmp.ne.s32.totalorder %s111, %s112
    %p121 = scmp.eq.s32.totalorder %s17, 0
    %p122 = por %p120, %p121
    %p123 = scmp.ne.s32.totalorder %s111, %s112
    %p124 = scmp.eq.s32.totalorder %s18, 1
    %p125 = por %p123, %p124
    %p127 = scmp.ne.s32.totalorder %s112, %s126
    %p128 = scmp.eq.s32.totalorder %s18, 0
    %p129 = por %p127, %p128
    %s131 = sadd.s32 %s130, 1
    %p134 = scmp.eq.s32.totalorder %s12, 1
    %p135 = scmp.ne.s32.totalorder %s130, %s132
    %p136 = scmp.eq.s32.totalorder %s12, 0
    %p137 = por %p135, %p136
    %p138 = scmp.ne.s32.totalorder %s130, %s132
    %p139 = scmp.eq.s32.totalorder %s17, 1
    %p140 = por %p138, %p139
    %p141 = scmp.ne.s32.totalorder %s132, %s133
    %p142 = scmp.eq.s32.totalorder %s17, 0
    %p143 = por %p141, %p142
    %p144 = scmp.ne.s32.totalorder %s132, %s133
    %p145 = scmp.eq.s32.totalorder %s18, 1
    %p146 = por %p144, %p145
    %p148 = scmp.ne.s32.totalorder %s133, %s147
    %p149 = scmp.eq.s32.totalorder %s18, 0
    %p150 = por %p148, %p149
    %s151 = ssub.s32 %s12, %s19
    %p152 = scmp.eq.s32.totalorder %s151, 0
    %s154 = sadd.s32 %s153, 1
    %s155 = scalar_select %p152, %s153, %s154
    %p158 = pneg %p152
    %p159 = scmp.eq.s32.totalorder %s12, 1
    %p160 = por %p158, %p159
    %p161 = scmp.ne.s32.totalorder %s153, %s156
    %p162 = scmp.eq.s32.totalorder %s12, 0
    %p163 = por %p161, %p162
    %p164 = scmp.ne.s32.totalorder %s153, %s156
    %p165 = scmp.eq.s32.totalorder %s17, 1
    %p166 = por %p164, %p165
    %p167 = scmp.ne.s32.totalorder %s156, %s157
    %p168 = scmp.eq.s32.totalorder %s17, 0
    %p169 = por %p167, %p168
    %p170 = scmp.ne.s32.totalorder %s156, %s157
    %p171 = scmp.eq.s32.totalorder %s18, 1
    %p172 = por %p170, %p171
    %p174 = scmp.ne.s32.totalorder %s157, %s173
    %p175 = scmp.eq.s32.totalorder %s18, 0
    %p176 = por %p174, %p175
    %p177 = scmp.le.s32.totalorder 1, %s12
    %p178 = scmp.lt.s32.totalorder %s12, 3
    %p179 = pnand %p177, %p178
    %p180 = pneg %p179
    // Predicated region
    $region9: #{patch_merging_forward.1} parent=5 // pred_check
      _
    $region10: #{patch_merging_forward.1} parent=5 // pred_check_branch
      %182 = sbr.rel (%p179) target = $region12
    $region11: #{patch_merging_forward.1} parent=5 // pred_region
      %s183 = ssub.s32 %s12, 1
      // Predicated region
      $region13: #{patch_merging_forward.1} parent=11 // pred_check
        %p184 = pneg %p59
      $region14: #{patch_merging_forward.1} parent=11 // pred_check_branch
        %186 = sbr.rel (%p184) target = $region16
      $region15: #{patch_merging_forward.1} parent=11 // pred_region
        _
      $region16: #{patch_merging_forward.1} parent=11 // pred_fallthru
        _
      // Predicated region
      $region17: #{patch_merging_forward.1} parent=11 // pred_check
        %p187 = pneg %p80
      $region18: #{patch_merging_forward.1} parent=11 // pred_check_branch
        %189 = sbr.rel (%p187) target = $region20
      $region19: #{patch_merging_forward.1} parent=11 // pred_region
        _
      $region20: #{patch_merging_forward.1} parent=11 // pred_fallthru
        _
      // Predicated region
      $region21: #{patch_merging_forward.1} parent=11 // pred_check
        %p190 = pneg %p101
      $region22: #{patch_merging_forward.1} parent=11 // pred_check_branch
        %192 = sbr.rel (%p190) target = $region24
      $region23: #{patch_merging_forward.1} parent=11 // pred_region
        _
      $region24: #{patch_merging_forward.1} parent=11 // pred_fallthru
        _
      // Predicated region
      $region25: #{patch_merging_forward.1} parent=11 // pred_check
        %p193 = pneg %p122
      $region26: #{patch_merging_forward.1} parent=11 // pred_check_branch
        %195 = sbr.rel (%p193) target = $region28
      $region27: #{patch_merging_forward.1} parent=11 // pred_region
        _
      $region28: #{patch_merging_forward.1} parent=11 // pred_fallthru
        _
      // Predicated region
      $region29: #{patch_merging_forward.1} parent=11 // pred_check
        %p196 = pneg %p143
      $region30: #{patch_merging_forward.1} parent=11 // pred_check_branch
        %198 = sbr.rel (%p196) target = $region32
      $region31: #{patch_merging_forward.1} parent=11 // pred_region
        _
      $region32: #{patch_merging_forward.1} parent=11 // pred_fallthru
        _
    $region12: #{patch_merging_forward.1} parent=5 // pred_fallthru
      _
    %p199 = scmp.lt.s32.totalorder %s12, 2
    // Predicated region
    $region33: #{patch_merging_forward.1} parent=5 // pred_check
      %p200 = pneg %p199
    $region34: #{patch_merging_forward.1} parent=5 // pred_check_branch
      %202 = sbr.rel (%p200) target = $region36
    $region35: #{patch_merging_forward.1} parent=5 // pred_region
      // Predicated region
      $region37: #{patch_merging_forward.1} parent=35 // pred_check
        %p203 = pneg %p32
      $region38: #{patch_merging_forward.1} parent=35 // pred_check_branch
        %205 = sbr.rel (%p203) target = $region40
      $region39: #{patch_merging_forward.1} parent=35 // pred_region
        %s206 = smul.u32 16, %s12
        %p207 = scmp.lt.s32.totalorder %s206, 31
        %s208 = scalar_select %p207, %s206, 31
        %s209 = smul.addr %s208, 8
        %s210 = smul.addr %s209, 8
        %s211 = scalar_lea.vmem %s0, %s210
        %s212 = smul.u32 16, %s12
      $region40: #{patch_merging_forward.1} parent=35 // pred_fallthru
        _
    $region36: #{patch_merging_forward.1} parent=5 // pred_fallthru
      _
    %p213 = scmp.le.s32.totalorder 1, %s12
    %p214 = scmp.lt.s32.totalorder %s12, 3
    %p215 = pnand %p213, %p214
    %p216 = pneg %p215
    // Predicated region
    $region41: #{patch_merging_forward.1} parent=5 // pred_check
      _
    $region42: #{patch_merging_forward.1} parent=5 // pred_check_branch
      %218 = sbr.rel (%p215) target = $region44
    $region43: #{patch_merging_forward.1} parent=5 // pred_region
      %s219 = ssub.s32 %s12, 1
      %s220 = smul.u32 16, %s17
      %p221 = scmp.lt.s32.totalorder %s220, 31
      %s222 = scalar_select %p221, %s220, 31
      %s223 = smul.addr %s222, 8
      %s224 = smul.addr %s223, 8
      %s225 = scalar_lea.vmem %s0, %s224
      %p226 = pneg %p38
      %p227 = pneg %p35
      %p228 = pneg %p59
      %p229 = pneg %p56
      %p230 = pneg %p80
      %p231 = pneg %p77
      %p232 = pneg %p101
      %p233 = pneg %p98
      %p234 = pneg %p122
      %p235 = pneg %p119
      %p236 = pneg %p143
      %p237 = pneg %p140
      %p238 = pneg %p169
      %p239 = pneg %p166
      %s240 = smul.u32 16, %s17
      %p241 = scmp.lt.s32.totalorder %s240, 31
      %s242 = scalar_select %p241, %s240, 31
      %s243 = smul.addr %s242, 2
      %s244 = smul.addr %s243, 8
      %s245 = scalar_lea.vmem %s6, %s244
      %s246 = smul.u32 16, %s17
      %p247 = scmp.lt.s32.totalorder %s246, 31
      %s248 = scalar_select %p247, %s246, 31
      %s249 = smul.addr %s248, 8
      %s250 = smul.addr %s249, 8
      %s251 = scalar_lea.vmem %s0, %s250
      %s252 = smul.u32 16, %s17
      %s253 = smul.u32 16, %s17
      %p254 = scmp.lt.s32.totalorder %s253, 31
      %s255 = scalar_select %p254, %s253, 31
      %s256 = smul.addr %s255, 2
      %s257 = smul.addr %s256, 8
      %s258 = scalar_lea.vmem %s6, %s257
      %s259 = smul.u32 16, %s17
      %v261 = vld [vmem:[%s251] sm:$0xff]
      %v262 = vld [vmem:[%s251 + $0x8] sm:$0xff]
      %v263 = vld [vmem:[%s251 + $0x10] sm:$0xff]
      %v264 = vld [vmem:[%s251 + $0x18] sm:$0xff]
      %v265 = vld [vmem:[%s251 + $0x20] sm:$0xff]
      %v266 = vld [vmem:[%s251 + $0x28] sm:$0xff]
      %v267 = vld [vmem:[%s251 + $0x30] sm:$0xff]
      %v268 = vld [vmem:[%s251 + $0x38] sm:$0xff]
      %v269 = vld [vmem:[%s251 + $0x40] sm:$0xff]
      %v270 = vld [vmem:[%s251 + $0x48] sm:$0xff]
      %v271 = vld [vmem:[%s251 + $0x50] sm:$0xff]
      %v272 = vld [vmem:[%s251 + $0x58] sm:$0xff]
      %v273 = vld [vmem:[%s251 + $0x60] sm:$0xff]
      %v274 = vld [vmem:[%s251 + $0x68] sm:$0xff]
      %v275 = vld [vmem:[%s251 + $0x70] sm:$0xff]
      %v276 = vld [vmem:[%s251 + $0x78] sm:$0xff]
      %v277 = vld [vmem:[%s251 + $0x80] sm:$0xff]
      %v278 = vld [vmem:[%s251 + $0x88] sm:$0xff]
      %v279 = vld [vmem:[%s251 + $0x90] sm:$0xff]
      %v280 = vld [vmem:[%s251 + $0x98] sm:$0xff]
      %v281 = vld [vmem:[%s251 + $0xa0] sm:$0xff]
      %v282 = vld [vmem:[%s251 + $0xa8] sm:$0xff]
      %v283 = vld [vmem:[%s251 + $0xb0] sm:$0xff]
      %v284 = vld [vmem:[%s251 + $0xb8] sm:$0xff]
      %v285 = vld [vmem:[%s251 + $0xc0] sm:$0xff]
      %v286 = vld [vmem:[%s251 + $0xc8] sm:$0xff]
      %v287 = vld [vmem:[%s251 + $0xd0] sm:$0xff]
      %v288 = vld [vmem:[%s251 + $0xd8] sm:$0xff]
      %v289 = vld [vmem:[%s251 + $0xe0] sm:$0xff]
      %v290 = vld [vmem:[%s251 + $0xe8] sm:$0xff]
      %v291 = vld [vmem:[%s251 + $0xf0] sm:$0xff]
      %v292 = vld [vmem:[%s251 + $0xf8] sm:$0xff]
      %v293 = vld [vmem:[%s251 + $0x100] sm:$0xff]
      %v294 = vld [vmem:[%s251 + $0x108] sm:$0xff]
      %v295 = vld [vmem:[%s251 + $0x110] sm:$0xff]
      %v296 = vld [vmem:[%s251 + $0x118] sm:$0xff]
      %v297 = vld [vmem:[%s251 + $0x120] sm:$0xff]
      %v298 = vld [vmem:[%s251 + $0x128] sm:$0xff]
      %v299 = vld [vmem:[%s251 + $0x130] sm:$0xff]
      %v300 = vld [vmem:[%s251 + $0x138] sm:$0xff]
      %v301 = vld [vmem:[%s251 + $0x140] sm:$0xff]
      %v302 = vld [vmem:[%s251 + $0x148] sm:$0xff]
      %v303 = vld [vmem:[%s251 + $0x150] sm:$0xff]
      %v304 = vld [vmem:[%s251 + $0x158] sm:$0xff]
      %v305 = vld [vmem:[%s251 + $0x160] sm:$0xff]
      %v306 = vld [vmem:[%s251 + $0x168] sm:$0xff]
      %v307 = vld [vmem:[%s251 + $0x170] sm:$0xff]
      %v308 = vld [vmem:[%s251 + $0x178] sm:$0xff]
      %v309 = vld [vmem:[%s251 + $0x180] sm:$0xff]
      %v310 = vld [vmem:[%s251 + $0x188] sm:$0xff]
      %v311 = vld [vmem:[%s251 + $0x190] sm:$0xff]
      %v312 = vld [vmem:[%s251 + $0x198] sm:$0xff]
      %v313 = vld [vmem:[%s251 + $0x1a0] sm:$0xff]
      %v314 = vld [vmem:[%s251 + $0x1a8] sm:$0xff]
      %v315 = vld [vmem:[%s251 + $0x1b0] sm:$0xff]
      %v316 = vld [vmem:[%s251 + $0x1b8] sm:$0xff]
      %v317 = vld [vmem:[%s251 + $0x1c0] sm:$0xff]
      %v318 = vld [vmem:[%s251 + $0x1c8] sm:$0xff]
      %v319 = vld [vmem:[%s251 + $0x1d0] sm:$0xff]
      %v320 = vld [vmem:[%s251 + $0x1d8] sm:$0xff]
      %v321 = vld [vmem:[%s251 + $0x1e0] sm:$0xff]
      %v322 = vld [vmem:[%s251 + $0x1e8] sm:$0xff]
      %v323 = vld [vmem:[%s251 + $0x1f0] sm:$0xff]
      %v324 = vld [vmem:[%s251 + $0x1f8] sm:$0xff]
      %v325 = vld [vmem:[%s251 + $0x200] sm:$0xff]
      %v326 = vld [vmem:[%s251 + $0x208] sm:$0xff]
      %v327 = vld [vmem:[%s251 + $0x210] sm:$0xff]
      %v328 = vld [vmem:[%s251 + $0x218] sm:$0xff]
      %v329 = vld [vmem:[%s251 + $0x220] sm:$0xff]
      %v330 = vld [vmem:[%s251 + $0x228] sm:$0xff]
      %v331 = vld [vmem:[%s251 + $0x230] sm:$0xff]
      %v332 = vld [vmem:[%s251 + $0x238] sm:$0xff]
      %v333 = vld [vmem:[%s251 + $0x240] sm:$0xff]
      %v334 = vld [vmem:[%s251 + $0x248] sm:$0xff]
      %v335 = vld [vmem:[%s251 + $0x250] sm:$0xff]
      %v336 = vld [vmem:[%s251 + $0x258] sm:$0xff]
      %v337 = vld [vmem:[%s251 + $0x260] sm:$0xff]
      %v338 = vld [vmem:[%s251 + $0x268] sm:$0xff]
      %v339 = vld [vmem:[%s251 + $0x270] sm:$0xff]
      %v340 = vld [vmem:[%s251 + $0x278] sm:$0xff]
      %v341 = vld [vmem:[%s251 + $0x280] sm:$0xff]
      %v342 = vld [vmem:[%s251 + $0x288] sm:$0xff]
      %v343 = vld [vmem:[%s251 + $0x290] sm:$0xff]
      %v344 = vld [vmem:[%s251 + $0x298] sm:$0xff]
      %v345 = vld [vmem:[%s251 + $0x2a0] sm:$0xff]
      %v346 = vld [vmem:[%s251 + $0x2a8] sm:$0xff]
      %v347 = vld [vmem:[%s251 + $0x2b0] sm:$0xff]
      %v348 = vld [vmem:[%s251 + $0x2b8] sm:$0xff]
      %v349 = vld [vmem:[%s251 + $0x2c0] sm:$0xff]
      %v350 = vld [vmem:[%s251 + $0x2c8] sm:$0xff]
      %v351 = vld [vmem:[%s251 + $0x2d0] sm:$0xff]
      %v352 = vld [vmem:[%s251 + $0x2d8] sm:$0xff]
      %v353 = vld [vmem:[%s251 + $0x2e0] sm:$0xff]
      %v354 = vld [vmem:[%s251 + $0x2e8] sm:$0xff]
      %v355 = vld [vmem:[%s251 + $0x2f0] sm:$0xff]
      %v356 = vld [vmem:[%s251 + $0x2f8] sm:$0xff]
      %v357 = vld [vmem:[%s251 + $0x300] sm:$0xff]
      %v358 = vld [vmem:[%s251 + $0x308] sm:$0xff]
      %v359 = vld [vmem:[%s251 + $0x310] sm:$0xff]
      %v360 = vld [vmem:[%s251 + $0x318] sm:$0xff]
      %v361 = vld [vmem:[%s251 + $0x320] sm:$0xff]
      %v362 = vld [vmem:[%s251 + $0x328] sm:$0xff]
      %v363 = vld [vmem:[%s251 + $0x330] sm:$0xff]
      %v364 = vld [vmem:[%s251 + $0x338] sm:$0xff]
      %v365 = vld [vmem:[%s251 + $0x340] sm:$0xff]
      %v366 = vld [vmem:[%s251 + $0x348] sm:$0xff]
      %v367 = vld [vmem:[%s251 + $0x350] sm:$0xff]
      %v368 = vld [vmem:[%s251 + $0x358] sm:$0xff]
      %v369 = vld [vmem:[%s251 + $0x360] sm:$0xff]
      %v370 = vld [vmem:[%s251 + $0x368] sm:$0xff]
      %v371 = vld [vmem:[%s251 + $0x370] sm:$0xff]
      %v372 = vld [vmem:[%s251 + $0x378] sm:$0xff]
      %v373 = vld [vmem:[%s251 + $0x380] sm:$0xff]
      %v374 = vld [vmem:[%s251 + $0x388] sm:$0xff]
      %v375 = vld [vmem:[%s251 + $0x390] sm:$0xff]
      %v376 = vld [vmem:[%s251 + $0x398] sm:$0xff]
      %v377 = vld [vmem:[%s251 + $0x3a0] sm:$0xff]
      %v378 = vld [vmem:[%s251 + $0x3a8] sm:$0xff]
      %v379 = vld [vmem:[%s251 + $0x3b0] sm:$0xff]
      %v380 = vld [vmem:[%s251 + $0x3b8] sm:$0xff]
      %v381 = vld [vmem:[%s251 + $0x3c0] sm:$0xff]
      %v382 = vld [vmem:[%s251 + $0x3c8] sm:$0xff]
      %v383 = vld [vmem:[%s251 + $0x3d0] sm:$0xff]
      %v384 = vld [vmem:[%s251 + $0x3d8] sm:$0xff]
      %v385 = vld [vmem:[%s251 + $0x3e0] sm:$0xff]
      %v386 = vld [vmem:[%s251 + $0x3e8] sm:$0xff]
      %v387 = vld [vmem:[%s251 + $0x3f0] sm:$0xff]
      %v388 = vld [vmem:[%s251 + $0x3f8] sm:$0xff]
      %v389 = vld [vmem:[%s1] sm:$0xff]
      %v390 = vld [vmem:[%s1 + $0x8] sm:$0xff]
      %v391 = vld [vmem:[%s1 + $0x10] sm:$0xff]
      %v392 = vld [vmem:[%s1 + $0x18] sm:$0xff]
      %v393 = vld [vmem:[%s1 + $0x20] sm:$0xff]
      %v394 = vld [vmem:[%s1 + $0x28] sm:$0xff]
      %v395 = vld [vmem:[%s1 + $0x30] sm:$0xff]
      %v396 = vld [vmem:[%s1 + $0x38] sm:$0xff]
      %v397 = vld [vmem:[%s2] sm:$0xff]
      %v398 = vld [vmem:[%s2 + $0x8] sm:$0xff]
      %vm399 = vcmask 523264
      %v401 = vsel %vm399, %v261, 0
      %v404 = vsel %vm399, %v262, 0
      %v407 = vsel %vm399, %v263, 0
      %v410 = vsel %vm399, %v264, 0
      %v413 = vsel %vm399, %v265, 0
      %v416 = vsel %vm399, %v266, 0
      %v419 = vsel %vm399, %v267, 0
      %v422 = vsel %vm399, %v268, 0
      %v425 = vsel %vm399, %v269, 0
      %v428 = vsel %vm399, %v270, 0
      %v431 = vsel %vm399, %v271, 0
      %v434 = vsel %vm399, %v272, 0
      %v437 = vsel %vm399, %v273, 0
      %v440 = vsel %vm399, %v274, 0
      %v443 = vsel %vm399, %v275, 0
      %v446 = vsel %vm399, %v276, 0
      %v449 = vsel %vm399, %v277, 0
      %v452 = vsel %vm399, %v278, 0
      %v455 = vsel %vm399, %v279, 0
      %v458 = vsel %vm399, %v280, 0
      %v461 = vsel %vm399, %v281, 0
      %v464 = vsel %vm399, %v282, 0
      %v467 = vsel %vm399, %v283, 0
      %v470 = vsel %vm399, %v284, 0
      %v473 = vsel %vm399, %v285, 0
      %v476 = vsel %vm399, %v286, 0
      %v479 = vsel %vm399, %v287, 0
      %v482 = vsel %vm399, %v288, 0
      %v485 = vsel %vm399, %v289, 0
      %v488 = vsel %vm399, %v290, 0
      %v491 = vsel %vm399, %v291, 0
      %v494 = vsel %vm399, %v292, 0
      %v497 = vsel %vm399, %v293, 0
      %v500 = vsel %vm399, %v294, 0
      %v503 = vsel %vm399, %v295, 0
      %v506 = vsel %vm399, %v296, 0
      %v509 = vsel %vm399, %v297, 0
      %v512 = vsel %vm399, %v298, 0
      %v515 = vsel %vm399, %v299, 0
      %v518 = vsel %vm399, %v300, 0
      %v521 = vsel %vm399, %v301, 0
      %v524 = vsel %vm399, %v302, 0
      %v527 = vsel %vm399, %v303, 0
      %v530 = vsel %vm399, %v304, 0
      %v533 = vsel %vm399, %v305, 0
      %v536 = vsel %vm399, %v306, 0
      %v539 = vsel %vm399, %v307, 0
      %v542 = vsel %vm399, %v308, 0
      %v545 = vsel %vm399, %v309, 0
      %v548 = vsel %vm399, %v310, 0
      %v551 = vsel %vm399, %v311, 0
      %v554 = vsel %vm399, %v312, 0
      %v557 = vsel %vm399, %v313, 0
      %v560 = vsel %vm399, %v314, 0
      %v563 = vsel %vm399, %v315, 0
      %v566 = vsel %vm399, %v316, 0
      %v569 = vsel %vm399, %v317, 0
      %v572 = vsel %vm399, %v318, 0
      %v575 = vsel %vm399, %v319, 0
      %v578 = vsel %vm399, %v320, 0
      %v581 = vsel %vm399, %v321, 0
      %v584 = vsel %vm399, %v322, 0
      %v587 = vsel %vm399, %v323, 0
      %v590 = vsel %vm399, %v324, 0
      %v593 = vsel %vm399, %v325, 0
      %v596 = vsel %vm399, %v326, 0
      %v599 = vsel %vm399, %v327, 0
      %v602 = vsel %vm399, %v328, 0
      %v605 = vsel %vm399, %v329, 0
      %v608 = vsel %vm399, %v330, 0
      %v611 = vsel %vm399, %v331, 0
      %v614 = vsel %vm399, %v332, 0
      %v617 = vsel %vm399, %v333, 0
      %v620 = vsel %vm399, %v334, 0
      %v623 = vsel %vm399, %v335, 0
      %v626 = vsel %vm399, %v336, 0
      %v629 = vsel %vm399, %v337, 0
      %v632 = vsel %vm399, %v338, 0
      %v635 = vsel %vm399, %v339, 0
      %v638 = vsel %vm399, %v340, 0
      %v641 = vsel %vm399, %v341, 0
      %v644 = vsel %vm399, %v342, 0
      %v647 = vsel %vm399, %v343, 0
      %v650 = vsel %vm399, %v344, 0
      %v653 = vsel %vm399, %v345, 0
      %v656 = vsel %vm399, %v346, 0
      %v659 = vsel %vm399, %v347, 0
      %v662 = vsel %vm399, %v348, 0
      %v665 = vsel %vm399, %v349, 0
      %v668 = vsel %vm399, %v350, 0
      %v671 = vsel %vm399, %v351, 0
      %v674 = vsel %vm399, %v352, 0
      %v677 = vsel %vm399, %v353, 0
      %v680 = vsel %vm399, %v354, 0
      %v683 = vsel %vm399, %v355, 0
      %v686 = vsel %vm399, %v356, 0
      %v689 = vsel %vm399, %v357, 0
      %v692 = vsel %vm399, %v358, 0
      %v695 = vsel %vm399, %v359, 0
      %v698 = vsel %vm399, %v360, 0
      %v701 = vsel %vm399, %v361, 0
      %v704 = vsel %vm399, %v362, 0
      %v707 = vsel %vm399, %v363, 0
      %v710 = vsel %vm399, %v364, 0
      %v713 = vsel %vm399, %v365, 0
      %v716 = vsel %vm399, %v366, 0
      %v719 = vsel %vm399, %v367, 0
      %v722 = vsel %vm399, %v368, 0
      %v725 = vsel %vm399, %v369, 0
      %v728 = vsel %vm399, %v370, 0
      %v731 = vsel %vm399, %v371, 0
      %v734 = vsel %vm399, %v372, 0
      %v737 = vsel %vm399, %v373, 0
      %v740 = vsel %vm399, %v374, 0
      %v743 = vsel %vm399, %v375, 0
      %v746 = vsel %vm399, %v376, 0
      %v749 = vsel %vm399, %v377, 0
      %v752 = vsel %vm399, %v378, 0
      %v755 = vsel %vm399, %v379, 0
      %v758 = vsel %vm399, %v380, 0
      %v761 = vsel %vm399, %v381, 0
      %v764 = vsel %vm399, %v382, 0
      %v767 = vsel %vm399, %v383, 0
      %v770 = vsel %vm399, %v384, 0
      %v773 = vsel %vm399, %v385, 0
      %v776 = vsel %vm399, %v386, 0
      %v779 = vsel %vm399, %v387, 0
      %v782 = vsel %vm399, %v388, 0
      %784 = vmatpush.msra.mxu0 0.0
      %785 = vmatpush.msra.mxu0 0.0
      %786 = vmatpush.msra.mxu0 0.0
      %787 = vmatpush.msra.mxu0 0.0
      %788 = vmatpush.msra.mxu0 0.0
      %789 = vmatpush.msra.mxu0 0.0
      %790 = vmatpush.msra.mxu0 0.0
      %791 = vmatpush.msra.mxu0 0.0
      %792 = vmatpush.msra.mxu0 %v396
      %793 = vmatpush.msra.mxu0 %v395
      %794 = vmatpush.msra.mxu0 %v394
      %795 = vmatpush.msra.mxu0 %v393
      %796 = vmatpush.msra.mxu0 %v392
      %797 = vmatpush.msra.mxu0 %v391
      %798 = vmatpush.msra.mxu0 %v390
      %799 = vmatpush.msra.mxu0 %v389
      %800 = vmatmul.f32.gmra.mxu0 %v401
      %v801 = vpop.f32.mrf.mxu0
      %v802 = vadd.f32 0.0, %v801
      %803 = vmatmul.f32.gmra.mxu0 %v404
      %v804 = vpop.f32.mrf.mxu0
      %v805 = vadd.f32 0.0, %v804
      %806 = vmatmul.f32.gmra.mxu0 %v407
      %v807 = vpop.f32.mrf.mxu0
      %v808 = vadd.f32 0.0, %v807
      %809 = vmatmul.f32.gmra.mxu0 %v410
      %v810 = vpop.f32.mrf.mxu0
      %v811 = vadd.f32 0.0, %v810
      %812 = vmatmul.f32.gmra.mxu0 %v413
      %v813 = vpop.f32.mrf.mxu0
      %v814 = vadd.f32 0.0, %v813
      %815 = vmatmul.f32.gmra.mxu0 %v416
      %v816 = vpop.f32.mrf.mxu0
      %v817 = vadd.f32 0.0, %v816
      %818 = vmatmul.f32.gmra.mxu0 %v419
      %v819 = vpop.f32.mrf.mxu0
      %v820 = vadd.f32 0.0, %v819
      %821 = vmatmul.f32.gmra.mxu0 %v422
      %v822 = vpop.f32.mrf.mxu0
      %v823 = vadd.f32 0.0, %v822
      %824 = vmatmul.f32.gmra.mxu0 %v425
      %v825 = vpop.f32.mrf.mxu0
      %v826 = vadd.f32 0.0, %v825
      %827 = vmatmul.f32.gmra.mxu0 %v428
      %v828 = vpop.f32.mrf.mxu0
      %v829 = vadd.f32 0.0, %v828
      %830 = vmatmul.f32.gmra.mxu0 %v431
      %v831 = vpop.f32.mrf.mxu0
      %v832 = vadd.f32 0.0, %v831
      %833 = vmatmul.f32.gmra.mxu0 %v434
      %v834 = vpop.f32.mrf.mxu0
      %v835 = vadd.f32 0.0, %v834
      %836 = vmatmul.f32.gmra.mxu0 %v437
      %v837 = vpop.f32.mrf.mxu0
      %v838 = vadd.f32 0.0, %v837
      %839 = vmatmul.f32.gmra.mxu0 %v440
      %v840 = vpop.f32.mrf.mxu0
      %v841 = vadd.f32 0.0, %v840
      %842 = vmatmul.f32.gmra.mxu0 %v443
      %v843 = vpop.f32.mrf.mxu0
      %v844 = vadd.f32 0.0, %v843
      %845 = vmatmul.f32.gmra.mxu0 %v446
      %v846 = vpop.f32.mrf.mxu0
      %v847 = vadd.f32 0.0, %v846
      %848 = vmatmul.f32.gmra.mxu0 %v449
      %v849 = vpop.f32.mrf.mxu0
      %v850 = vadd.f32 0.0, %v849
      %851 = vmatmul.f32.gmra.mxu0 %v452
      %v852 = vpop.f32.mrf.mxu0
      %v853 = vadd.f32 0.0, %v852
      %854 = vmatmul.f32.gmra.mxu0 %v455
      %v855 = vpop.f32.mrf.mxu0
      %v856 = vadd.f32 0.0, %v855
      %857 = vmatmul.f32.gmra.mxu0 %v458
      %v858 = vpop.f32.mrf.mxu0
      %v859 = vadd.f32 0.0, %v858
      %860 = vmatmul.f32.gmra.mxu0 %v461
      %v861 = vpop.f32.mrf.mxu0
      %v862 = vadd.f32 0.0, %v861
      %863 = vmatmul.f32.gmra.mxu0 %v464
      %v864 = vpop.f32.mrf.mxu0
      %v865 = vadd.f32 0.0, %v864
      %866 = vmatmul.f32.gmra.mxu0 %v467
      %v867 = vpop.f32.mrf.mxu0
      %v868 = vadd.f32 0.0, %v867
      %869 = vmatmul.f32.gmra.mxu0 %v470
      %v870 = vpop.f32.mrf.mxu0
      %v871 = vadd.f32 0.0, %v870
      %872 = vmatmul.f32.gmra.mxu0 %v473
      %v873 = vpop.f32.mrf.mxu0
      %v874 = vadd.f32 0.0, %v873
      %875 = vmatmul.f32.gmra.mxu0 %v476
      %v876 = vpop.f32.mrf.mxu0
      %v877 = vadd.f32 0.0, %v876
      %878 = vmatmul.f32.gmra.mxu0 %v479
      %v879 = vpop.f32.mrf.mxu0
      %v880 = vadd.f32 0.0, %v879
      %881 = vmatmul.f32.gmra.mxu0 %v482
      %v882 = vpop.f32.mrf.mxu0
      %v883 = vadd.f32 0.0, %v882
      %884 = vmatmul.f32.gmra.mxu0 %v485
      %v885 = vpop.f32.mrf.mxu0
      %v886 = vadd.f32 0.0, %v885
      %887 = vmatmul.f32.gmra.mxu0 %v488
      %v888 = vpop.f32.mrf.mxu0
      %v889 = vadd.f32 0.0, %v888
      %890 = vmatmul.f32.gmra.mxu0 %v491
      %v891 = vpop.f32.mrf.mxu0
      %v892 = vadd.f32 0.0, %v891
      %893 = vmatmul.f32.gmra.mxu0 %v494
      %v894 = vpop.f32.mrf.mxu0
      %v895 = vadd.f32 0.0, %v894
      %896 = vmatmul.f32.gmra.mxu0 %v497
      %v897 = vpop.f32.mrf.mxu0
      %v898 = vadd.f32 0.0, %v897
      %899 = vmatmul.f32.gmra.mxu0 %v500
      %v900 = vpop.f32.mrf.mxu0
      %v901 = vadd.f32 0.0, %v900
      %902 = vmatmul.f32.gmra.mxu0 %v503
      %v903 = vpop.f32.mrf.mxu0
      %v904 = vadd.f32 0.0, %v903
      %905 = vmatmul.f32.gmra.mxu0 %v506
      %v906 = vpop.f32.mrf.mxu0
      %v907 = vadd.f32 0.0, %v906
      %908 = vmatmul.f32.gmra.mxu0 %v509
      %v909 = vpop.f32.mrf.mxu0
      %v910 = vadd.f32 0.0, %v909
      %911 = vmatmul.f32.gmra.mxu0 %v512
      %v912 = vpop.f32.mrf.mxu0
      %v913 = vadd.f32 0.0, %v912
      %914 = vmatmul.f32.gmra.mxu0 %v515
      %v915 = vpop.f32.mrf.mxu0
      %v916 = vadd.f32 0.0, %v915
      %917 = vmatmul.f32.gmra.mxu0 %v518
      %v918 = vpop.f32.mrf.mxu0
      %v919 = vadd.f32 0.0, %v918
      %920 = vmatmul.f32.gmra.mxu0 %v521
      %v921 = vpop.f32.mrf.mxu0
      %v922 = vadd.f32 0.0, %v921
      %923 = vmatmul.f32.gmra.mxu0 %v524
      %v924 = vpop.f32.mrf.mxu0
      %v925 = vadd.f32 0.0, %v924
      %926 = vmatmul.f32.gmra.mxu0 %v527
      %v927 = vpop.f32.mrf.mxu0
      %v928 = vadd.f32 0.0, %v927
      %929 = vmatmul.f32.gmra.mxu0 %v530
      %v930 = vpop.f32.mrf.mxu0
      %v931 = vadd.f32 0.0, %v930
      %932 = vmatmul.f32.gmra.mxu0 %v533
      %v933 = vpop.f32.mrf.mxu0
      %v934 = vadd.f32 0.0, %v933
      %935 = vmatmul.f32.gmra.mxu0 %v536
      %v936 = vpop.f32.mrf.mxu0
      %v937 = vadd.f32 0.0, %v936
      %938 = vmatmul.f32.gmra.mxu0 %v539
      %v939 = vpop.f32.mrf.mxu0
      %v940 = vadd.f32 0.0, %v939
      %941 = vmatmul.f32.gmra.mxu0 %v542
      %v942 = vpop.f32.mrf.mxu0
      %v943 = vadd.f32 0.0, %v942
      %944 = vmatmul.f32.gmra.mxu0 %v545
      %v945 = vpop.f32.mrf.mxu0
      %v946 = vadd.f32 0.0, %v945
      %947 = vmatmul.f32.gmra.mxu0 %v548
      %v948 = vpop.f32.mrf.mxu0
      %v949 = vadd.f32 0.0, %v948
      %950 = vmatmul.f32.gmra.mxu0 %v551
      %v951 = vpop.f32.mrf.mxu0
      %v952 = vadd.f32 0.0, %v951
      %953 = vmatmul.f32.gmra.mxu0 %v554
      %v954 = vpop.f32.mrf.mxu0
      %v955 = vadd.f32 0.0, %v954
      %956 = vmatmul.f32.gmra.mxu0 %v557
      %v957 = vpop.f32.mrf.mxu0
      %v958 = vadd.f32 0.0, %v957
      %959 = vmatmul.f32.gmra.mxu0 %v560
      %v960 = vpop.f32.mrf.mxu0
      %v961 = vadd.f32 0.0, %v960
      %962 = vmatmul.f32.gmra.mxu0 %v563
      %v963 = vpop.f32.mrf.mxu0
      %v964 = vadd.f32 0.0, %v963
      %965 = vmatmul.f32.gmra.mxu0 %v566
      %v966 = vpop.f32.mrf.mxu0
      %v967 = vadd.f32 0.0, %v966
      %968 = vmatmul.f32.gmra.mxu0 %v569
      %v969 = vpop.f32.mrf.mxu0
      %v970 = vadd.f32 0.0, %v969
      %971 = vmatmul.f32.gmra.mxu0 %v572
      %v972 = vpop.f32.mrf.mxu0
      %v973 = vadd.f32 0.0, %v972
      %974 = vmatmul.f32.gmra.mxu0 %v575
      %v975 = vpop.f32.mrf.mxu0
      %v976 = vadd.f32 0.0, %v975
      %977 = vmatmul.f32.gmra.mxu0 %v578
      %v978 = vpop.f32.mrf.mxu0
      %v979 = vadd.f32 0.0, %v978
      %980 = vmatmul.f32.gmra.mxu0 %v581
      %v981 = vpop.f32.mrf.mxu0
      %v982 = vadd.f32 0.0, %v981
      %983 = vmatmul.f32.gmra.mxu0 %v584
      %v984 = vpop.f32.mrf.mxu0
      %v985 = vadd.f32 0.0, %v984
      %986 = vmatmul.f32.gmra.mxu0 %v587
      %v987 = vpop.f32.mrf.mxu0
      %v988 = vadd.f32 0.0, %v987
      %989 = vmatmul.f32.gmra.mxu0 %v590
      %v990 = vpop.f32.mrf.mxu0
      %v991 = vadd.f32 0.0, %v990
      %992 = vmatmul.f32.gmra.mxu0 %v593
      %v993 = vpop.f32.mrf.mxu0
      %v994 = vadd.f32 0.0, %v993
      %995 = vmatmul.f32.gmra.mxu0 %v596
      %v996 = vpop.f32.mrf.mxu0
      %v997 = vadd.f32 0.0, %v996
      %998 = vmatmul.f32.gmra.mxu0 %v599
      %v999 = vpop.f32.mrf.mxu0
      %v1000 = vadd.f32 0.0, %v999
      %1001 = vmatmul.f32.gmra.mxu0 %v602
      %v1002 = vpop.f32.mrf.mxu0
      %v1003 = vadd.f32 0.0, %v1002
      %1004 = vmatmul.f32.gmra.mxu0 %v605
      %v1005 = vpop.f32.mrf.mxu0
      %v1006 = vadd.f32 0.0, %v1005
      %1007 = vmatmul.f32.gmra.mxu0 %v608
      %v1008 = vpop.f32.mrf.mxu0
      %v1009 = vadd.f32 0.0, %v1008
      %1010 = vmatmul.f32.gmra.mxu0 %v611
      %v1011 = vpop.f32.mrf.mxu0
      %v1012 = vadd.f32 0.0, %v1011
      %1013 = vmatmul.f32.gmra.mxu0 %v614
      %v1014 = vpop.f32.mrf.mxu0
      %v1015 = vadd.f32 0.0, %v1014
      %1016 = vmatmul.f32.gmra.mxu0 %v617
      %v1017 = vpop.f32.mrf.mxu0
      %v1018 = vadd.f32 0.0, %v1017
      %1019 = vmatmul.f32.gmra.mxu0 %v620
      %v1020 = vpop.f32.mrf.mxu0
      %v1021 = vadd.f32 0.0, %v1020
      %1022 = vmatmul.f32.gmra.mxu0 %v623
      %v1023 = vpop.f32.mrf.mxu0
      %v1024 = vadd.f32 0.0, %v1023
      %1025 = vmatmul.f32.gmra.mxu0 %v626
      %v1026 = vpop.f32.mrf.mxu0
      %v1027 = vadd.f32 0.0, %v1026
      %1028 = vmatmul.f32.gmra.mxu0 %v629
      %v1029 = vpop.f32.mrf.mxu0
      %v1030 = vadd.f32 0.0, %v1029
      %1031 = vmatmul.f32.gmra.mxu0 %v632
      %v1032 = vpop.f32.mrf.mxu0
      %v1033 = vadd.f32 0.0, %v1032
      %1034 = vmatmul.f32.gmra.mxu0 %v635
      %v1035 = vpop.f32.mrf.mxu0
      %v1036 = vadd.f32 0.0, %v1035
      %1037 = vmatmul.f32.gmra.mxu0 %v638
      %v1038 = vpop.f32.mrf.mxu0
      %v1039 = vadd.f32 0.0, %v1038
      %1040 = vmatmul.f32.gmra.mxu0 %v641
      %v1041 = vpop.f32.mrf.mxu0
      %v1042 = vadd.f32 0.0, %v1041
      %1043 = vmatmul.f32.gmra.mxu0 %v644
      %v1044 = vpop.f32.mrf.mxu0
      %v1045 = vadd.f32 0.0, %v1044
      %1046 = vmatmul.f32.gmra.mxu0 %v647
      %v1047 = vpop.f32.mrf.mxu0
      %v1048 = vadd.f32 0.0, %v1047
      %1049 = vmatmul.f32.gmra.mxu0 %v650
      %v1050 = vpop.f32.mrf.mxu0
      %v1051 = vadd.f32 0.0, %v1050
      %1052 = vmatmul.f32.gmra.mxu0 %v653
      %v1053 = vpop.f32.mrf.mxu0
      %v1054 = vadd.f32 0.0, %v1053
      %1055 = vmatmul.f32.gmra.mxu0 %v656
      %v1056 = vpop.f32.mrf.mxu0
      %v1057 = vadd.f32 0.0, %v1056
      %1058 = vmatmul.f32.gmra.mxu0 %v659
      %v1059 = vpop.f32.mrf.mxu0
      %v1060 = vadd.f32 0.0, %v1059
      %1061 = vmatmul.f32.gmra.mxu0 %v662
      %v1062 = vpop.f32.mrf.mxu0
      %v1063 = vadd.f32 0.0, %v1062
      %1064 = vmatmul.f32.gmra.mxu0 %v665
      %v1065 = vpop.f32.mrf.mxu0
      %v1066 = vadd.f32 0.0, %v1065
      %1067 = vmatmul.f32.gmra.mxu0 %v668
      %v1068 = vpop.f32.mrf.mxu0
      %v1069 = vadd.f32 0.0, %v1068
      %1070 = vmatmul.f32.gmra.mxu0 %v671
      %v1071 = vpop.f32.mrf.mxu0
      %v1072 = vadd.f32 0.0, %v1071
      %1073 = vmatmul.f32.gmra.mxu0 %v674
      %v1074 = vpop.f32.mrf.mxu0
      %v1075 = vadd.f32 0.0, %v1074
      %1076 = vmatmul.f32.gmra.mxu0 %v677
      %v1077 = vpop.f32.mrf.mxu0
      %v1078 = vadd.f32 0.0, %v1077
      %1079 = vmatmul.f32.gmra.mxu0 %v680
      %v1080 = vpop.f32.mrf.mxu0
      %v1081 = vadd.f32 0.0, %v1080
      %1082 = vmatmul.f32.gmra.mxu0 %v683
      %v1083 = vpop.f32.mrf.mxu0
      %v1084 = vadd.f32 0.0, %v1083
      %1085 = vmatmul.f32.gmra.mxu0 %v686
      %v1086 = vpop.f32.mrf.mxu0
      %v1087 = vadd.f32 0.0, %v1086
      %1088 = vmatmul.f32.gmra.mxu0 %v689
      %v1089 = vpop.f32.mrf.mxu0
      %v1090 = vadd.f32 0.0, %v1089
      %1091 = vmatmul.f32.gmra.mxu0 %v692
      %v1092 = vpop.f32.mrf.mxu0
      %v1093 = vadd.f32 0.0, %v1092
      %1094 = vmatmul.f32.gmra.mxu0 %v695
      %v1095 = vpop.f32.mrf.mxu0
      %v1096 = vadd.f32 0.0, %v1095
      %1097 = vmatmul.f32.gmra.mxu0 %v698
      %v1098 = vpop.f32.mrf.mxu0
      %v1099 = vadd.f32 0.0, %v1098
      %1100 = vmatmul.f32.gmra.mxu0 %v701
      %v1101 = vpop.f32.mrf.mxu0
      %v1102 = vadd.f32 0.0, %v1101
      %1103 = vmatmul.f32.gmra.mxu0 %v704
      %v1104 = vpop.f32.mrf.mxu0
      %v1105 = vadd.f32 0.0, %v1104
      %1106 = vmatmul.f32.gmra.mxu0 %v707
      %v1107 = vpop.f32.mrf.mxu0
      %v1108 = vadd.f32 0.0, %v1107
      %1109 = vmatmul.f32.gmra.mxu0 %v710
      %v1110 = vpop.f32.mrf.mxu0
      %v1111 = vadd.f32 0.0, %v1110
      %1112 = vmatmul.f32.gmra.mxu0 %v713
      %v1113 = vpop.f32.mrf.mxu0
      %v1114 = vadd.f32 0.0, %v1113
      %1115 = vmatmul.f32.gmra.mxu0 %v716
      %v1116 = vpop.f32.mrf.mxu0
      %v1117 = vadd.f32 0.0, %v1116
      %1118 = vmatmul.f32.gmra.mxu0 %v719
      %v1119 = vpop.f32.mrf.mxu0
      %v1120 = vadd.f32 0.0, %v1119
      %1121 = vmatmul.f32.gmra.mxu0 %v722
      %v1122 = vpop.f32.mrf.mxu0
      %v1123 = vadd.f32 0.0, %v1122
      %1124 = vmatmul.f32.gmra.mxu0 %v725
      %v1125 = vpop.f32.mrf.mxu0
      %v1126 = vadd.f32 0.0, %v1125
      %1127 = vmatmul.f32.gmra.mxu0 %v728
      %v1128 = vpop.f32.mrf.mxu0
      %v1129 = vadd.f32 0.0, %v1128
      %1130 = vmatmul.f32.gmra.mxu0 %v731
      %v1131 = vpop.f32.mrf.mxu0
      %v1132 = vadd.f32 0.0, %v1131
      %1133 = vmatmul.f32.gmra.mxu0 %v734
      %v1134 = vpop.f32.mrf.mxu0
      %v1135 = vadd.f32 0.0, %v1134
      %1136 = vmatmul.f32.gmra.mxu0 %v737
      %v1137 = vpop.f32.mrf.mxu0
      %v1138 = vadd.f32 0.0, %v1137
      %1139 = vmatmul.f32.gmra.mxu0 %v740
      %v1140 = vpop.f32.mrf.mxu0
      %v1141 = vadd.f32 0.0, %v1140
      %1142 = vmatmul.f32.gmra.mxu0 %v743
      %v1143 = vpop.f32.mrf.mxu0
      %v1144 = vadd.f32 0.0, %v1143
      %1145 = vmatmul.f32.gmra.mxu0 %v746
      %v1146 = vpop.f32.mrf.mxu0
      %v1147 = vadd.f32 0.0, %v1146
      %1148 = vmatmul.f32.gmra.mxu0 %v749
      %v1149 = vpop.f32.mrf.mxu0
      %v1150 = vadd.f32 0.0, %v1149
      %1151 = vmatmul.f32.gmra.mxu0 %v752
      %v1152 = vpop.f32.mrf.mxu0
      %v1153 = vadd.f32 0.0, %v1152
      %1154 = vmatmul.f32.gmra.mxu0 %v755
      %v1155 = vpop.f32.mrf.mxu0
      %v1156 = vadd.f32 0.0, %v1155
      %1157 = vmatmul.f32.gmra.mxu0 %v758
      %v1158 = vpop.f32.mrf.mxu0
      %v1159 = vadd.f32 0.0, %v1158
      %1160 = vmatmul.f32.gmra.mxu0 %v761
      %v1161 = vpop.f32.mrf.mxu0
      %v1162 = vadd.f32 0.0, %v1161
      %1163 = vmatmul.f32.gmra.mxu0 %v764
      %v1164 = vpop.f32.mrf.mxu0
      %v1165 = vadd.f32 0.0, %v1164
      %1166 = vmatmul.f32.gmra.mxu0 %v767
      %v1167 = vpop.f32.mrf.mxu0
      %v1168 = vadd.f32 0.0, %v1167
      %1169 = vmatmul.f32.gmra.mxu0 %v770
      %v1170 = vpop.f32.mrf.mxu0
      %v1171 = vadd.f32 0.0, %v1170
      %1172 = vmatmul.f32.gmra.mxu0 %v773
      %v1173 = vpop.f32.mrf.mxu0
      %v1174 = vadd.f32 0.0, %v1173
      %1175 = vmatmul.f32.gmra.mxu0 %v776
      %v1176 = vpop.f32.mrf.mxu0
      %v1177 = vadd.f32 0.0, %v1176
      %1178 = vmatmul.f32.gmra.mxu0 %v779
      %v1179 = vpop.f32.mrf.mxu0
      %v1180 = vadd.f32 0.0, %v1179
      %1181 = vmatmul.f32.gmra.mxu0 %v782
      %v1182 = vpop.f32.mrf.mxu0
      %v1183 = vadd.f32 0.0, %v1182
      %1184 = vdwg.mxu0
      %v1185 = vadd.f32 %v802, %v805
      %v1186 = vadd.f32 %v808, %v811
      %v1187 = vadd.f32 %v814, %v817
      %v1188 = vadd.f32 %v820, %v823
      %v1189 = vadd.f32 %v826, %v829
      %v1190 = vadd.f32 %v832, %v835
      %v1191 = vadd.f32 %v838, %v841
      %v1192 = vadd.f32 %v844, %v847
      %v1193 = vadd.f32 %v850, %v853
      %v1194 = vadd.f32 %v856, %v859
      %v1195 = vadd.f32 %v862, %v865
      %v1196 = vadd.f32 %v868, %v871
      %v1197 = vadd.f32 %v874, %v877
      %v1198 = vadd.f32 %v880, %v883
      %v1199 = vadd.f32 %v886, %v889
      %v1200 = vadd.f32 %v892, %v895
      %v1201 = vadd.f32 %v898, %v901
      %v1202 = vadd.f32 %v904, %v907
      %v1203 = vadd.f32 %v910, %v913
      %v1204 = vadd.f32 %v916, %v919
      %v1205 = vadd.f32 %v922, %v925
      %v1206 = vadd.f32 %v928, %v931
      %v1207 = vadd.f32 %v934, %v937
      %v1208 = vadd.f32 %v940, %v943
      %v1209 = vadd.f32 %v946, %v949
      %v1210 = vadd.f32 %v952, %v955
      %v1211 = vadd.f32 %v958, %v961
      %v1212 = vadd.f32 %v964, %v967
      %v1213 = vadd.f32 %v970, %v973
      %v1214 = vadd.f32 %v976, %v979
      %v1215 = vadd.f32 %v982, %v985
      %v1216 = vadd.f32 %v988, %v991
      %v1217 = vadd.f32 %v994, %v997
      %v1218 = vadd.f32 %v1000, %v1003
      %v1219 = vadd.f32 %v1006, %v1009
      %v1220 = vadd.f32 %v1012, %v1015
      %v1221 = vadd.f32 %v1018, %v1021
      %v1222 = vadd.f32 %v1024, %v1027
      %v1223 = vadd.f32 %v1030, %v1033
      %v1224 = vadd.f32 %v1036, %v1039
      %v1225 = vadd.f32 %v1042, %v1045
      %v1226 = vadd.f32 %v1048, %v1051
      %v1227 = vadd.f32 %v1054, %v1057
      %v1228 = vadd.f32 %v1060, %v1063
      %v1229 = vadd.f32 %v1066, %v1069
      %v1230 = vadd.f32 %v1072, %v1075
      %v1231 = vadd.f32 %v1078, %v1081
      %v1232 = vadd.f32 %v1084, %v1087
      %v1233 = vadd.f32 %v1090, %v1093
      %v1234 = vadd.f32 %v1096, %v1099
      %v1235 = vadd.f32 %v1102, %v1105
      %v1236 = vadd.f32 %v1108, %v1111
      %v1237 = vadd.f32 %v1114, %v1117
      %v1238 = vadd.f32 %v1120, %v1123
      %v1239 = vadd.f32 %v1126, %v1129
      %v1240 = vadd.f32 %v1132, %v1135
      %v1241 = vadd.f32 %v1138, %v1141
      %v1242 = vadd.f32 %v1144, %v1147
      %v1243 = vadd.f32 %v1150, %v1153
      %v1244 = vadd.f32 %v1156, %v1159
      %v1245 = vadd.f32 %v1162, %v1165
      %v1246 = vadd.f32 %v1168, %v1171
      %v1247 = vadd.f32 %v1174, %v1177
      %v1248 = vadd.f32 %v1180, %v1183
      %v1249 = vmul.f32 %v1185, 0.125
      %v1250 = vmul.f32 %v1186, 0.125
      %v1251 = vmul.f32 %v1187, 0.125
      %v1252 = vmul.f32 %v1188, 0.125
      %v1253 = vmul.f32 %v1189, 0.125
      %v1254 = vmul.f32 %v1190, 0.125
      %v1255 = vmul.f32 %v1191, 0.125
      %v1256 = vmul.f32 %v1192, 0.125
      %v1257 = vmul.f32 %v1193, 0.125
      %v1258 = vmul.f32 %v1194, 0.125
      %v1259 = vmul.f32 %v1195, 0.125
      %v1260 = vmul.f32 %v1196, 0.125
      %v1261 = vmul.f32 %v1197, 0.125
      %v1262 = vmul.f32 %v1198, 0.125
      %v1263 = vmul.f32 %v1199, 0.125
      %v1264 = vmul.f32 %v1200, 0.125
      %v1265 = vmul.f32 %v1201, 0.125
      %v1266 = vmul.f32 %v1202, 0.125
      %v1267 = vmul.f32 %v1203, 0.125
      %v1268 = vmul.f32 %v1204, 0.125
      %v1269 = vmul.f32 %v1205, 0.125
      %v1270 = vmul.f32 %v1206, 0.125
      %v1271 = vmul.f32 %v1207, 0.125
      %v1272 = vmul.f32 %v1208, 0.125
      %v1273 = vmul.f32 %v1209, 0.125
      %v1274 = vmul.f32 %v1210, 0.125
      %v1275 = vmul.f32 %v1211, 0.125
      %v1276 = vmul.f32 %v1212, 0.125
      %v1277 = vmul.f32 %v1213, 0.125
      %v1278 = vmul.f32 %v1214, 0.125
      %v1279 = vmul.f32 %v1215, 0.125
      %v1280 = vmul.f32 %v1216, 0.125
      %v1281 = vmul.f32 %v1217, 0.125
      %v1282 = vmul.f32 %v1218, 0.125
      %v1283 = vmul.f32 %v1219, 0.125
      %v1284 = vmul.f32 %v1220, 0.125
      %v1285 = vmul.f32 %v1221, 0.125
      %v1286 = vmul.f32 %v1222, 0.125
      %v1287 = vmul.f32 %v1223, 0.125
      %v1288 = vmul.f32 %v1224, 0.125
      %v1289 = vmul.f32 %v1225, 0.125
      %v1290 = vmul.f32 %v1226, 0.125
      %v1291 = vmul.f32 %v1227, 0.125
      %v1292 = vmul.f32 %v1228, 0.125
      %v1293 = vmul.f32 %v1229, 0.125
      %v1294 = vmul.f32 %v1230, 0.125
      %v1295 = vmul.f32 %v1231, 0.125
      %v1296 = vmul.f32 %v1232, 0.125
      %v1297 = vmul.f32 %v1233, 0.125
      %v1298 = vmul.f32 %v1234, 0.125
      %v1299 = vmul.f32 %v1235, 0.125
      %v1300 = vmul.f32 %v1236, 0.125
      %v1301 = vmul.f32 %v1237, 0.125
      %v1302 = vmul.f32 %v1238, 0.125
      %v1303 = vmul.f32 %v1239, 0.125
      %v1304 = vmul.f32 %v1240, 0.125
      %v1305 = vmul.f32 %v1241, 0.125
      %v1306 = vmul.f32 %v1242, 0.125
      %v1307 = vmul.f32 %v1243, 0.125
      %v1308 = vmul.f32 %v1244, 0.125
      %v1309 = vmul.f32 %v1245, 0.125
      %v1310 = vmul.f32 %v1246, 0.125
      %v1311 = vmul.f32 %v1247, 0.125
      %v1312 = vmul.f32 %v1248, 0.125
      %vm1313 = vcmask 130048
      %v1315 = vsel %vm1313, %v1249, 0
      %v1318 = vsel %vm1313, %v1250, 0
      %v1321 = vsel %vm1313, %v1251, 0
      %v1324 = vsel %vm1313, %v1252, 0
      %v1327 = vsel %vm1313, %v1253, 0
      %v1330 = vsel %vm1313, %v1254, 0
      %v1333 = vsel %vm1313, %v1255, 0
      %v1336 = vsel %vm1313, %v1256, 0
      %v1339 = vsel %vm1313, %v1257, 0
      %v1342 = vsel %vm1313, %v1258, 0
      %v1345 = vsel %vm1313, %v1259, 0
      %v1348 = vsel %vm1313, %v1260, 0
      %v1351 = vsel %vm1313, %v1261, 0
      %v1354 = vsel %vm1313, %v1262, 0
      %v1357 = vsel %vm1313, %v1263, 0
      %v1360 = vsel %vm1313, %v1264, 0
      %v1363 = vsel %vm1313, %v1265, 0
      %v1366 = vsel %vm1313, %v1266, 0
      %v1369 = vsel %vm1313, %v1267, 0
      %v1372 = vsel %vm1313, %v1268, 0
      %v1375 = vsel %vm1313, %v1269, 0
      %v1378 = vsel %vm1313, %v1270, 0
      %v1381 = vsel %vm1313, %v1271, 0
      %v1384 = vsel %vm1313, %v1272, 0
      %v1387 = vsel %vm1313, %v1273, 0
      %v1390 = vsel %vm1313, %v1274, 0
      %v1393 = vsel %vm1313, %v1275, 0
      %v1396 = vsel %vm1313, %v1276, 0
      %v1399 = vsel %vm1313, %v1277, 0
      %v1402 = vsel %vm1313, %v1278, 0
      %v1405 = vsel %vm1313, %v1279, 0
      %v1408 = vsel %vm1313, %v1280, 0
      %v1411 = vsel %vm1313, %v1281, 0
      %v1414 = vsel %vm1313, %v1282, 0
      %v1417 = vsel %vm1313, %v1283, 0
      %v1420 = vsel %vm1313, %v1284, 0
      %v1423 = vsel %vm1313, %v1285, 0
      %v1426 = vsel %vm1313, %v1286, 0
      %v1429 = vsel %vm1313, %v1287, 0
      %v1432 = vsel %vm1313, %v1288, 0
      %v1435 = vsel %vm1313, %v1289, 0
      %v1438 = vsel %vm1313, %v1290, 0
      %v1441 = vsel %vm1313, %v1291, 0
      %v1444 = vsel %vm1313, %v1292, 0
      %v1447 = vsel %vm1313, %v1293, 0
      %v1450 = vsel %vm1313, %v1294, 0
      %v1453 = vsel %vm1313, %v1295, 0
      %v1456 = vsel %vm1313, %v1296, 0
      %v1459 = vsel %vm1313, %v1297, 0
      %v1462 = vsel %vm1313, %v1298, 0
      %v1465 = vsel %vm1313, %v1299, 0
      %v1468 = vsel %vm1313, %v1300, 0
      %v1471 = vsel %vm1313, %v1301, 0
      %v1474 = vsel %vm1313, %v1302, 0
      %v1477 = vsel %vm1313, %v1303, 0
      %v1480 = vsel %vm1313, %v1304, 0
      %v1483 = vsel %vm1313, %v1305, 0
      %v1486 = vsel %vm1313, %v1306, 0
      %v1489 = vsel %vm1313, %v1307, 0
      %v1492 = vsel %vm1313, %v1308, 0
      %v1495 = vsel %vm1313, %v1309, 0
      %v1498 = vsel %vm1313, %v1310, 0
      %v1501 = vsel %vm1313, %v1311, 0
      %v1504 = vsel %vm1313, %v1312, 0
      %1506 = vmatpush.msra.mxu0 0.0
      %1507 = vmatpush.msra.mxu0 0.0
      %1508 = vmatpush.msra.mxu0 0.0
      %1509 = vmatpush.msra.mxu0 0.0
      %1510 = vmatpush.msra.mxu0 0.0
      %1511 = vmatpush.msra.mxu0 0.0
      %1512 = vmatpush.msra.mxu0 0.0
      %1513 = vmatpush.msra.mxu0 0.0
      %1514 = vmatpush.msra.mxu0 0.0
      %1515 = vmatpush.msra.mxu0 0.0
      %1516 = vmatpush.msra.mxu0 0.0
      %1517 = vmatpush.msra.mxu0 0.0
      %1518 = vmatpush.msra.mxu0 0.0
      %1519 = vmatpush.msra.mxu0 0.0
      %1520 = vmatpush.msra.mxu0 %v398
      %1521 = vmatpush.msra.mxu0 %v397
      %1522 = vmatmul.f32.gmra.mxu0 %v1315
      %v1523 = vpop.f32.mrf.mxu0
      %v1524 = vadd.f32 0.0, %v1523
      %1525 = vmatmul.f32.gmra.mxu0 %v1318
      %v1526 = vpop.f32.mrf.mxu0
      %v1527 = vadd.f32 0.0, %v1526
      %1528 = vmatmul.f32.gmra.mxu0 %v1321
      %v1529 = vpop.f32.mrf.mxu0
      %v1530 = vadd.f32 0.0, %v1529
      %1531 = vmatmul.f32.gmra.mxu0 %v1324
      %v1532 = vpop.f32.mrf.mxu0
      %v1533 = vadd.f32 0.0, %v1532
      %1534 = vmatmul.f32.gmra.mxu0 %v1327
      %v1535 = vpop.f32.mrf.mxu0
      %v1536 = vadd.f32 0.0, %v1535
      %1537 = vmatmul.f32.gmra.mxu0 %v1330
      %v1538 = vpop.f32.mrf.mxu0
      %v1539 = vadd.f32 0.0, %v1538
      %1540 = vmatmul.f32.gmra.mxu0 %v1333
      %v1541 = vpop.f32.mrf.mxu0
      %v1542 = vadd.f32 0.0, %v1541
      %1543 = vmatmul.f32.gmra.mxu0 %v1336
      %v1544 = vpop.f32.mrf.mxu0
      %v1545 = vadd.f32 0.0, %v1544
      %1546 = vmatmul.f32.gmra.mxu0 %v1339
      %v1547 = vpop.f32.mrf.mxu0
      %v1548 = vadd.f32 0.0, %v1547
      %1549 = vmatmul.f32.gmra.mxu0 %v1342
      %v1550 = vpop.f32.mrf.mxu0
      %v1551 = vadd.f32 0.0, %v1550
      %1552 = vmatmul.f32.gmra.mxu0 %v1345
      %v1553 = vpop.f32.mrf.mxu0
      %v1554 = vadd.f32 0.0, %v1553
      %1555 = vmatmul.f32.gmra.mxu0 %v1348
      %v1556 = vpop.f32.mrf.mxu0
      %v1557 = vadd.f32 0.0, %v1556
      %1558 = vmatmul.f32.gmra.mxu0 %v1351
      %v1559 = vpop.f32.mrf.mxu0
      %v1560 = vadd.f32 0.0, %v1559
      %1561 = vmatmul.f32.gmra.mxu0 %v1354
      %v1562 = vpop.f32.mrf.mxu0
      %v1563 = vadd.f32 0.0, %v1562
      %1564 = vmatmul.f32.gmra.mxu0 %v1357
      %v1565 = vpop.f32.mrf.mxu0
      %v1566 = vadd.f32 0.0, %v1565
      %1567 = vmatmul.f32.gmra.mxu0 %v1360
      %v1568 = vpop.f32.mrf.mxu0
      %v1569 = vadd.f32 0.0, %v1568
      %1570 = vmatmul.f32.gmra.mxu0 %v1363
      %v1571 = vpop.f32.mrf.mxu0
      %v1572 = vadd.f32 0.0, %v1571
      %1573 = vmatmul.f32.gmra.mxu0 %v1366
      %v1574 = vpop.f32.mrf.mxu0
      %v1575 = vadd.f32 0.0, %v1574
      %1576 = vmatmul.f32.gmra.mxu0 %v1369
      %v1577 = vpop.f32.mrf.mxu0
      %v1578 = vadd.f32 0.0, %v1577
      %1579 = vmatmul.f32.gmra.mxu0 %v1372
      %v1580 = vpop.f32.mrf.mxu0
      %v1581 = vadd.f32 0.0, %v1580
      %1582 = vmatmul.f32.gmra.mxu0 %v1375
      %v1583 = vpop.f32.mrf.mxu0
      %v1584 = vadd.f32 0.0, %v1583
      %1585 = vmatmul.f32.gmra.mxu0 %v1378
      %v1586 = vpop.f32.mrf.mxu0
      %v1587 = vadd.f32 0.0, %v1586
      %1588 = vmatmul.f32.gmra.mxu0 %v1381
      %v1589 = vpop.f32.mrf.mxu0
      %v1590 = vadd.f32 0.0, %v1589
      %1591 = vmatmul.f32.gmra.mxu0 %v1384
      %v1592 = vpop.f32.mrf.mxu0
      %v1593 = vadd.f32 0.0, %v1592
      %1594 = vmatmul.f32.gmra.mxu0 %v1387
      %v1595 = vpop.f32.mrf.mxu0
      %v1596 = vadd.f32 0.0, %v1595
      %1597 = vmatmul.f32.gmra.mxu0 %v1390
      %v1598 = vpop.f32.mrf.mxu0
      %v1599 = vadd.f32 0.0, %v1598
      %1600 = vmatmul.f32.gmra.mxu0 %v1393
      %v1601 = vpop.f32.mrf.mxu0
      %v1602 = vadd.f32 0.0, %v1601
      %1603 = vmatmul.f32.gmra.mxu0 %v1396
      %v1604 = vpop.f32.mrf.mxu0
      %v1605 = vadd.f32 0.0, %v1604
      %1606 = vmatmul.f32.gmra.mxu0 %v1399
      %v1607 = vpop.f32.mrf.mxu0
      %v1608 = vadd.f32 0.0, %v1607
      %1609 = vmatmul.f32.gmra.mxu0 %v1402
      %v1610 = vpop.f32.mrf.mxu0
      %v1611 = vadd.f32 0.0, %v1610
      %1612 = vmatmul.f32.gmra.mxu0 %v1405
      %v1613 = vpop.f32.mrf.mxu0
      %v1614 = vadd.f32 0.0, %v1613
      %1615 = vmatmul.f32.gmra.mxu0 %v1408
      %v1616 = vpop.f32.mrf.mxu0
      %v1617 = vadd.f32 0.0, %v1616
      %1618 = vmatmul.f32.gmra.mxu0 %v1411
      %v1619 = vpop.f32.mrf.mxu0
      %v1620 = vadd.f32 0.0, %v1619
      %1621 = vmatmul.f32.gmra.mxu0 %v1414
      %v1622 = vpop.f32.mrf.mxu0
      %v1623 = vadd.f32 0.0, %v1622
      %1624 = vmatmul.f32.gmra.mxu0 %v1417
      %v1625 = vpop.f32.mrf.mxu0
      %v1626 = vadd.f32 0.0, %v1625
      %1627 = vmatmul.f32.gmra.mxu0 %v1420
      %v1628 = vpop.f32.mrf.mxu0
      %v1629 = vadd.f32 0.0, %v1628
      %1630 = vmatmul.f32.gmra.mxu0 %v1423
      %v1631 = vpop.f32.mrf.mxu0
      %v1632 = vadd.f32 0.0, %v1631
      %1633 = vmatmul.f32.gmra.mxu0 %v1426
      %v1634 = vpop.f32.mrf.mxu0
      %v1635 = vadd.f32 0.0, %v1634
      %1636 = vmatmul.f32.gmra.mxu0 %v1429
      %v1637 = vpop.f32.mrf.mxu0
      %v1638 = vadd.f32 0.0, %v1637
      %1639 = vmatmul.f32.gmra.mxu0 %v1432
      %v1640 = vpop.f32.mrf.mxu0
      %v1641 = vadd.f32 0.0, %v1640
      %1642 = vmatmul.f32.gmra.mxu0 %v1435
      %v1643 = vpop.f32.mrf.mxu0
      %v1644 = vadd.f32 0.0, %v1643
      %1645 = vmatmul.f32.gmra.mxu0 %v1438
      %v1646 = vpop.f32.mrf.mxu0
      %v1647 = vadd.f32 0.0, %v1646
      %1648 = vmatmul.f32.gmra.mxu0 %v1441
      %v1649 = vpop.f32.mrf.mxu0
      %v1650 = vadd.f32 0.0, %v1649
      %1651 = vmatmul.f32.gmra.mxu0 %v1444
      %v1652 = vpop.f32.mrf.mxu0
      %v1653 = vadd.f32 0.0, %v1652
      %1654 = vmatmul.f32.gmra.mxu0 %v1447
      %v1655 = vpop.f32.mrf.mxu0
      %v1656 = vadd.f32 0.0, %v1655
      %1657 = vmatmul.f32.gmra.mxu0 %v1450
      %v1658 = vpop.f32.mrf.mxu0
      %v1659 = vadd.f32 0.0, %v1658
      %1660 = vmatmul.f32.gmra.mxu0 %v1453
      %v1661 = vpop.f32.mrf.mxu0
      %v1662 = vadd.f32 0.0, %v1661
      %1663 = vmatmul.f32.gmra.mxu0 %v1456
      %v1664 = vpop.f32.mrf.mxu0
      %v1665 = vadd.f32 0.0, %v1664
      %1666 = vmatmul.f32.gmra.mxu0 %v1459
      %v1667 = vpop.f32.mrf.mxu0
      %v1668 = vadd.f32 0.0, %v1667
      %1669 = vmatmul.f32.gmra.mxu0 %v1462
      %v1670 = vpop.f32.mrf.mxu0
      %v1671 = vadd.f32 0.0, %v1670
      %1672 = vmatmul.f32.gmra.mxu0 %v1465
      %v1673 = vpop.f32.mrf.mxu0
      %v1674 = vadd.f32 0.0, %v1673
      %1675 = vmatmul.f32.gmra.mxu0 %v1468
      %v1676 = vpop.f32.mrf.mxu0
      %v1677 = vadd.f32 0.0, %v1676
      %1678 = vmatmul.f32.gmra.mxu0 %v1471
      %v1679 = vpop.f32.mrf.mxu0
      %v1680 = vadd.f32 0.0, %v1679
      %1681 = vmatmul.f32.gmra.mxu0 %v1474
      %v1682 = vpop.f32.mrf.mxu0
      %v1683 = vadd.f32 0.0, %v1682
      %1684 = vmatmul.f32.gmra.mxu0 %v1477
      %v1685 = vpop.f32.mrf.mxu0
      %v1686 = vadd.f32 0.0, %v1685
      %1687 = vmatmul.f32.gmra.mxu0 %v1480
      %v1688 = vpop.f32.mrf.mxu0
      %v1689 = vadd.f32 0.0, %v1688
      %1690 = vmatmul.f32.gmra.mxu0 %v1483
      %v1691 = vpop.f32.mrf.mxu0
      %v1692 = vadd.f32 0.0, %v1691
      %1693 = vmatmul.f32.gmra.mxu0 %v1486
      %v1694 = vpop.f32.mrf.mxu0
      %v1695 = vadd.f32 0.0, %v1694
      %1696 = vmatmul.f32.gmra.mxu0 %v1489
      %v1697 = vpop.f32.mrf.mxu0
      %v1698 = vadd.f32 0.0, %v1697
      %1699 = vmatmul.f32.gmra.mxu0 %v1492
      %v1700 = vpop.f32.mrf.mxu0
      %v1701 = vadd.f32 0.0, %v1700
      %1702 = vmatmul.f32.gmra.mxu0 %v1495
      %v1703 = vpop.f32.mrf.mxu0
      %v1704 = vadd.f32 0.0, %v1703
      %1705 = vmatmul.f32.gmra.mxu0 %v1498
      %v1706 = vpop.f32.mrf.mxu0
      %v1707 = vadd.f32 0.0, %v1706
      %1708 = vmatmul.f32.gmra.mxu0 %v1501
      %v1709 = vpop.f32.mrf.mxu0
      %v1710 = vadd.f32 0.0, %v1709
      %1711 = vmatmul.f32.gmra.mxu0 %v1504
      %v1712 = vpop.f32.mrf.mxu0
      %v1713 = vadd.f32 0.0, %v1712
      %1714 = vdwg.mxu0
      %v1715 = vsub.f32 %v261, %v1524
      %v1716 = vsub.f32 %v262, %v1524
      %v1717 = vsub.f32 %v263, %v1527
      %v1718 = vsub.f32 %v264, %v1527
      %v1719 = vsub.f32 %v265, %v1530
      %v1720 = vsub.f32 %v266, %v1530
      %v1721 = vsub.f32 %v267, %v1533
      %v1722 = vsub.f32 %v268, %v1533
      %v1723 = vsub.f32 %v269, %v1536
      %v1724 = vsub.f32 %v270, %v1536
      %v1725 = vsub.f32 %v271, %v1539
      %v1726 = vsub.f32 %v272, %v1539
      %v1727 = vsub.f32 %v273, %v1542
      %v1728 = vsub.f32 %v274, %v1542
      %v1729 = vsub.f32 %v275, %v1545
      %v1730 = vsub.f32 %v276, %v1545
      %v1731 = vsub.f32 %v277, %v1548
      %v1732 = vsub.f32 %v278, %v1548
      %v1733 = vsub.f32 %v279, %v1551
      %v1734 = vsub.f32 %v280, %v1551
      %v1735 = vsub.f32 %v281, %v1554
      %v1736 = vsub.f32 %v282, %v1554
      %v1737 = vsub.f32 %v283, %v1557
      %v1738 = vsub.f32 %v284, %v1557
      %v1739 = vsub.f32 %v285, %v1560
      %v1740 = vsub.f32 %v286, %v1560
      %v1741 = vsub.f32 %v287, %v1563
      %v1742 = vsub.f32 %v288, %v1563
      %v1743 = vsub.f32 %v289, %v1566
      %v1744 = vsub.f32 %v290, %v1566
      %v1745 = vsub.f32 %v291, %v1569
      %v1746 = vsub.f32 %v292, %v1569
      %v1747 = vsub.f32 %v293, %v1572
      %v1748 = vsub.f32 %v294, %v1572
      %v1749 = vsub.f32 %v295, %v1575
      %v1750 = vsub.f32 %v296, %v1575
      %v1751 = vsub.f32 %v297, %v1578
      %v1752 = vsub.f32 %v298, %v1578
      %v1753 = vsub.f32 %v299, %v1581
      %v1754 = vsub.f32 %v300, %v1581
      %v1755 = vsub.f32 %v301, %v1584
      %v1756 = vsub.f32 %v302, %v1584
      %v1757 = vsub.f32 %v303, %v1587
      %v1758 = vsub.f32 %v304, %v1587
      %v1759 = vsub.f32 %v305, %v1590
      %v1760 = vsub.f32 %v306, %v1590
      %v1761 = vsub.f32 %v307, %v1593
      %v1762 = vsub.f32 %v308, %v1593
      %v1763 = vsub.f32 %v309, %v1596
      %v1764 = vsub.f32 %v310, %v1596
      %v1765 = vsub.f32 %v311, %v1599
      %v1766 = vsub.f32 %v312, %v1599
      %v1767 = vsub.f32 %v313, %v1602
      %v1768 = vsub.f32 %v314, %v1602
      %v1769 = vsub.f32 %v315, %v1605
      %v1770 = vsub.f32 %v316, %v1605
      %v1771 = vsub.f32 %v317, %v1608
      %v1772 = vsub.f32 %v318, %v1608
      %v1773 = vsub.f32 %v319, %v1611
      %v1774 = vsub.f32 %v320, %v1611
      %v1775 = vsub.f32 %v321, %v1614
      %v1776 = vsub.f32 %v322, %v1614
      %v1777 = vsub.f32 %v323, %v1617
      %v1778 = vsub.f32 %v324, %v1617
      %v1779 = vsub.f32 %v325, %v1620
      %v1780 = vsub.f32 %v326, %v1620
      %v1781 = vsub.f32 %v327, %v1623
      %v1782 = vsub.f32 %v328, %v1623
      %v1783 = vsub.f32 %v329, %v1626
      %v1784 = vsub.f32 %v330, %v1626
      %v1785 = vsub.f32 %v331, %v1629
      %v1786 = vsub.f32 %v332, %v1629
      %v1787 = vsub.f32 %v333, %v1632
      %v1788 = vsub.f32 %v334, %v1632
      %v1789 = vsub.f32 %v335, %v1635
      %v1790 = vsub.f32 %v336, %v1635
      %v1791 = vsub.f32 %v337, %v1638
      %v1792 = vsub.f32 %v338, %v1638
      %v1793 = vsub.f32 %v339, %v1641
      %v1794 = vsub.f32 %v340, %v1641
      %v1795 = vsub.f32 %v341, %v1644
      %v1796 = vsub.f32 %v342, %v1644
      %v1797 = vsub.f32 %v343, %v1647
      %v1798 = vsub.f32 %v344, %v1647
      %v1799 = vsub.f32 %v345, %v1650
      %v1800 = vsub.f32 %v346, %v1650
      %v1801 = vsub.f32 %v347, %v1653
      %v1802 = vsub.f32 %v348, %v1653
      %v1803 = vsub.f32 %v349, %v1656
      %v1804 = vsub.f32 %v350, %v1656
      %v1805 = vsub.f32 %v351, %v1659
      %v1806 = vsub.f32 %v352, %v1659
      %v1807 = vsub.f32 %v353, %v1662
      %v1808 = vsub.f32 %v354, %v1662
      %v1809 = vsub.f32 %v355, %v1665
      %v1810 = vsub.f32 %v356, %v1665
      %v1811 = vsub.f32 %v357, %v1668
      %v1812 = vsub.f32 %v358, %v1668
      %v1813 = vsub.f32 %v359, %v1671
      %v1814 = vsub.f32 %v360, %v1671
      %v1815 = vsub.f32 %v361, %v1674
      %v1816 = vsub.f32 %v362, %v1674
      %v1817 = vsub.f32 %v363, %v1677
      %v1818 = vsub.f32 %v364, %v1677
      %v1819 = vsub.f32 %v365, %v1680
      %v1820 = vsub.f32 %v366, %v1680
      %v1821 = vsub.f32 %v367, %v1683
      %v1822 = vsub.f32 %v368, %v1683
      %v1823 = vsub.f32 %v369, %v1686
      %v1824 = vsub.f32 %v370, %v1686
      %v1825 = vsub.f32 %v371, %v1689
      %v1826 = vsub.f32 %v372, %v1689
      %v1827 = vsub.f32 %v373, %v1692
      %v1828 = vsub.f32 %v374, %v1692
      %v1829 = vsub.f32 %v375, %v1695
      %v1830 = vsub.f32 %v376, %v1695
      %v1831 = vsub.f32 %v377, %v1698
      %v1832 = vsub.f32 %v378, %v1698
      %v1833 = vsub.f32 %v379, %v1701
      %v1834 = vsub.f32 %v380, %v1701
      %v1835 = vsub.f32 %v381, %v1704
      %v1836 = vsub.f32 %v382, %v1704
      %v1837 = vsub.f32 %v383, %v1707
      %v1838 = vsub.f32 %v384, %v1707
      %v1839 = vsub.f32 %v385, %v1710
      %v1840 = vsub.f32 %v386, %v1710
      %v1841 = vsub.f32 %v387, %v1713
      %v1842 = vsub.f32 %v388, %v1713
      %v1843 = vmul.f32 %v1715, %v1715
      %v1844 = vmul.f32 %v1716, %v1716
      %v1845 = vmul.f32 %v1717, %v1717
      %v1846 = vmul.f32 %v1718, %v1718
      %v1847 = vmul.f32 %v1719, %v1719
      %v1848 = vmul.f32 %v1720, %v1720
      %v1849 = vmul.f32 %v1721, %v1721
      %v1850 = vmul.f32 %v1722, %v1722
      %v1851 = vmul.f32 %v1723, %v1723
      %v1852 = vmul.f32 %v1724, %v1724
      %v1853 = vmul.f32 %v1725, %v1725
      %v1854 = vmul.f32 %v1726, %v1726
      %v1855 = vmul.f32 %v1727, %v1727
      %v1856 = vmul.f32 %v1728, %v1728
      %v1857 = vmul.f32 %v1729, %v1729
      %v1858 = vmul.f32 %v1730, %v1730
      %v1859 = vmul.f32 %v1731, %v1731
      %v1860 = vmul.f32 %v1732, %v1732
      %v1861 = vmul.f32 %v1733, %v1733
      %v1862 = vmul.f32 %v1734, %v1734
      %v1863 = vmul.f32 %v1735, %v1735
      %v1864 = vmul.f32 %v1736, %v1736
      %v1865 = vmul.f32 %v1737, %v1737
      %v1866 = vmul.f32 %v1738, %v1738
      %v1867 = vmul.f32 %v1739, %v1739
      %v1868 = vmul.f32 %v1740, %v1740
      %v1869 = vmul.f32 %v1741, %v1741
      %v1870 = vmul.f32 %v1742, %v1742
      %v1871 = vmul.f32 %v1743, %v1743
      %v1872 = vmul.f32 %v1744, %v1744
      %v1873 = vmul.f32 %v1745, %v1745
      %v1874 = vmul.f32 %v1746, %v1746
      %v1875 = vmul.f32 %v1747, %v1747
      %v1876 = vmul.f32 %v1748, %v1748
      %v1877 = vmul.f32 %v1749, %v1749
      %v1878 = vmul.f32 %v1750, %v1750
      %v1879 = vmul.f32 %v1751, %v1751
      %v1880 = vmul.f32 %v1752, %v1752
      %v1881 = vmul.f32 %v1753, %v1753
      %v1882 = vmul.f32 %v1754, %v1754
      %v1883 = vmul.f32 %v1755, %v1755
      %v1884 = vmul.f32 %v1756, %v1756
      %v1885 = vmul.f32 %v1757, %v1757
      %v1886 = vmul.f32 %v1758, %v1758
      %v1887 = vmul.f32 %v1759, %v1759
      %v1888 = vmul.f32 %v1760, %v1760
      %v1889 = vmul.f32 %v1761, %v1761
      %v1890 = vmul.f32 %v1762, %v1762
      %v1891 = vmul.f32 %v1763, %v1763
      %v1892 = vmul.f32 %v1764, %v1764
      %v1893 = vmul.f32 %v1765, %v1765
      %v1894 = vmul.f32 %v1766, %v1766
      %v1895 = vmul.f32 %v1767, %v1767
      %v1896 = vmul.f32 %v1768, %v1768
      %v1897 = vmul.f32 %v1769, %v1769
      %v1898 = vmul.f32 %v1770, %v1770
      %v1899 = vmul.f32 %v1771, %v1771
      %v1900 = vmul.f32 %v1772, %v1772
      %v1901 = vmul.f32 %v1773, %v1773
      %v1902 = vmul.f32 %v1774, %v1774
      %v1903 = vmul.f32 %v1775, %v1775
      %v1904 = vmul.f32 %v1776, %v1776
      %v1905 = vmul.f32 %v1777, %v1777
      %v1906 = vmul.f32 %v1778, %v1778
      %v1907 = vmul.f32 %v1779, %v1779
      %v1908 = vmul.f32 %v1780, %v1780
      %v1909 = vmul.f32 %v1781, %v1781
      %v1910 = vmul.f32 %v1782, %v1782
      %v1911 = vmul.f32 %v1783, %v1783
      %v1912 = vmul.f32 %v1784, %v1784
      %v1913 = vmul.f32 %v1785, %v1785
      %v1914 = vmul.f32 %v1786, %v1786
      %v1915 = vmul.f32 %v1787, %v1787
      %v1916 = vmul.f32 %v1788, %v1788
      %v1917 = vmul.f32 %v1789, %v1789
      %v1918 = vmul.f32 %v1790, %v1790
      %v1919 = vmul.f32 %v1791, %v1791
      %v1920 = vmul.f32 %v1792, %v1792
      %v1921 = vmul.f32 %v1793, %v1793
      %v1922 = vmul.f32 %v1794, %v1794
      %v1923 = vmul.f32 %v1795, %v1795
      %v1924 = vmul.f32 %v1796, %v1796
      %v1925 = vmul.f32 %v1797, %v1797
      %v1926 = vmul.f32 %v1798, %v1798
      %v1927 = vmul.f32 %v1799, %v1799
      %v1928 = vmul.f32 %v1800, %v1800
      %v1929 = vmul.f32 %v1801, %v1801
      %v1930 = vmul.f32 %v1802, %v1802
      %v1931 = vmul.f32 %v1803, %v1803
      %v1932 = vmul.f32 %v1804, %v1804
      %v1933 = vmul.f32 %v1805, %v1805
      %v1934 = vmul.f32 %v1806, %v1806
      %v1935 = vmul.f32 %v1807, %v1807
      %v1936 = vmul.f32 %v1808, %v1808
      %v1937 = vmul.f32 %v1809, %v1809
      %v1938 = vmul.f32 %v1810, %v1810
      %v1939 = vmul.f32 %v1811, %v1811
      %v1940 = vmul.f32 %v1812, %v1812
      %v1941 = vmul.f32 %v1813, %v1813
      %v1942 = vmul.f32 %v1814, %v1814
      %v1943 = vmul.f32 %v1815, %v1815
      %v1944 = vmul.f32 %v1816, %v1816
      %v1945 = vmul.f32 %v1817, %v1817
      %v1946 = vmul.f32 %v1818, %v1818
      %v1947 = vmul.f32 %v1819, %v1819
      %v1948 = vmul.f32 %v1820, %v1820
      %v1949 = vmul.f32 %v1821, %v1821
      %v1950 = vmul.f32 %v1822, %v1822
      %v1951 = vmul.f32 %v1823, %v1823
      %v1952 = vmul.f32 %v1824, %v1824
      %v1953 = vmul.f32 %v1825, %v1825
      %v1954 = vmul.f32 %v1826, %v1826
      %v1955 = vmul.f32 %v1827, %v1827
      %v1956 = vmul.f32 %v1828, %v1828
      %v1957 = vmul.f32 %v1829, %v1829
      %v1958 = vmul.f32 %v1830, %v1830
      %v1959 = vmul.f32 %v1831, %v1831
      %v1960 = vmul.f32 %v1832, %v1832
      %v1961 = vmul.f32 %v1833, %v1833
      %v1962 = vmul.f32 %v1834, %v1834
      %v1963 = vmul.f32 %v1835, %v1835
      %v1964 = vmul.f32 %v1836, %v1836
      %v1965 = vmul.f32 %v1837, %v1837
      %v1966 = vmul.f32 %v1838, %v1838
      %v1967 = vmul.f32 %v1839, %v1839
      %v1968 = vmul.f32 %v1840, %v1840
      %v1969 = vmul.f32 %v1841, %v1841
      %v1970 = vmul.f32 %v1842, %v1842
      %v1972 = vsel %vm399, %v1843, 0
      %v1975 = vsel %vm399, %v1844, 0
      %v1978 = vsel %vm399, %v1845, 0
      %v1981 = vsel %vm399, %v1846, 0
      %v1984 = vsel %vm399, %v1847, 0
      %v1987 = vsel %vm399, %v1848, 0
      %v1990 = vsel %vm399, %v1849, 0
      %v1993 = vsel %vm399, %v1850, 0
      %v1996 = vsel %vm399, %v1851, 0
      %v1999 = vsel %vm399, %v1852, 0
      %v2002 = vsel %vm399, %v1853, 0
      %v2005 = vsel %vm399, %v1854, 0
      %v2008 = vsel %vm399, %v1855, 0
      %v2011 = vsel %vm399, %v1856, 0
      %v2014 = vsel %vm399, %v1857, 0
      %v2017 = vsel %vm399, %v1858, 0
      %v2020 = vsel %vm399, %v1859, 0
      %v2023 = vsel %vm399, %v1860, 0
      %v2026 = vsel %vm399, %v1861, 0
      %v2029 = vsel %vm399, %v1862, 0
      %v2032 = vsel %vm399, %v1863, 0
      %v2035 = vsel %vm399, %v1864, 0
      %v2038 = vsel %vm399, %v1865, 0
      %v2041 = vsel %vm399, %v1866, 0
      %v2044 = vsel %vm399, %v1867, 0
      %v2047 = vsel %vm399, %v1868, 0
      %v2050 = vsel %vm399, %v1869, 0
      %v2053 = vsel %vm399, %v1870, 0
      %v2056 = vsel %vm399, %v1871, 0
      %v2059 = vsel %vm399, %v1872, 0
      %v2062 = vsel %vm399, %v1873, 0
      %v2065 = vsel %vm399, %v1874, 0
      %v2068 = vsel %vm399, %v1875, 0
      %v2071 = vsel %vm399, %v1876, 0
      %v2074 = vsel %vm399, %v1877, 0
      %v2077 = vsel %vm399, %v1878, 0
      %v2080 = vsel %vm399, %v1879, 0
      %v2083 = vsel %vm399, %v1880, 0
      %v2086 = vsel %vm399, %v1881, 0
      %v2089 = vsel %vm399, %v1882, 0
      %v2092 = vsel %vm399, %v1883, 0
      %v2095 = vsel %vm399, %v1884, 0
      %v2098 = vsel %vm399, %v1885, 0
      %v2101 = vsel %vm399, %v1886, 0
      %v2104 = vsel %vm399, %v1887, 0
      %v2107 = vsel %vm399, %v1888, 0
      %v2110 = vsel %vm399, %v1889, 0
      %v2113 = vsel %vm399, %v1890, 0
      %v2116 = vsel %vm399, %v1891, 0
      %v2119 = vsel %vm399, %v1892, 0
      %v2122 = vsel %vm399, %v1893, 0
      %v2125 = vsel %vm399, %v1894, 0
      %v2128 = vsel %vm399, %v1895, 0
      %v2131 = vsel %vm399, %v1896, 0
      %v2134 = vsel %vm399, %v1897, 0
      %v2137 = vsel %vm399, %v1898, 0
      %v2140 = vsel %vm399, %v1899, 0
      %v2143 = vsel %vm399, %v1900, 0
      %v2146 = vsel %vm399, %v1901, 0
      %v2149 = vsel %vm399, %v1902, 0
      %v2152 = vsel %vm399, %v1903, 0
      %v2155 = vsel %vm399, %v1904, 0
      %v2158 = vsel %vm399, %v1905, 0
      %v2161 = vsel %vm399, %v1906, 0
      %v2164 = vsel %vm399, %v1907, 0
      %v2167 = vsel %vm399, %v1908, 0
      %v2170 = vsel %vm399, %v1909, 0
      %v2173 = vsel %vm399, %v1910, 0
      %v2176 = vsel %vm399, %v1911, 0
      %v2179 = vsel %vm399, %v1912, 0
      %v2182 = vsel %vm399, %v1913, 0
      %v2185 = vsel %vm399, %v1914, 0
      %v2188 = vsel %vm399, %v1915, 0
      %v2191 = vsel %vm399, %v1916, 0
      %v2194 = vsel %vm399, %v1917, 0
      %v2197 = vsel %vm399, %v1918, 0
      %v2200 = vsel %vm399, %v1919, 0
      %v2203 = vsel %vm399, %v1920, 0
      %v2206 = vsel %vm399, %v1921, 0
      %v2209 = vsel %vm399, %v1922, 0
      %v2212 = vsel %vm399, %v1923, 0
      %v2215 = vsel %vm399, %v1924, 0
      %v2218 = vsel %vm399, %v1925, 0
      %v2221 = vsel %vm399, %v1926, 0
      %v2224 = vsel %vm399, %v1927, 0
      %v2227 = vsel %vm399, %v1928, 0
      %v2230 = vsel %vm399, %v1929, 0
      %v2233 = vsel %vm399, %v1930, 0
      %v2236 = vsel %vm399, %v1931, 0
      %v2239 = vsel %vm399, %v1932, 0
      %v2242 = vsel %vm399, %v1933, 0
      %v2245 = vsel %vm399, %v1934, 0
      %v2248 = vsel %vm399, %v1935, 0
      %v2251 = vsel %vm399, %v1936, 0
      %v2254 = vsel %vm399, %v1937, 0
      %v2257 = vsel %vm399, %v1938, 0
      %v2260 = vsel %vm399, %v1939, 0
      %v2263 = vsel %vm399, %v1940, 0
      %v2266 = vsel %vm399, %v1941, 0
      %v2269 = vsel %vm399, %v1942, 0
      %v2272 = vsel %vm399, %v1943, 0
      %v2275 = vsel %vm399, %v1944, 0
      %v2278 = vsel %vm399, %v1945, 0
      %v2281 = vsel %vm399, %v1946, 0
      %v2284 = vsel %vm399, %v1947, 0
      %v2287 = vsel %vm399, %v1948, 0
      %v2290 = vsel %vm399, %v1949, 0
      %v2293 = vsel %vm399, %v1950, 0
      %v2296 = vsel %vm399, %v1951, 0
      %v2299 = vsel %vm399, %v1952, 0
      %v2302 = vsel %vm399, %v1953, 0
      %v2305 = vsel %vm399, %v1954, 0
      %v2308 = vsel %vm399, %v1955, 0
      %v2311 = vsel %vm399, %v1956, 0
      %v2314 = vsel %vm399, %v1957, 0
      %v2317 = vsel %vm399, %v1958, 0
      %v2320 = vsel %vm399, %v1959, 0
      %v2323 = vsel %vm399, %v1960, 0
      %v2326 = vsel %vm399, %v1961, 0
      %v2329 = vsel %vm399, %v1962, 0
      %v2332 = vsel %vm399, %v1963, 0
      %v2335 = vsel %vm399, %v1964, 0
      %v2338 = vsel %vm399, %v1965, 0
      %v2341 = vsel %vm399, %v1966, 0
      %v2344 = vsel %vm399, %v1967, 0
      %v2347 = vsel %vm399, %v1968, 0
      %v2350 = vsel %vm399, %v1969, 0
      %v2353 = vsel %vm399, %v1970, 0
      %2355 = vmatpush.msra.mxu0 0.0
      %2356 = vmatpush.msra.mxu0 0.0
      %2357 = vmatpush.msra.mxu0 0.0
      %2358 = vmatpush.msra.mxu0 0.0
      %2359 = vmatpush.msra.mxu0 0.0
      %2360 = vmatpush.msra.mxu0 0.0
      %2361 = vmatpush.msra.mxu0 0.0
      %2362 = vmatpush.msra.mxu0 0.0
      %2363 = vmatpush.msra.mxu0 %v396
      %2364 = vmatpush.msra.mxu0 %v395
      %2365 = vmatpush.msra.mxu0 %v394
      %2366 = vmatpush.msra.mxu0 %v393
      %2367 = vmatpush.msra.mxu0 %v392
      %2368 = vmatpush.msra.mxu0 %v391
      %2369 = vmatpush.msra.mxu0 %v390
      %2370 = vmatpush.msra.mxu0 %v389
      %2371 = vmatmul.f32.gmra.mxu0 %v1972
      %v2372 = vpop.f32.mrf.mxu0
      %v2373 = vadd.f32 0.0, %v2372
      %2374 = vmatmul.f32.gmra.mxu0 %v1975
      %v2375 = vpop.f32.mrf.mxu0
      %v2376 = vadd.f32 0.0, %v2375
      %2377 = vmatmul.f32.gmra.mxu0 %v1978
      %v2378 = vpop.f32.mrf.mxu0
      %v2379 = vadd.f32 0.0, %v2378
      %2380 = vmatmul.f32.gmra.mxu0 %v1981
      %v2381 = vpop.f32.mrf.mxu0
      %v2382 = vadd.f32 0.0, %v2381
      %2383 = vmatmul.f32.gmra.mxu0 %v1984
      %v2384 = vpop.f32.mrf.mxu0
      %v2385 = vadd.f32 0.0, %v2384
      %2386 = vmatmul.f32.gmra.mxu0 %v1987
      %v2387 = vpop.f32.mrf.mxu0
      %v2388 = vadd.f32 0.0, %v2387
      %2389 = vmatmul.f32.gmra.mxu0 %v1990
      %v2390 = vpop.f32.mrf.mxu0
      %v2391 = vadd.f32 0.0, %v2390
      %2392 = vmatmul.f32.gmra.mxu0 %v1993
      %v2393 = vpop.f32.mrf.mxu0
      %v2394 = vadd.f32 0.0, %v2393
      %2395 = vmatmul.f32.gmra.mxu0 %v1996
      %v2396 = vpop.f32.mrf.mxu0
      %v2397 = vadd.f32 0.0, %v2396
      %2398 = vmatmul.f32.gmra.mxu0 %v1999
      %v2399 = vpop.f32.mrf.mxu0
      %v2400 = vadd.f32 0.0, %v2399
      %2401 = vmatmul.f32.gmra.mxu0 %v2002
      %v2402 = vpop.f32.mrf.mxu0
      %v2403 = vadd.f32 0.0, %v2402
      %2404 = vmatmul.f32.gmra.mxu0 %v2005
      %v2405 = vpop.f32.mrf.mxu0
      %v2406 = vadd.f32 0.0, %v2405
      %2407 = vmatmul.f32.gmra.mxu0 %v2008
      %v2408 = vpop.f32.mrf.mxu0
      %v2409 = vadd.f32 0.0, %v2408
      %2410 = vmatmul.f32.gmra.mxu0 %v2011
      %v2411 = vpop.f32.mrf.mxu0
      %v2412 = vadd.f32 0.0, %v2411
      %2413 = vmatmul.f32.gmra.mxu0 %v2014
      %v2414 = vpop.f32.mrf.mxu0
      %v2415 = vadd.f32 0.0, %v2414
      %2416 = vmatmul.f32.gmra.mxu0 %v2017
      %v2417 = vpop.f32.mrf.mxu0
      %v2418 = vadd.f32 0.0, %v2417
      %2419 = vmatmul.f32.gmra.mxu0 %v2020
      %v2420 = vpop.f32.mrf.mxu0
      %v2421 = vadd.f32 0.0, %v2420
      %2422 = vmatmul.f32.gmra.mxu0 %v2023
      %v2423 = vpop.f32.mrf.mxu0
      %v2424 = vadd.f32 0.0, %v2423
      %2425 = vmatmul.f32.gmra.mxu0 %v2026
      %v2426 = vpop.f32.mrf.mxu0
      %v2427 = vadd.f32 0.0, %v2426
      %2428 = vmatmul.f32.gmra.mxu0 %v2029
      %v2429 = vpop.f32.mrf.mxu0
      %v2430 = vadd.f32 0.0, %v2429
      %2431 = vmatmul.f32.gmra.mxu0 %v2032
      %v2432 = vpop.f32.mrf.mxu0
      %v2433 = vadd.f32 0.0, %v2432
      %2434 = vmatmul.f32.gmra.mxu0 %v2035
      %v2435 = vpop.f32.mrf.mxu0
      %v2436 = vadd.f32 0.0, %v2435
      %2437 = vmatmul.f32.gmra.mxu0 %v2038
      %v2438 = vpop.f32.mrf.mxu0
      %v2439 = vadd.f32 0.0, %v2438
      %2440 = vmatmul.f32.gmra.mxu0 %v2041
      %v2441 = vpop.f32.mrf.mxu0
      %v2442 = vadd.f32 0.0, %v2441
      %2443 = vmatmul.f32.gmra.mxu0 %v2044
      %v2444 = vpop.f32.mrf.mxu0
      %v2445 = vadd.f32 0.0, %v2444
      %2446 = vmatmul.f32.gmra.mxu0 %v2047
      %v2447 = vpop.f32.mrf.mxu0
      %v2448 = vadd.f32 0.0, %v2447
      %2449 = vmatmul.f32.gmra.mxu0 %v2050
      %v2450 = vpop.f32.mrf.mxu0
      %v2451 = vadd.f32 0.0, %v2450
      %2452 = vmatmul.f32.gmra.mxu0 %v2053
      %v2453 = vpop.f32.mrf.mxu0
      %v2454 = vadd.f32 0.0, %v2453
      %2455 = vmatmul.f32.gmra.mxu0 %v2056
      %v2456 = vpop.f32.mrf.mxu0
      %v2457 = vadd.f32 0.0, %v2456
      %2458 = vmatmul.f32.gmra.mxu0 %v2059
      %v2459 = vpop.f32.mrf.mxu0
      %v2460 = vadd.f32 0.0, %v2459
      %2461 = vmatmul.f32.gmra.mxu0 %v2062
      %v2462 = vpop.f32.mrf.mxu0
      %v2463 = vadd.f32 0.0, %v2462
      %2464 = vmatmul.f32.gmra.mxu0 %v2065
      %v2465 = vpop.f32.mrf.mxu0
      %v2466 = vadd.f32 0.0, %v2465
      %2467 = vmatmul.f32.gmra.mxu0 %v2068
      %v2468 = vpop.f32.mrf.mxu0
      %v2469 = vadd.f32 0.0, %v2468
      %2470 = vmatmul.f32.gmra.mxu0 %v2071
      %v2471 = vpop.f32.mrf.mxu0
      %v2472 = vadd.f32 0.0, %v2471
      %2473 = vmatmul.f32.gmra.mxu0 %v2074
      %v2474 = vpop.f32.mrf.mxu0
      %v2475 = vadd.f32 0.0, %v2474
      %2476 = vmatmul.f32.gmra.mxu0 %v2077
      %v2477 = vpop.f32.mrf.mxu0
      %v2478 = vadd.f32 0.0, %v2477
      %2479 = vmatmul.f32.gmra.mxu0 %v2080
      %v2480 = vpop.f32.mrf.mxu0
      %v2481 = vadd.f32 0.0, %v2480
      %2482 = vmatmul.f32.gmra.mxu0 %v2083
      %v2483 = vpop.f32.mrf.mxu0
      %v2484 = vadd.f32 0.0, %v2483
      %2485 = vmatmul.f32.gmra.mxu0 %v2086
      %v2486 = vpop.f32.mrf.mxu0
      %v2487 = vadd.f32 0.0, %v2486
      %2488 = vmatmul.f32.gmra.mxu0 %v2089
      %v2489 = vpop.f32.mrf.mxu0
      %v2490 = vadd.f32 0.0, %v2489
      %2491 = vmatmul.f32.gmra.mxu0 %v2092
      %v2492 = vpop.f32.mrf.mxu0
      %v2493 = vadd.f32 0.0, %v2492
      %2494 = vmatmul.f32.gmra.mxu0 %v2095
      %v2495 = vpop.f32.mrf.mxu0
      %v2496 = vadd.f32 0.0, %v2495
      %2497 = vmatmul.f32.gmra.mxu0 %v2098
      %v2498 = vpop.f32.mrf.mxu0
      %v2499 = vadd.f32 0.0, %v2498
      %2500 = vmatmul.f32.gmra.mxu0 %v2101
      %v2501 = vpop.f32.mrf.mxu0
      %v2502 = vadd.f32 0.0, %v2501
      %2503 = vmatmul.f32.gmra.mxu0 %v2104
      %v2504 = vpop.f32.mrf.mxu0
      %v2505 = vadd.f32 0.0, %v2504
      %2506 = vmatmul.f32.gmra.mxu0 %v2107
      %v2507 = vpop.f32.mrf.mxu0
      %v2508 = vadd.f32 0.0, %v2507
      %2509 = vmatmul.f32.gmra.mxu0 %v2110
      %v2510 = vpop.f32.mrf.mxu0
      %v2511 = vadd.f32 0.0, %v2510
      %2512 = vmatmul.f32.gmra.mxu0 %v2113
      %v2513 = vpop.f32.mrf.mxu0
      %v2514 = vadd.f32 0.0, %v2513
      %2515 = vmatmul.f32.gmra.mxu0 %v2116
      %v2516 = vpop.f32.mrf.mxu0
      %v2517 = vadd.f32 0.0, %v2516
      %2518 = vmatmul.f32.gmra.mxu0 %v2119
      %v2519 = vpop.f32.mrf.mxu0
      %v2520 = vadd.f32 0.0, %v2519
      %2521 = vmatmul.f32.gmra.mxu0 %v2122
      %v2522 = vpop.f32.mrf.mxu0
      %v2523 = vadd.f32 0.0, %v2522
      %2524 = vmatmul.f32.gmra.mxu0 %v2125
      %v2525 = vpop.f32.mrf.mxu0
      %v2526 = vadd.f32 0.0, %v2525
      %2527 = vmatmul.f32.gmra.mxu0 %v2128
      %v2528 = vpop.f32.mrf.mxu0
      %v2529 = vadd.f32 0.0, %v2528
      %2530 = vmatmul.f32.gmra.mxu0 %v2131
      %v2531 = vpop.f32.mrf.mxu0
      %v2532 = vadd.f32 0.0, %v2531
      %2533 = vmatmul.f32.gmra.mxu0 %v2134
      %v2534 = vpop.f32.mrf.mxu0
      %v2535 = vadd.f32 0.0, %v2534
      %2536 = vmatmul.f32.gmra.mxu0 %v2137
      %v2537 = vpop.f32.mrf.mxu0
      %v2538 = vadd.f32 0.0, %v2537
      %2539 = vmatmul.f32.gmra.mxu0 %v2140
      %v2540 = vpop.f32.mrf.mxu0
      %v2541 = vadd.f32 0.0, %v2540
      %2542 = vmatmul.f32.gmra.mxu0 %v2143
      %v2543 = vpop.f32.mrf.mxu0
      %v2544 = vadd.f32 0.0, %v2543
      %2545 = vmatmul.f32.gmra.mxu0 %v2146
      %v2546 = vpop.f32.mrf.mxu0
      %v2547 = vadd.f32 0.0, %v2546
      %2548 = vmatmul.f32.gmra.mxu0 %v2149
      %v2549 = vpop.f32.mrf.mxu0
      %v2550 = vadd.f32 0.0, %v2549
      %2551 = vmatmul.f32.gmra.mxu0 %v2152
      %v2552 = vpop.f32.mrf.mxu0
      %v2553 = vadd.f32 0.0, %v2552
      %2554 = vmatmul.f32.gmra.mxu0 %v2155
      %v2555 = vpop.f32.mrf.mxu0
      %v2556 = vadd.f32 0.0, %v2555
      %2557 = vmatmul.f32.gmra.mxu0 %v2158
      %v2558 = vpop.f32.mrf.mxu0
      %v2559 = vadd.f32 0.0, %v2558
      %2560 = vmatmul.f32.gmra.mxu0 %v2161
      %v2561 = vpop.f32.mrf.mxu0
      %v2562 = vadd.f32 0.0, %v2561
      %2563 = vmatmul.f32.gmra.mxu0 %v2164
      %v2564 = vpop.f32.mrf.mxu0
      %v2565 = vadd.f32 0.0, %v2564
      %2566 = vmatmul.f32.gmra.mxu0 %v2167
      %v2567 = vpop.f32.mrf.mxu0
      %v2568 = vadd.f32 0.0, %v2567
      %2569 = vmatmul.f32.gmra.mxu0 %v2170
      %v2570 = vpop.f32.mrf.mxu0
      %v2571 = vadd.f32 0.0, %v2570
      %2572 = vmatmul.f32.gmra.mxu0 %v2173
      %v2573 = vpop.f32.mrf.mxu0
      %v2574 = vadd.f32 0.0, %v2573
      %2575 = vmatmul.f32.gmra.mxu0 %v2176
      %v2576 = vpop.f32.mrf.mxu0
      %v2577 = vadd.f32 0.0, %v2576
      %2578 = vmatmul.f32.gmra.mxu0 %v2179
      %v2579 = vpop.f32.mrf.mxu0
      %v2580 = vadd.f32 0.0, %v2579
      %2581 = vmatmul.f32.gmra.mxu0 %v2182
      %v2582 = vpop.f32.mrf.mxu0
      %v2583 = vadd.f32 0.0, %v2582
      %2584 = vmatmul.f32.gmra.mxu0 %v2185
      %v2585 = vpop.f32.mrf.mxu0
      %v2586 = vadd.f32 0.0, %v2585
      %2587 = vmatmul.f32.gmra.mxu0 %v2188
      %v2588 = vpop.f32.mrf.mxu0
      %v2589 = vadd.f32 0.0, %v2588
      %2590 = vmatmul.f32.gmra.mxu0 %v2191
      %v2591 = vpop.f32.mrf.mxu0
      %v2592 = vadd.f32 0.0, %v2591
      %2593 = vmatmul.f32.gmra.mxu0 %v2194
      %v2594 = vpop.f32.mrf.mxu0
      %v2595 = vadd.f32 0.0, %v2594
      %2596 = vmatmul.f32.gmra.mxu0 %v2197
      %v2597 = vpop.f32.mrf.mxu0
      %v2598 = vadd.f32 0.0, %v2597
      %2599 = vmatmul.f32.gmra.mxu0 %v2200
      %v2600 = vpop.f32.mrf.mxu0
      %v2601 = vadd.f32 0.0, %v2600
      %2602 = vmatmul.f32.gmra.mxu0 %v2203
      %v2603 = vpop.f32.mrf.mxu0
      %v2604 = vadd.f32 0.0, %v2603
      %2605 = vmatmul.f32.gmra.mxu0 %v2206
      %v2606 = vpop.f32.mrf.mxu0
      %v2607 = vadd.f32 0.0, %v2606
      %2608 = vmatmul.f32.gmra.mxu0 %v2209
      %v2609 = vpop.f32.mrf.mxu0
      %v2610 = vadd.f32 0.0, %v2609
      %2611 = vmatmul.f32.gmra.mxu0 %v2212
      %v2612 = vpop.f32.mrf.mxu0
      %v2613 = vadd.f32 0.0, %v2612
      %2614 = vmatmul.f32.gmra.mxu0 %v2215
      %v2615 = vpop.f32.mrf.mxu0
      %v2616 = vadd.f32 0.0, %v2615
      %2617 = vmatmul.f32.gmra.mxu0 %v2218
      %v2618 = vpop.f32.mrf.mxu0
      %v2619 = vadd.f32 0.0, %v2618
      %2620 = vmatmul.f32.gmra.mxu0 %v2221
      %v2621 = vpop.f32.mrf.mxu0
      %v2622 = vadd.f32 0.0, %v2621
      %2623 = vmatmul.f32.gmra.mxu0 %v2224
      %v2624 = vpop.f32.mrf.mxu0
      %v2625 = vadd.f32 0.0, %v2624
      %2626 = vmatmul.f32.gmra.mxu0 %v2227
      %v2627 = vpop.f32.mrf.mxu0
      %v2628 = vadd.f32 0.0, %v2627
      %2629 = vmatmul.f32.gmra.mxu0 %v2230
      %v2630 = vpop.f32.mrf.mxu0
      %v2631 = vadd.f32 0.0, %v2630
      %2632 = vmatmul.f32.gmra.mxu0 %v2233
      %v2633 = vpop.f32.mrf.mxu0
      %v2634 = vadd.f32 0.0, %v2633
      %2635 = vmatmul.f32.gmra.mxu0 %v2236
      %v2636 = vpop.f32.mrf.mxu0
      %v2637 = vadd.f32 0.0, %v2636
      %2638 = vmatmul.f32.gmra.mxu0 %v2239
      %v2639 = vpop.f32.mrf.mxu0
      %v2640 = vadd.f32 0.0, %v2639
      %2641 = vmatmul.f32.gmra.mxu0 %v2242
      %v2642 = vpop.f32.mrf.mxu0
      %v2643 = vadd.f32 0.0, %v2642
      %2644 = vmatmul.f32.gmra.mxu0 %v2245
      %v2645 = vpop.f32.mrf.mxu0
      %v2646 = vadd.f32 0.0, %v2645
      %2647 = vmatmul.f32.gmra.mxu0 %v2248
      %v2648 = vpop.f32.mrf.mxu0
      %v2649 = vadd.f32 0.0, %v2648
      %2650 = vmatmul.f32.gmra.mxu0 %v2251
      %v2651 = vpop.f32.mrf.mxu0
      %v2652 = vadd.f32 0.0, %v2651
      %2653 = vmatmul.f32.gmra.mxu0 %v2254
      %v2654 = vpop.f32.mrf.mxu0
      %v2655 = vadd.f32 0.0, %v2654
      %2656 = vmatmul.f32.gmra.mxu0 %v2257
      %v2657 = vpop.f32.mrf.mxu0
      %v2658 = vadd.f32 0.0, %v2657
      %2659 = vmatmul.f32.gmra.mxu0 %v2260
      %v2660 = vpop.f32.mrf.mxu0
      %v2661 = vadd.f32 0.0, %v2660
      %2662 = vmatmul.f32.gmra.mxu0 %v2263
      %v2663 = vpop.f32.mrf.mxu0
      %v2664 = vadd.f32 0.0, %v2663
      %2665 = vmatmul.f32.gmra.mxu0 %v2266
      %v2666 = vpop.f32.mrf.mxu0
      %v2667 = vadd.f32 0.0, %v2666
      %2668 = vmatmul.f32.gmra.mxu0 %v2269
      %v2669 = vpop.f32.mrf.mxu0
      %v2670 = vadd.f32 0.0, %v2669
      %2671 = vmatmul.f32.gmra.mxu0 %v2272
      %v2672 = vpop.f32.mrf.mxu0
      %v2673 = vadd.f32 0.0, %v2672
      %2674 = vmatmul.f32.gmra.mxu0 %v2275
      %v2675 = vpop.f32.mrf.mxu0
      %v2676 = vadd.f32 0.0, %v2675
      %2677 = vmatmul.f32.gmra.mxu0 %v2278
      %v2678 = vpop.f32.mrf.mxu0
      %v2679 = vadd.f32 0.0, %v2678
      %2680 = vmatmul.f32.gmra.mxu0 %v2281
      %v2681 = vpop.f32.mrf.mxu0
      %v2682 = vadd.f32 0.0, %v2681
      %2683 = vmatmul.f32.gmra.mxu0 %v2284
      %v2684 = vpop.f32.mrf.mxu0
      %v2685 = vadd.f32 0.0, %v2684
      %2686 = vmatmul.f32.gmra.mxu0 %v2287
      %v2687 = vpop.f32.mrf.mxu0
      %v2688 = vadd.f32 0.0, %v2687
      %2689 = vmatmul.f32.gmra.mxu0 %v2290
      %v2690 = vpop.f32.mrf.mxu0
      %v2691 = vadd.f32 0.0, %v2690
      %2692 = vmatmul.f32.gmra.mxu0 %v2293
      %v2693 = vpop.f32.mrf.mxu0
      %v2694 = vadd.f32 0.0, %v2693
      %2695 = vmatmul.f32.gmra.mxu0 %v2296
      %v2696 = vpop.f32.mrf.mxu0
      %v2697 = vadd.f32 0.0, %v2696
      %2698 = vmatmul.f32.gmra.mxu0 %v2299
      %v2699 = vpop.f32.mrf.mxu0
      %v2700 = vadd.f32 0.0, %v2699
      %2701 = vmatmul.f32.gmra.mxu0 %v2302
      %v2702 = vpop.f32.mrf.mxu0
      %v2703 = vadd.f32 0.0, %v2702
      %2704 = vmatmul.f32.gmra.mxu0 %v2305
      %v2705 = vpop.f32.mrf.mxu0
      %v2706 = vadd.f32 0.0, %v2705
      %2707 = vmatmul.f32.gmra.mxu0 %v2308
      %v2708 = vpop.f32.mrf.mxu0
      %v2709 = vadd.f32 0.0, %v2708
      %2710 = vmatmul.f32.gmra.mxu0 %v2311
      %v2711 = vpop.f32.mrf.mxu0
      %v2712 = vadd.f32 0.0, %v2711
      %2713 = vmatmul.f32.gmra.mxu0 %v2314
      %v2714 = vpop.f32.mrf.mxu0
      %v2715 = vadd.f32 0.0, %v2714
      %2716 = vmatmul.f32.gmra.mxu0 %v2317
      %v2717 = vpop.f32.mrf.mxu0
      %v2718 = vadd.f32 0.0, %v2717
      %2719 = vmatmul.f32.gmra.mxu0 %v2320
      %v2720 = vpop.f32.mrf.mxu0
      %v2721 = vadd.f32 0.0, %v2720
      %2722 = vmatmul.f32.gmra.mxu0 %v2323
      %v2723 = vpop.f32.mrf.mxu0
      %v2724 = vadd.f32 0.0, %v2723
      %2725 = vmatmul.f32.gmra.mxu0 %v2326
      %v2726 = vpop.f32.mrf.mxu0
      %v2727 = vadd.f32 0.0, %v2726
      %2728 = vmatmul.f32.gmra.mxu0 %v2329
      %v2729 = vpop.f32.mrf.mxu0
      %v2730 = vadd.f32 0.0, %v2729
      %2731 = vmatmul.f32.gmra.mxu0 %v2332
      %v2732 = vpop.f32.mrf.mxu0
      %v2733 = vadd.f32 0.0, %v2732
      %2734 = vmatmul.f32.gmra.mxu0 %v2335
      %v2735 = vpop.f32.mrf.mxu0
      %v2736 = vadd.f32 0.0, %v2735
      %2737 = vmatmul.f32.gmra.mxu0 %v2338
      %v2738 = vpop.f32.mrf.mxu0
      %v2739 = vadd.f32 0.0, %v2738
      %2740 = vmatmul.f32.gmra.mxu0 %v2341
      %v2741 = vpop.f32.mrf.mxu0
      %v2742 = vadd.f32 0.0, %v2741
      %2743 = vmatmul.f32.gmra.mxu0 %v2344
      %v2744 = vpop.f32.mrf.mxu0
      %v2745 = vadd.f32 0.0, %v2744
      %2746 = vmatmul.f32.gmra.mxu0 %v2347
      %v2747 = vpop.f32.mrf.mxu0
      %v2748 = vadd.f32 0.0, %v2747
      %2749 = vmatmul.f32.gmra.mxu0 %v2350
      %v2750 = vpop.f32.mrf.mxu0
      %v2751 = vadd.f32 0.0, %v2750
      %2752 = vmatmul.f32.gmra.mxu0 %v2353
      %v2753 = vpop.f32.mrf.mxu0
      %v2754 = vadd.f32 0.0, %v2753
      %2755 = vdwg.mxu0
      %v2756 = vadd.f32 %v2373, %v2376
      %v2757 = vadd.f32 %v2379, %v2382
      %v2758 = vadd.f32 %v2385, %v2388
      %v2759 = vadd.f32 %v2391, %v2394
      %v2760 = vadd.f32 %v2397, %v2400
      %v2761 = vadd.f32 %v2403, %v2406
      %v2762 = vadd.f32 %v2409, %v2412
      %v2763 = vadd.f32 %v2415, %v2418
      %v2764 = vadd.f32 %v2421, %v2424
      %v2765 = vadd.f32 %v2427, %v2430
      %v2766 = vadd.f32 %v2433, %v2436
      %v2767 = vadd.f32 %v2439, %v2442
      %v2768 = vadd.f32 %v2445, %v2448
      %v2769 = vadd.f32 %v2451, %v2454
      %v2770 = vadd.f32 %v2457, %v2460
      %v2771 = vadd.f32 %v2463, %v2466
      %v2772 = vadd.f32 %v2469, %v2472
      %v2773 = vadd.f32 %v2475, %v2478
      %v2774 = vadd.f32 %v2481, %v2484
      %v2775 = vadd.f32 %v2487, %v2490
      %v2776 = vadd.f32 %v2493, %v2496
      %v2777 = vadd.f32 %v2499, %v2502
      %v2778 = vadd.f32 %v2505, %v2508
      %v2779 = vadd.f32 %v2511, %v2514
      %v2780 = vadd.f32 %v2517, %v2520
      %v2781 = vadd.f32 %v2523, %v2526
      %v2782 = vadd.f32 %v2529, %v2532
      %v2783 = vadd.f32 %v2535, %v2538
      %v2784 = vadd.f32 %v2541, %v2544
      %v2785 = vadd.f32 %v2547, %v2550
      %v2786 = vadd.f32 %v2553, %v2556
      %v2787 = vadd.f32 %v2559, %v2562
      %v2788 = vadd.f32 %v2565, %v2568
      %v2789 = vadd.f32 %v2571, %v2574
      %v2790 = vadd.f32 %v2577, %v2580
      %v2791 = vadd.f32 %v2583, %v2586
      %v2792 = vadd.f32 %v2589, %v2592
      %v2793 = vadd.f32 %v2595, %v2598
      %v2794 = vadd.f32 %v2601, %v2604
      %v2795 = vadd.f32 %v2607, %v2610
      %v2796 = vadd.f32 %v2613, %v2616
      %v2797 = vadd.f32 %v2619, %v2622
      %v2798 = vadd.f32 %v2625, %v2628
      %v2799 = vadd.f32 %v2631, %v2634
      %v2800 = vadd.f32 %v2637, %v2640
      %v2801 = vadd.f32 %v2643, %v2646
      %v2802 = vadd.f32 %v2649, %v2652
      %v2803 = vadd.f32 %v2655, %v2658
      %v2804 = vadd.f32 %v2661, %v2664
      %v2805 = vadd.f32 %v2667, %v2670
      %v2806 = vadd.f32 %v2673, %v2676
      %v2807 = vadd.f32 %v2679, %v2682
      %v2808 = vadd.f32 %v2685, %v2688
      %v2809 = vadd.f32 %v2691, %v2694
      %v2810 = vadd.f32 %v2697, %v2700
      %v2811 = vadd.f32 %v2703, %v2706
      %v2812 = vadd.f32 %v2709, %v2712
      %v2813 = vadd.f32 %v2715, %v2718
      %v2814 = vadd.f32 %v2721, %v2724
      %v2815 = vadd.f32 %v2727, %v2730
      %v2816 = vadd.f32 %v2733, %v2736
      %v2817 = vadd.f32 %v2739, %v2742
      %v2818 = vadd.f32 %v2745, %v2748
      %v2819 = vadd.f32 %v2751, %v2754
      %v2820 = vmul.f32 %v2756, 0.125
      %v2821 = vmul.f32 %v2757, 0.125
      %v2822 = vmul.f32 %v2758, 0.125
      %v2823 = vmul.f32 %v2759, 0.125
      %v2824 = vmul.f32 %v2760, 0.125
      %v2825 = vmul.f32 %v2761, 0.125
      %v2826 = vmul.f32 %v2762, 0.125
      %v2827 = vmul.f32 %v2763, 0.125
      %v2828 = vmul.f32 %v2764, 0.125
      %v2829 = vmul.f32 %v2765, 0.125
      %v2830 = vmul.f32 %v2766, 0.125
      %v2831 = vmul.f32 %v2767, 0.125
      %v2832 = vmul.f32 %v2768, 0.125
      %v2833 = vmul.f32 %v2769, 0.125
      %v2834 = vmul.f32 %v2770, 0.125
      %v2835 = vmul.f32 %v2771, 0.125
      %v2836 = vmul.f32 %v2772, 0.125
      %v2837 = vmul.f32 %v2773, 0.125
      %v2838 = vmul.f32 %v2774, 0.125
      %v2839 = vmul.f32 %v2775, 0.125
      %v2840 = vmul.f32 %v2776, 0.125
      %v2841 = vmul.f32 %v2777, 0.125
      %v2842 = vmul.f32 %v2778, 0.125
      %v2843 = vmul.f32 %v2779, 0.125
      %v2844 = vmul.f32 %v2780, 0.125
      %v2845 = vmul.f32 %v2781, 0.125
      %v2846 = vmul.f32 %v2782, 0.125
      %v2847 = vmul.f32 %v2783, 0.125
      %v2848 = vmul.f32 %v2784, 0.125
      %v2849 = vmul.f32 %v2785, 0.125
      %v2850 = vmul.f32 %v2786, 0.125
      %v2851 = vmul.f32 %v2787, 0.125
      %v2852 = vmul.f32 %v2788, 0.125
      %v2853 = vmul.f32 %v2789, 0.125
      %v2854 = vmul.f32 %v2790, 0.125
      %v2855 = vmul.f32 %v2791, 0.125
      %v2856 = vmul.f32 %v2792, 0.125
      %v2857 = vmul.f32 %v2793, 0.125
      %v2858 = vmul.f32 %v2794, 0.125
      %v2859 = vmul.f32 %v2795, 0.125
      %v2860 = vmul.f32 %v2796, 0.125
      %v2861 = vmul.f32 %v2797, 0.125
      %v2862 = vmul.f32 %v2798, 0.125
      %v2863 = vmul.f32 %v2799, 0.125
      %v2864 = vmul.f32 %v2800, 0.125
      %v2865 = vmul.f32 %v2801, 0.125
      %v2866 = vmul.f32 %v2802, 0.125
      %v2867 = vmul.f32 %v2803, 0.125
      %v2868 = vmul.f32 %v2804, 0.125
      %v2869 = vmul.f32 %v2805, 0.125
      %v2870 = vmul.f32 %v2806, 0.125
      %v2871 = vmul.f32 %v2807, 0.125
      %v2872 = vmul.f32 %v2808, 0.125
      %v2873 = vmul.f32 %v2809, 0.125
      %v2874 = vmul.f32 %v2810, 0.125
      %v2875 = vmul.f32 %v2811, 0.125
      %v2876 = vmul.f32 %v2812, 0.125
      %v2877 = vmul.f32 %v2813, 0.125
      %v2878 = vmul.f32 %v2814, 0.125
      %v2879 = vmul.f32 %v2815, 0.125
      %v2880 = vmul.f32 %v2816, 0.125
      %v2881 = vmul.f32 %v2817, 0.125
      %v2882 = vmul.f32 %v2818, 0.125
      %v2883 = vmul.f32 %v2819, 0.125
      %v2884 = vadd.f32 %v2820, 1e-05
      %v2885 = vadd.f32 %v2821, 1e-05
      %v2886 = vadd.f32 %v2822, 1e-05
      %v2887 = vadd.f32 %v2823, 1e-05
      %v2888 = vadd.f32 %v2824, 1e-05
      %v2889 = vadd.f32 %v2825, 1e-05
      %v2890 = vadd.f32 %v2826, 1e-05
      %v2891 = vadd.f32 %v2827, 1e-05
      %v2892 = vadd.f32 %v2828, 1e-05
      %v2893 = vadd.f32 %v2829, 1e-05
      %v2894 = vadd.f32 %v2830, 1e-05
      %v2895 = vadd.f32 %v2831, 1e-05
      %v2896 = vadd.f32 %v2832, 1e-05
      %v2897 = vadd.f32 %v2833, 1e-05
      %v2898 = vadd.f32 %v2834, 1e-05
      %v2899 = vadd.f32 %v2835, 1e-05
      %v2900 = vadd.f32 %v2836, 1e-05
      %v2901 = vadd.f32 %v2837, 1e-05
      %v2902 = vadd.f32 %v2838, 1e-05
      %v2903 = vadd.f32 %v2839, 1e-05
      %v2904 = vadd.f32 %v2840, 1e-05
      %v2905 = vadd.f32 %v2841, 1e-05
      %v2906 = vadd.f32 %v2842, 1e-05
      %v2907 = vadd.f32 %v2843, 1e-05
      %v2908 = vadd.f32 %v2844, 1e-05
      %v2909 = vadd.f32 %v2845, 1e-05
      %v2910 = vadd.f32 %v2846, 1e-05
      %v2911 = vadd.f32 %v2847, 1e-05
      %v2912 = vadd.f32 %v2848, 1e-05
      %v2913 = vadd.f32 %v2849, 1e-05
      %v2914 = vadd.f32 %v2850, 1e-05
      %v2915 = vadd.f32 %v2851, 1e-05
      %v2916 = vadd.f32 %v2852, 1e-05
      %v2917 = vadd.f32 %v2853, 1e-05
      %v2918 = vadd.f32 %v2854, 1e-05
      %v2919 = vadd.f32 %v2855, 1e-05
      %v2920 = vadd.f32 %v2856, 1e-05
      %v2921 = vadd.f32 %v2857, 1e-05
      %v2922 = vadd.f32 %v2858, 1e-05
      %v2923 = vadd.f32 %v2859, 1e-05
      %v2924 = vadd.f32 %v2860, 1e-05
      %v2925 = vadd.f32 %v2861, 1e-05
      %v2926 = vadd.f32 %v2862, 1e-05
      %v2927 = vadd.f32 %v2863, 1e-05
      %v2928 = vadd.f32 %v2864, 1e-05
      %v2929 = vadd.f32 %v2865, 1e-05
      %v2930 = vadd.f32 %v2866, 1e-05
      %v2931 = vadd.f32 %v2867, 1e-05
      %v2932 = vadd.f32 %v2868, 1e-05
      %v2933 = vadd.f32 %v2869, 1e-05
      %v2934 = vadd.f32 %v2870, 1e-05
      %v2935 = vadd.f32 %v2871, 1e-05
      %v2936 = vadd.f32 %v2872, 1e-05
      %v2937 = vadd.f32 %v2873, 1e-05
      %v2938 = vadd.f32 %v2874, 1e-05
      %v2939 = vadd.f32 %v2875, 1e-05
      %v2940 = vadd.f32 %v2876, 1e-05
      %v2941 = vadd.f32 %v2877, 1e-05
      %v2942 = vadd.f32 %v2878, 1e-05
      %v2943 = vadd.f32 %v2879, 1e-05
      %v2944 = vadd.f32 %v2880, 1e-05
      %v2945 = vadd.f32 %v2881, 1e-05
      %v2946 = vadd.f32 %v2882, 1e-05
      %v2947 = vadd.f32 %v2883, 1e-05
      %v2948 = vrsqrt.pop %v2884
      %v2949 = vmul.f32 %v2948, %v2884
      %v2950 = vmul.f32 %v2949, %v2948
      %v2951 = vmul.f32 0.5, %v2950
      %v2952 = vsub.f32 1.5, %v2951
      %v2953 = vmul.f32 %v2948, %v2952
      %vm2954 = vweird.f32 %v2884
      %vm2955 = vweird.f32 %v2948
      %vm2956 = vmor %vm2954, %vm2955
      %v2957 = vsel %vm2956, %v2948, %v2953
      %v2958 = vrsqrt.pop %v2885
      %v2959 = vmul.f32 %v2958, %v2885
      %v2960 = vmul.f32 %v2959, %v2958
      %v2961 = vmul.f32 0.5, %v2960
      %v2962 = vsub.f32 1.5, %v2961
      %v2963 = vmul.f32 %v2958, %v2962
      %vm2964 = vweird.f32 %v2885
      %vm2965 = vweird.f32 %v2958
      %vm2966 = vmor %vm2964, %vm2965
      %v2967 = vsel %vm2966, %v2958, %v2963
      %v2968 = vrsqrt.pop %v2886
      %v2969 = vmul.f32 %v2968, %v2886
      %v2970 = vmul.f32 %v2969, %v2968
      %v2971 = vmul.f32 0.5, %v2970
      %v2972 = vsub.f32 1.5, %v2971
      %v2973 = vmul.f32 %v2968, %v2972
      %vm2974 = vweird.f32 %v2886
      %vm2975 = vweird.f32 %v2968
      %vm2976 = vmor %vm2974, %vm2975
      %v2977 = vsel %vm2976, %v2968, %v2973
      %v2978 = vrsqrt.pop %v2887
      %v2979 = vmul.f32 %v2978, %v2887
      %v2980 = vmul.f32 %v2979, %v2978
      %v2981 = vmul.f32 0.5, %v2980
      %v2982 = vsub.f32 1.5, %v2981
      %v2983 = vmul.f32 %v2978, %v2982
      %vm2984 = vweird.f32 %v2887
      %vm2985 = vweird.f32 %v2978
      %vm2986 = vmor %vm2984, %vm2985
      %v2987 = vsel %vm2986, %v2978, %v2983
      %v2988 = vrsqrt.pop %v2888
      %v2989 = vmul.f32 %v2988, %v2888
      %v2990 = vmul.f32 %v2989, %v2988
      %v2991 = vmul.f32 0.5, %v2990
      %v2992 = vsub.f32 1.5, %v2991
      %v2993 = vmul.f32 %v2988, %v2992
      %vm2994 = vweird.f32 %v2888
      %vm2995 = vweird.f32 %v2988
      %vm2996 = vmor %vm2994, %vm2995
      %v2997 = vsel %vm2996, %v2988, %v2993
      %v2998 = vrsqrt.pop %v2889
      %v2999 = vmul.f32 %v2998, %v2889
      %v3000 = vmul.f32 %v2999, %v2998
      %v3001 = vmul.f32 0.5, %v3000
      %v3002 = vsub.f32 1.5, %v3001
      %v3003 = vmul.f32 %v2998, %v3002
      %vm3004 = vweird.f32 %v2889
      %vm3005 = vweird.f32 %v2998
      %vm3006 = vmor %vm3004, %vm3005
      %v3007 = vsel %vm3006, %v2998, %v3003
      %v3008 = vrsqrt.pop %v2890
      %v3009 = vmul.f32 %v3008, %v2890
      %v3010 = vmul.f32 %v3009, %v3008
      %v3011 = vmul.f32 0.5, %v3010
      %v3012 = vsub.f32 1.5, %v3011
      %v3013 = vmul.f32 %v3008, %v3012
      %vm3014 = vweird.f32 %v2890
      %vm3015 = vweird.f32 %v3008
      %vm3016 = vmor %vm3014, %vm3015
      %v3017 = vsel %vm3016, %v3008, %v3013
      %v3018 = vrsqrt.pop %v2891
      %v3019 = vmul.f32 %v3018, %v2891
      %v3020 = vmul.f32 %v3019, %v3018
      %v3021 = vmul.f32 0.5, %v3020
      %v3022 = vsub.f32 1.5, %v3021
      %v3023 = vmul.f32 %v3018, %v3022
      %vm3024 = vweird.f32 %v2891
      %vm3025 = vweird.f32 %v3018
      %vm3026 = vmor %vm3024, %vm3025
      %v3027 = vsel %vm3026, %v3018, %v3023
      %v3028 = vrsqrt.pop %v2892
      %v3029 = vmul.f32 %v3028, %v2892
      %v3030 = vmul.f32 %v3029, %v3028
      %v3031 = vmul.f32 0.5, %v3030
      %v3032 = vsub.f32 1.5, %v3031
      %v3033 = vmul.f32 %v3028, %v3032
      %vm3034 = vweird.f32 %v2892
      %vm3035 = vweird.f32 %v3028
      %vm3036 = vmor %vm3034, %vm3035
      %v3037 = vsel %vm3036, %v3028, %v3033
      %v3038 = vrsqrt.pop %v2893
      %v3039 = vmul.f32 %v3038, %v2893
      %v3040 = vmul.f32 %v3039, %v3038
      %v3041 = vmul.f32 0.5, %v3040
      %v3042 = vsub.f32 1.5, %v3041
      %v3043 = vmul.f32 %v3038, %v3042
      %vm3044 = vweird.f32 %v2893
      %vm3045 = vweird.f32 %v3038
      %vm3046 = vmor %vm3044, %vm3045
      %v3047 = vsel %vm3046, %v3038, %v3043
      %v3048 = vrsqrt.pop %v2894
      %v3049 = vmul.f32 %v3048, %v2894
      %v3050 = vmul.f32 %v3049, %v3048
      %v3051 = vmul.f32 0.5, %v3050
      %v3052 = vsub.f32 1.5, %v3051
      %v3053 = vmul.f32 %v3048, %v3052
      %vm3054 = vweird.f32 %v2894
      %vm3055 = vweird.f32 %v3048
      %vm3056 = vmor %vm3054, %vm3055
      %v3057 = vsel %vm3056, %v3048, %v3053
      %v3058 = vrsqrt.pop %v2895
      %v3059 = vmul.f32 %v3058, %v2895
      %v3060 = vmul.f32 %v3059, %v3058
      %v3061 = vmul.f32 0.5, %v3060
      %v3062 = vsub.f32 1.5, %v3061
      %v3063 = vmul.f32 %v3058, %v3062
      %vm3064 = vweird.f32 %v2895
      %vm3065 = vweird.f32 %v3058
      %vm3066 = vmor %vm3064, %vm3065
      %v3067 = vsel %vm3066, %v3058, %v3063
      %v3068 = vrsqrt.pop %v2896
      %v3069 = vmul.f32 %v3068, %v2896
      %v3070 = vmul.f32 %v3069, %v3068
      %v3071 = vmul.f32 0.5, %v3070
      %v3072 = vsub.f32 1.5, %v3071
      %v3073 = vmul.f32 %v3068, %v3072
      %vm3074 = vweird.f32 %v2896
      %vm3075 = vweird.f32 %v3068
      %vm3076 = vmor %vm3074, %vm3075
      %v3077 = vsel %vm3076, %v3068, %v3073
      %v3078 = vrsqrt.pop %v2897
      %v3079 = vmul.f32 %v3078, %v2897
      %v3080 = vmul.f32 %v3079, %v3078
      %v3081 = vmul.f32 0.5, %v3080
      %v3082 = vsub.f32 1.5, %v3081
      %v3083 = vmul.f32 %v3078, %v3082
      %vm3084 = vweird.f32 %v2897
      %vm3085 = vweird.f32 %v3078
      %vm3086 = vmor %vm3084, %vm3085
      %v3087 = vsel %vm3086, %v3078, %v3083
      %v3088 = vrsqrt.pop %v2898
      %v3089 = vmul.f32 %v3088, %v2898
      %v3090 = vmul.f32 %v3089, %v3088
      %v3091 = vmul.f32 0.5, %v3090
      %v3092 = vsub.f32 1.5, %v3091
      %v3093 = vmul.f32 %v3088, %v3092
      %vm3094 = vweird.f32 %v2898
      %vm3095 = vweird.f32 %v3088
      %vm3096 = vmor %vm3094, %vm3095
      %v3097 = vsel %vm3096, %v3088, %v3093
      %v3098 = vrsqrt.pop %v2899
      %v3099 = vmul.f32 %v3098, %v2899
      %v3100 = vmul.f32 %v3099, %v3098
      %v3101 = vmul.f32 0.5, %v3100
      %v3102 = vsub.f32 1.5, %v3101
      %v3103 = vmul.f32 %v3098, %v3102
      %vm3104 = vweird.f32 %v2899
      %vm3105 = vweird.f32 %v3098
      %vm3106 = vmor %vm3104, %vm3105
      %v3107 = vsel %vm3106, %v3098, %v3103
      %v3108 = vrsqrt.pop %v2900
      %v3109 = vmul.f32 %v3108, %v2900
      %v3110 = vmul.f32 %v3109, %v3108
      %v3111 = vmul.f32 0.5, %v3110
      %v3112 = vsub.f32 1.5, %v3111
      %v3113 = vmul.f32 %v3108, %v3112
      %vm3114 = vweird.f32 %v2900
      %vm3115 = vweird.f32 %v3108
      %vm3116 = vmor %vm3114, %vm3115
      %v3117 = vsel %vm3116, %v3108, %v3113
      %v3118 = vrsqrt.pop %v2901
      %v3119 = vmul.f32 %v3118, %v2901
      %v3120 = vmul.f32 %v3119, %v3118
      %v3121 = vmul.f32 0.5, %v3120
      %v3122 = vsub.f32 1.5, %v3121
      %v3123 = vmul.f32 %v3118, %v3122
      %vm3124 = vweird.f32 %v2901
      %vm3125 = vweird.f32 %v3118
      %vm3126 = vmor %vm3124, %vm3125
      %v3127 = vsel %vm3126, %v3118, %v3123
      %v3128 = vrsqrt.pop %v2902
      %v3129 = vmul.f32 %v3128, %v2902
      %v3130 = vmul.f32 %v3129, %v3128
      %v3131 = vmul.f32 0.5, %v3130
      %v3132 = vsub.f32 1.5, %v3131
      %v3133 = vmul.f32 %v3128, %v3132
      %vm3134 = vweird.f32 %v2902
      %vm3135 = vweird.f32 %v3128
      %vm3136 = vmor %vm3134, %vm3135
      %v3137 = vsel %vm3136, %v3128, %v3133
      %v3138 = vrsqrt.pop %v2903
      %v3139 = vmul.f32 %v3138, %v2903
      %v3140 = vmul.f32 %v3139, %v3138
      %v3141 = vmul.f32 0.5, %v3140
      %v3142 = vsub.f32 1.5, %v3141
      %v3143 = vmul.f32 %v3138, %v3142
      %vm3144 = vweird.f32 %v2903
      %vm3145 = vweird.f32 %v3138
      %vm3146 = vmor %vm3144, %vm3145
      %v3147 = vsel %vm3146, %v3138, %v3143
      %v3148 = vrsqrt.pop %v2904
      %v3149 = vmul.f32 %v3148, %v2904
      %v3150 = vmul.f32 %v3149, %v3148
      %v3151 = vmul.f32 0.5, %v3150
      %v3152 = vsub.f32 1.5, %v3151
      %v3153 = vmul.f32 %v3148, %v3152
      %vm3154 = vweird.f32 %v2904
      %vm3155 = vweird.f32 %v3148
      %vm3156 = vmor %vm3154, %vm3155
      %v3157 = vsel %vm3156, %v3148, %v3153
      %v3158 = vrsqrt.pop %v2905
      %v3159 = vmul.f32 %v3158, %v2905
      %v3160 = vmul.f32 %v3159, %v3158
      %v3161 = vmul.f32 0.5, %v3160
      %v3162 = vsub.f32 1.5, %v3161
      %v3163 = vmul.f32 %v3158, %v3162
      %vm3164 = vweird.f32 %v2905
      %vm3165 = vweird.f32 %v3158
      %vm3166 = vmor %vm3164, %vm3165
      %v3167 = vsel %vm3166, %v3158, %v3163
      %v3168 = vrsqrt.pop %v2906
      %v3169 = vmul.f32 %v3168, %v2906
      %v3170 = vmul.f32 %v3169, %v3168
      %v3171 = vmul.f32 0.5, %v3170
      %v3172 = vsub.f32 1.5, %v3171
      %v3173 = vmul.f32 %v3168, %v3172
      %vm3174 = vweird.f32 %v2906
      %vm3175 = vweird.f32 %v3168
      %vm3176 = vmor %vm3174, %vm3175
      %v3177 = vsel %vm3176, %v3168, %v3173
      %v3178 = vrsqrt.pop %v2907
      %v3179 = vmul.f32 %v3178, %v2907
      %v3180 = vmul.f32 %v3179, %v3178
      %v3181 = vmul.f32 0.5, %v3180
      %v3182 = vsub.f32 1.5, %v3181
      %v3183 = vmul.f32 %v3178, %v3182
      %vm3184 = vweird.f32 %v2907
      %vm3185 = vweird.f32 %v3178
      %vm3186 = vmor %vm3184, %vm3185
      %v3187 = vsel %vm3186, %v3178, %v3183
      %v3188 = vrsqrt.pop %v2908
      %v3189 = vmul.f32 %v3188, %v2908
      %v3190 = vmul.f32 %v3189, %v3188
      %v3191 = vmul.f32 0.5, %v3190
      %v3192 = vsub.f32 1.5, %v3191
      %v3193 = vmul.f32 %v3188, %v3192
      %vm3194 = vweird.f32 %v2908
      %vm3195 = vweird.f32 %v3188
      %vm3196 = vmor %vm3194, %vm3195
      %v3197 = vsel %vm3196, %v3188, %v3193
      %v3198 = vrsqrt.pop %v2909
      %v3199 = vmul.f32 %v3198, %v2909
      %v3200 = vmul.f32 %v3199, %v3198
      %v3201 = vmul.f32 0.5, %v3200
      %v3202 = vsub.f32 1.5, %v3201
      %v3203 = vmul.f32 %v3198, %v3202
      %vm3204 = vweird.f32 %v2909
      %vm3205 = vweird.f32 %v3198
      %vm3206 = vmor %vm3204, %vm3205
      %v3207 = vsel %vm3206, %v3198, %v3203
      %v3208 = vrsqrt.pop %v2910
      %v3209 = vmul.f32 %v3208, %v2910
      %v3210 = vmul.f32 %v3209, %v3208
      %v3211 = vmul.f32 0.5, %v3210
      %v3212 = vsub.f32 1.5, %v3211
      %v3213 = vmul.f32 %v3208, %v3212
      %vm3214 = vweird.f32 %v2910
      %vm3215 = vweird.f32 %v3208
      %vm3216 = vmor %vm3214, %vm3215
      %v3217 = vsel %vm3216, %v3208, %v3213
      %v3218 = vrsqrt.pop %v2911
      %v3219 = vmul.f32 %v3218, %v2911
      %v3220 = vmul.f32 %v3219, %v3218
      %v3221 = vmul.f32 0.5, %v3220
      %v3222 = vsub.f32 1.5, %v3221
      %v3223 = vmul.f32 %v3218, %v3222
      %vm3224 = vweird.f32 %v2911
      %vm3225 = vweird.f32 %v3218
      %vm3226 = vmor %vm3224, %vm3225
      %v3227 = vsel %vm3226, %v3218, %v3223
      %v3228 = vrsqrt.pop %v2912
      %v3229 = vmul.f32 %v3228, %v2912
      %v3230 = vmul.f32 %v3229, %v3228
      %v3231 = vmul.f32 0.5, %v3230
      %v3232 = vsub.f32 1.5, %v3231
      %v3233 = vmul.f32 %v3228, %v3232
      %vm3234 = vweird.f32 %v2912
      %vm3235 = vweird.f32 %v3228
      %vm3236 = vmor %vm3234, %vm3235
      %v3237 = vsel %vm3236, %v3228, %v3233
      %v3238 = vrsqrt.pop %v2913
      %v3239 = vmul.f32 %v3238, %v2913
      %v3240 = vmul.f32 %v3239, %v3238
      %v3241 = vmul.f32 0.5, %v3240
      %v3242 = vsub.f32 1.5, %v3241
      %v3243 = vmul.f32 %v3238, %v3242
      %vm3244 = vweird.f32 %v2913
      %vm3245 = vweird.f32 %v3238
      %vm3246 = vmor %vm3244, %vm3245
      %v3247 = vsel %vm3246, %v3238, %v3243
      %v3248 = vrsqrt.pop %v2914
      %v3249 = vmul.f32 %v3248, %v2914
      %v3250 = vmul.f32 %v3249, %v3248
      %v3251 = vmul.f32 0.5, %v3250
      %v3252 = vsub.f32 1.5, %v3251
      %v3253 = vmul.f32 %v3248, %v3252
      %vm3254 = vweird.f32 %v2914
      %vm3255 = vweird.f32 %v3248
      %vm3256 = vmor %vm3254, %vm3255
      %v3257 = vsel %vm3256, %v3248, %v3253
      %v3258 = vrsqrt.pop %v2915
      %v3259 = vmul.f32 %v3258, %v2915
      %v3260 = vmul.f32 %v3259, %v3258
      %v3261 = vmul.f32 0.5, %v3260
      %v3262 = vsub.f32 1.5, %v3261
      %v3263 = vmul.f32 %v3258, %v3262
      %vm3264 = vweird.f32 %v2915
      %vm3265 = vweird.f32 %v3258
      %vm3266 = vmor %vm3264, %vm3265
      %v3267 = vsel %vm3266, %v3258, %v3263
      %v3268 = vrsqrt.pop %v2916
      %v3269 = vmul.f32 %v3268, %v2916
      %v3270 = vmul.f32 %v3269, %v3268
      %v3271 = vmul.f32 0.5, %v3270
      %v3272 = vsub.f32 1.5, %v3271
      %v3273 = vmul.f32 %v3268, %v3272
      %vm3274 = vweird.f32 %v2916
      %vm3275 = vweird.f32 %v3268
      %vm3276 = vmor %vm3274, %vm3275
      %v3277 = vsel %vm3276, %v3268, %v3273
      %v3278 = vrsqrt.pop %v2917
      %v3279 = vmul.f32 %v3278, %v2917
      %v3280 = vmul.f32 %v3279, %v3278
      %v3281 = vmul.f32 0.5, %v3280
      %v3282 = vsub.f32 1.5, %v3281
      %v3283 = vmul.f32 %v3278, %v3282
      %vm3284 = vweird.f32 %v2917
      %vm3285 = vweird.f32 %v3278
      %vm3286 = vmor %vm3284, %vm3285
      %v3287 = vsel %vm3286, %v3278, %v3283
      %v3288 = vrsqrt.pop %v2918
      %v3289 = vmul.f32 %v3288, %v2918
      %v3290 = vmul.f32 %v3289, %v3288
      %v3291 = vmul.f32 0.5, %v3290
      %v3292 = vsub.f32 1.5, %v3291
      %v3293 = vmul.f32 %v3288, %v3292
      %vm3294 = vweird.f32 %v2918
      %vm3295 = vweird.f32 %v3288
      %vm3296 = vmor %vm3294, %vm3295
      %v3297 = vsel %vm3296, %v3288, %v3293
      %v3298 = vrsqrt.pop %v2919
      %v3299 = vmul.f32 %v3298, %v2919
      %v3300 = vmul.f32 %v3299, %v3298
      %v3301 = vmul.f32 0.5, %v3300
      %v3302 = vsub.f32 1.5, %v3301
      %v3303 = vmul.f32 %v3298, %v3302
      %vm3304 = vweird.f32 %v2919
      %vm3305 = vweird.f32 %v3298
      %vm3306 = vmor %vm3304, %vm3305
      %v3307 = vsel %vm3306, %v3298, %v3303
      %v3308 = vrsqrt.pop %v2920
      %v3309 = vmul.f32 %v3308, %v2920
      %v3310 = vmul.f32 %v3309, %v3308
      %v3311 = vmul.f32 0.5, %v3310
      %v3312 = vsub.f32 1.5, %v3311
      %v3313 = vmul.f32 %v3308, %v3312
      %vm3314 = vweird.f32 %v2920
      %vm3315 = vweird.f32 %v3308
      %vm3316 = vmor %vm3314, %vm3315
      %v3317 = vsel %vm3316, %v3308, %v3313
      %v3318 = vrsqrt.pop %v2921
      %v3319 = vmul.f32 %v3318, %v2921
      %v3320 = vmul.f32 %v3319, %v3318
      %v3321 = vmul.f32 0.5, %v3320
      %v3322 = vsub.f32 1.5, %v3321
      %v3323 = vmul.f32 %v3318, %v3322
      %vm3324 = vweird.f32 %v2921
      %vm3325 = vweird.f32 %v3318
      %vm3326 = vmor %vm3324, %vm3325
      %v3327 = vsel %vm3326, %v3318, %v3323
      %v3328 = vrsqrt.pop %v2922
      %v3329 = vmul.f32 %v3328, %v2922
      %v3330 = vmul.f32 %v3329, %v3328
      %v3331 = vmul.f32 0.5, %v3330
      %v3332 = vsub.f32 1.5, %v3331
      %v3333 = vmul.f32 %v3328, %v3332
      %vm3334 = vweird.f32 %v2922
      %vm3335 = vweird.f32 %v3328
      %vm3336 = vmor %vm3334, %vm3335
      %v3337 = vsel %vm3336, %v3328, %v3333
      %v3338 = vrsqrt.pop %v2923
      %v3339 = vmul.f32 %v3338, %v2923
      %v3340 = vmul.f32 %v3339, %v3338
      %v3341 = vmul.f32 0.5, %v3340
      %v3342 = vsub.f32 1.5, %v3341
      %v3343 = vmul.f32 %v3338, %v3342
      %vm3344 = vweird.f32 %v2923
      %vm3345 = vweird.f32 %v3338
      %vm3346 = vmor %vm3344, %vm3345
      %v3347 = vsel %vm3346, %v3338, %v3343
      %v3348 = vrsqrt.pop %v2924
      %v3349 = vmul.f32 %v3348, %v2924
      %v3350 = vmul.f32 %v3349, %v3348
      %v3351 = vmul.f32 0.5, %v3350
      %v3352 = vsub.f32 1.5, %v3351
      %v3353 = vmul.f32 %v3348, %v3352
      %vm3354 = vweird.f32 %v2924
      %vm3355 = vweird.f32 %v3348
      %vm3356 = vmor %vm3354, %vm3355
      %v3357 = vsel %vm3356, %v3348, %v3353
      %v3358 = vrsqrt.pop %v2925
      %v3359 = vmul.f32 %v3358, %v2925
      %v3360 = vmul.f32 %v3359, %v3358
      %v3361 = vmul.f32 0.5, %v3360
      %v3362 = vsub.f32 1.5, %v3361
      %v3363 = vmul.f32 %v3358, %v3362
      %vm3364 = vweird.f32 %v2925
      %vm3365 = vweird.f32 %v3358
      %vm3366 = vmor %vm3364, %vm3365
      %v3367 = vsel %vm3366, %v3358, %v3363
      %v3368 = vrsqrt.pop %v2926
      %v3369 = vmul.f32 %v3368, %v2926
      %v3370 = vmul.f32 %v3369, %v3368
      %v3371 = vmul.f32 0.5, %v3370
      %v3372 = vsub.f32 1.5, %v3371
      %v3373 = vmul.f32 %v3368, %v3372
      %vm3374 = vweird.f32 %v2926
      %vm3375 = vweird.f32 %v3368
      %vm3376 = vmor %vm3374, %vm3375
      %v3377 = vsel %vm3376, %v3368, %v3373
      %v3378 = vrsqrt.pop %v2927
      %v3379 = vmul.f32 %v3378, %v2927
      %v3380 = vmul.f32 %v3379, %v3378
      %v3381 = vmul.f32 0.5, %v3380
      %v3382 = vsub.f32 1.5, %v3381
      %v3383 = vmul.f32 %v3378, %v3382
      %vm3384 = vweird.f32 %v2927
      %vm3385 = vweird.f32 %v3378
      %vm3386 = vmor %vm3384, %vm3385
      %v3387 = vsel %vm3386, %v3378, %v3383
      %v3388 = vrsqrt.pop %v2928
      %v3389 = vmul.f32 %v3388, %v2928
      %v3390 = vmul.f32 %v3389, %v3388
      %v3391 = vmul.f32 0.5, %v3390
      %v3392 = vsub.f32 1.5, %v3391
      %v3393 = vmul.f32 %v3388, %v3392
      %vm3394 = vweird.f32 %v2928
      %vm3395 = vweird.f32 %v3388
      %vm3396 = vmor %vm3394, %vm3395
      %v3397 = vsel %vm3396, %v3388, %v3393
      %v3398 = vrsqrt.pop %v2929
      %v3399 = vmul.f32 %v3398, %v2929
      %v3400 = vmul.f32 %v3399, %v3398
      %v3401 = vmul.f32 0.5, %v3400
      %v3402 = vsub.f32 1.5, %v3401
      %v3403 = vmul.f32 %v3398, %v3402
      %vm3404 = vweird.f32 %v2929
      %vm3405 = vweird.f32 %v3398
      %vm3406 = vmor %vm3404, %vm3405
      %v3407 = vsel %vm3406, %v3398, %v3403
      %v3408 = vrsqrt.pop %v2930
      %v3409 = vmul.f32 %v3408, %v2930
      %v3410 = vmul.f32 %v3409, %v3408
      %v3411 = vmul.f32 0.5, %v3410
      %v3412 = vsub.f32 1.5, %v3411
      %v3413 = vmul.f32 %v3408, %v3412
      %vm3414 = vweird.f32 %v2930
      %vm3415 = vweird.f32 %v3408
      %vm3416 = vmor %vm3414, %vm3415
      %v3417 = vsel %vm3416, %v3408, %v3413
      %v3418 = vrsqrt.pop %v2931
      %v3419 = vmul.f32 %v3418, %v2931
      %v3420 = vmul.f32 %v3419, %v3418
      %v3421 = vmul.f32 0.5, %v3420
      %v3422 = vsub.f32 1.5, %v3421
      %v3423 = vmul.f32 %v3418, %v3422
      %vm3424 = vweird.f32 %v2931
      %vm3425 = vweird.f32 %v3418
      %vm3426 = vmor %vm3424, %vm3425
      %v3427 = vsel %vm3426, %v3418, %v3423
      %v3428 = vrsqrt.pop %v2932
      %v3429 = vmul.f32 %v3428, %v2932
      %v3430 = vmul.f32 %v3429, %v3428
      %v3431 = vmul.f32 0.5, %v3430
      %v3432 = vsub.f32 1.5, %v3431
      %v3433 = vmul.f32 %v3428, %v3432
      %vm3434 = vweird.f32 %v2932
      %vm3435 = vweird.f32 %v3428
      %vm3436 = vmor %vm3434, %vm3435
      %v3437 = vsel %vm3436, %v3428, %v3433
      %v3438 = vrsqrt.pop %v2933
      %v3439 = vmul.f32 %v3438, %v2933
      %v3440 = vmul.f32 %v3439, %v3438
      %v3441 = vmul.f32 0.5, %v3440
      %v3442 = vsub.f32 1.5, %v3441
      %v3443 = vmul.f32 %v3438, %v3442
      %vm3444 = vweird.f32 %v2933
      %vm3445 = vweird.f32 %v3438
      %vm3446 = vmor %vm3444, %vm3445
      %v3447 = vsel %vm3446, %v3438, %v3443
      %v3448 = vrsqrt.pop %v2934
      %v3449 = vmul.f32 %v3448, %v2934
      %v3450 = vmul.f32 %v3449, %v3448
      %v3451 = vmul.f32 0.5, %v3450
      %v3452 = vsub.f32 1.5, %v3451
      %v3453 = vmul.f32 %v3448, %v3452
      %vm3454 = vweird.f32 %v2934
      %vm3455 = vweird.f32 %v3448
      %vm3456 = vmor %vm3454, %vm3455
      %v3457 = vsel %vm3456, %v3448, %v3453
      %v3458 = vrsqrt.pop %v2935
      %v3459 = vmul.f32 %v3458, %v2935
      %v3460 = vmul.f32 %v3459, %v3458
      %v3461 = vmul.f32 0.5, %v3460
      %v3462 = vsub.f32 1.5, %v3461
      %v3463 = vmul.f32 %v3458, %v3462
      %vm3464 = vweird.f32 %v2935
      %vm3465 = vweird.f32 %v3458
      %vm3466 = vmor %vm3464, %vm3465
      %v3467 = vsel %vm3466, %v3458, %v3463
      %v3468 = vrsqrt.pop %v2936
      %v3469 = vmul.f32 %v3468, %v2936
      %v3470 = vmul.f32 %v3469, %v3468
      %v3471 = vmul.f32 0.5, %v3470
      %v3472 = vsub.f32 1.5, %v3471
      %v3473 = vmul.f32 %v3468, %v3472
      %vm3474 = vweird.f32 %v2936
      %vm3475 = vweird.f32 %v3468
      %vm3476 = vmor %vm3474, %vm3475
      %v3477 = vsel %vm3476, %v3468, %v3473
      %v3478 = vrsqrt.pop %v2937
      %v3479 = vmul.f32 %v3478, %v2937
      %v3480 = vmul.f32 %v3479, %v3478
      %v3481 = vmul.f32 0.5, %v3480
      %v3482 = vsub.f32 1.5, %v3481
      %v3483 = vmul.f32 %v3478, %v3482
      %vm3484 = vweird.f32 %v2937
      %vm3485 = vweird.f32 %v3478
      %vm3486 = vmor %vm3484, %vm3485
      %v3487 = vsel %vm3486, %v3478, %v3483
      %v3488 = vrsqrt.pop %v2938
      %v3489 = vmul.f32 %v3488, %v2938
      %v3490 = vmul.f32 %v3489, %v3488
      %v3491 = vmul.f32 0.5, %v3490
      %v3492 = vsub.f32 1.5, %v3491
      %v3493 = vmul.f32 %v3488, %v3492
      %vm3494 = vweird.f32 %v2938
      %vm3495 = vweird.f32 %v3488
      %vm3496 = vmor %vm3494, %vm3495
      %v3497 = vsel %vm3496, %v3488, %v3493
      %v3498 = vrsqrt.pop %v2939
      %v3499 = vmul.f32 %v3498, %v2939
      %v3500 = vmul.f32 %v3499, %v3498
      %v3501 = vmul.f32 0.5, %v3500
      %v3502 = vsub.f32 1.5, %v3501
      %v3503 = vmul.f32 %v3498, %v3502
      %vm3504 = vweird.f32 %v2939
      %vm3505 = vweird.f32 %v3498
      %vm3506 = vmor %vm3504, %vm3505
      %v3507 = vsel %vm3506, %v3498, %v3503
      %v3508 = vrsqrt.pop %v2940
      %v3509 = vmul.f32 %v3508, %v2940
      %v3510 = vmul.f32 %v3509, %v3508
      %v3511 = vmul.f32 0.5, %v3510
      %v3512 = vsub.f32 1.5, %v3511
      %v3513 = vmul.f32 %v3508, %v3512
      %vm3514 = vweird.f32 %v2940
      %vm3515 = vweird.f32 %v3508
      %vm3516 = vmor %vm3514, %vm3515
      %v3517 = vsel %vm3516, %v3508, %v3513
      %v3518 = vrsqrt.pop %v2941
      %v3519 = vmul.f32 %v3518, %v2941
      %v3520 = vmul.f32 %v3519, %v3518
      %v3521 = vmul.f32 0.5, %v3520
      %v3522 = vsub.f32 1.5, %v3521
      %v3523 = vmul.f32 %v3518, %v3522
      %vm3524 = vweird.f32 %v2941
      %vm3525 = vweird.f32 %v3518
      %vm3526 = vmor %vm3524, %vm3525
      %v3527 = vsel %vm3526, %v3518, %v3523
      %v3528 = vrsqrt.pop %v2942
      %v3529 = vmul.f32 %v3528, %v2942
      %v3530 = vmul.f32 %v3529, %v3528
      %v3531 = vmul.f32 0.5, %v3530
      %v3532 = vsub.f32 1.5, %v3531
      %v3533 = vmul.f32 %v3528, %v3532
      %vm3534 = vweird.f32 %v2942
      %vm3535 = vweird.f32 %v3528
      %vm3536 = vmor %vm3534, %vm3535
      %v3537 = vsel %vm3536, %v3528, %v3533
      %v3538 = vrsqrt.pop %v2943
      %v3539 = vmul.f32 %v3538, %v2943
      %v3540 = vmul.f32 %v3539, %v3538
      %v3541 = vmul.f32 0.5, %v3540
      %v3542 = vsub.f32 1.5, %v3541
      %v3543 = vmul.f32 %v3538, %v3542
      %vm3544 = vweird.f32 %v2943
      %vm3545 = vweird.f32 %v3538
      %vm3546 = vmor %vm3544, %vm3545
      %v3547 = vsel %vm3546, %v3538, %v3543
      %v3548 = vrsqrt.pop %v2944
      %v3549 = vmul.f32 %v3548, %v2944
      %v3550 = vmul.f32 %v3549, %v3548
      %v3551 = vmul.f32 0.5, %v3550
      %v3552 = vsub.f32 1.5, %v3551
      %v3553 = vmul.f32 %v3548, %v3552
      %vm3554 = vweird.f32 %v2944
      %vm3555 = vweird.f32 %v3548
      %vm3556 = vmor %vm3554, %vm3555
      %v3557 = vsel %vm3556, %v3548, %v3553
      %v3558 = vrsqrt.pop %v2945
      %v3559 = vmul.f32 %v3558, %v2945
      %v3560 = vmul.f32 %v3559, %v3558
      %v3561 = vmul.f32 0.5, %v3560
      %v3562 = vsub.f32 1.5, %v3561
      %v3563 = vmul.f32 %v3558, %v3562
      %vm3564 = vweird.f32 %v2945
      %vm3565 = vweird.f32 %v3558
      %vm3566 = vmor %vm3564, %vm3565
      %v3567 = vsel %vm3566, %v3558, %v3563
      %v3568 = vrsqrt.pop %v2946
      %v3569 = vmul.f32 %v3568, %v2946
      %v3570 = vmul.f32 %v3569, %v3568
      %v3571 = vmul.f32 0.5, %v3570
      %v3572 = vsub.f32 1.5, %v3571
      %v3573 = vmul.f32 %v3568, %v3572
      %vm3574 = vweird.f32 %v2946
      %vm3575 = vweird.f32 %v3568
      %vm3576 = vmor %vm3574, %vm3575
      %v3577 = vsel %vm3576, %v3568, %v3573
      %v3578 = vrsqrt.pop %v2947
      %v3579 = vmul.f32 %v3578, %v2947
      %v3580 = vmul.f32 %v3579, %v3578
      %v3581 = vmul.f32 0.5, %v3580
      %v3582 = vsub.f32 1.5, %v3581
      %v3583 = vmul.f32 %v3578, %v3582
      %vm3584 = vweird.f32 %v2947
      %vm3585 = vweird.f32 %v3578
      %vm3586 = vmor %vm3584, %vm3585
      %v3587 = vsel %vm3586, %v3578, %v3583
      %v3589 = vsel %vm1313, %v2957, 0
      %v3592 = vsel %vm1313, %v2967, 0
      %v3595 = vsel %vm1313, %v2977, 0
      %v3598 = vsel %vm1313, %v2987, 0
      %v3601 = vsel %vm1313, %v2997, 0
      %v3604 = vsel %vm1313, %v3007, 0
      %v3607 = vsel %vm1313, %v3017, 0
      %v3610 = vsel %vm1313, %v3027, 0
      %v3613 = vsel %vm1313, %v3037, 0
      %v3616 = vsel %vm1313, %v3047, 0
      %v3619 = vsel %vm1313, %v3057, 0
      %v3622 = vsel %vm1313, %v3067, 0
      %v3625 = vsel %vm1313, %v3077, 0
      %v3628 = vsel %vm1313, %v3087, 0
      %v3631 = vsel %vm1313, %v3097, 0
      %v3634 = vsel %vm1313, %v3107, 0
      %v3637 = vsel %vm1313, %v3117, 0
      %v3640 = vsel %vm1313, %v3127, 0
      %v3643 = vsel %vm1313, %v3137, 0
      %v3646 = vsel %vm1313, %v3147, 0
      %v3649 = vsel %vm1313, %v3157, 0
      %v3652 = vsel %vm1313, %v3167, 0
      %v3655 = vsel %vm1313, %v3177, 0
      %v3658 = vsel %vm1313, %v3187, 0
      %v3661 = vsel %vm1313, %v3197, 0
      %v3664 = vsel %vm1313, %v3207, 0
      %v3667 = vsel %vm1313, %v3217, 0
      %v3670 = vsel %vm1313, %v3227, 0
      %v3673 = vsel %vm1313, %v3237, 0
      %v3676 = vsel %vm1313, %v3247, 0
      %v3679 = vsel %vm1313, %v3257, 0
      %v3682 = vsel %vm1313, %v3267, 0
      %v3685 = vsel %vm1313, %v3277, 0
      %v3688 = vsel %vm1313, %v3287, 0
      %v3691 = vsel %vm1313, %v3297, 0
      %v3694 = vsel %vm1313, %v3307, 0
      %v3697 = vsel %vm1313, %v3317, 0
      %v3700 = vsel %vm1313, %v3327, 0
      %v3703 = vsel %vm1313, %v3337, 0
      %v3706 = vsel %vm1313, %v3347, 0
      %v3709 = vsel %vm1313, %v3357, 0
      %v3712 = vsel %vm1313, %v3367, 0
      %v3715 = vsel %vm1313, %v3377, 0
      %v3718 = vsel %vm1313, %v3387, 0
      %v3721 = vsel %vm1313, %v3397, 0
      %v3724 = vsel %vm1313, %v3407, 0
      %v3727 = vsel %vm1313, %v3417, 0
      %v3730 = vsel %vm1313, %v3427, 0
      %v3733 = vsel %vm1313, %v3437, 0
      %v3736 = vsel %vm1313, %v3447, 0
      %v3739 = vsel %vm1313, %v3457, 0
      %v3742 = vsel %vm1313, %v3467, 0
      %v3745 = vsel %vm1313, %v3477, 0
      %v3748 = vsel %vm1313, %v3487, 0
      %v3751 = vsel %vm1313, %v3497, 0
      %v3754 = vsel %vm1313, %v3507, 0
      %v3757 = vsel %vm1313, %v3517, 0
      %v3760 = vsel %vm1313, %v3527, 0
      %v3763 = vsel %vm1313, %v3537, 0
      %v3766 = vsel %vm1313, %v3547, 0
      %v3769 = vsel %vm1313, %v3557, 0
      %v3772 = vsel %vm1313, %v3567, 0
      %v3775 = vsel %vm1313, %v3577, 0
      %v3778 = vsel %vm1313, %v3587, 0
      %3780 = vmatpush.msra.mxu0 0.0
      %3781 = vmatpush.msra.mxu0 0.0
      %3782 = vmatpush.msra.mxu0 0.0
      %3783 = vmatpush.msra.mxu0 0.0
      %3784 = vmatpush.msra.mxu0 0.0
      %3785 = vmatpush.msra.mxu0 0.0
      %3786 = vmatpush.msra.mxu0 0.0
      %3787 = vmatpush.msra.mxu0 0.0
      %3788 = vmatpush.msra.mxu0 0.0
      %3789 = vmatpush.msra.mxu0 0.0
      %3790 = vmatpush.msra.mxu0 0.0
      %3791 = vmatpush.msra.mxu0 0.0
      %3792 = vmatpush.msra.mxu0 0.0
      %3793 = vmatpush.msra.mxu0 0.0
      %3794 = vmatpush.msra.mxu0 %v398
      %3795 = vmatpush.msra.mxu0 %v397
      %3796 = vmatmul.f32.gmra.mxu0 %v3589
      %v3797 = vpop.f32.mrf.mxu0
      %v3798 = vadd.f32 0.0, %v3797
      %3799 = vmatmul.f32.gmra.mxu0 %v3592
      %v3800 = vpop.f32.mrf.mxu0
      %v3801 = vadd.f32 0.0, %v3800
      %3802 = vmatmul.f32.gmra.mxu0 %v3595
      %v3803 = vpop.f32.mrf.mxu0
      %v3804 = vadd.f32 0.0, %v3803
      %3805 = vmatmul.f32.gmra.mxu0 %v3598
      %v3806 = vpop.f32.mrf.mxu0
      %v3807 = vadd.f32 0.0, %v3806
      %3808 = vmatmul.f32.gmra.mxu0 %v3601
      %v3809 = vpop.f32.mrf.mxu0
      %v3810 = vadd.f32 0.0, %v3809
      %3811 = vmatmul.f32.gmra.mxu0 %v3604
      %v3812 = vpop.f32.mrf.mxu0
      %v3813 = vadd.f32 0.0, %v3812
      %3814 = vmatmul.f32.gmra.mxu0 %v3607
      %v3815 = vpop.f32.mrf.mxu0
      %v3816 = vadd.f32 0.0, %v3815
      %3817 = vmatmul.f32.gmra.mxu0 %v3610
      %v3818 = vpop.f32.mrf.mxu0
      %v3819 = vadd.f32 0.0, %v3818
      %3820 = vmatmul.f32.gmra.mxu0 %v3613
      %v3821 = vpop.f32.mrf.mxu0
      %v3822 = vadd.f32 0.0, %v3821
      %3823 = vmatmul.f32.gmra.mxu0 %v3616
      %v3824 = vpop.f32.mrf.mxu0
      %v3825 = vadd.f32 0.0, %v3824
      %3826 = vmatmul.f32.gmra.mxu0 %v3619
      %v3827 = vpop.f32.mrf.mxu0
      %v3828 = vadd.f32 0.0, %v3827
      %3829 = vmatmul.f32.gmra.mxu0 %v3622
      %v3830 = vpop.f32.mrf.mxu0
      %v3831 = vadd.f32 0.0, %v3830
      %3832 = vmatmul.f32.gmra.mxu0 %v3625
      %v3833 = vpop.f32.mrf.mxu0
      %v3834 = vadd.f32 0.0, %v3833
      %3835 = vmatmul.f32.gmra.mxu0 %v3628
      %v3836 = vpop.f32.mrf.mxu0
      %v3837 = vadd.f32 0.0, %v3836
      %3838 = vmatmul.f32.gmra.mxu0 %v3631
      %v3839 = vpop.f32.mrf.mxu0
      %v3840 = vadd.f32 0.0, %v3839
      %3841 = vmatmul.f32.gmra.mxu0 %v3634
      %v3842 = vpop.f32.mrf.mxu0
      %v3843 = vadd.f32 0.0, %v3842
      %3844 = vmatmul.f32.gmra.mxu0 %v3637
      %v3845 = vpop.f32.mrf.mxu0
      %v3846 = vadd.f32 0.0, %v3845
      %3847 = vmatmul.f32.gmra.mxu0 %v3640
      %v3848 = vpop.f32.mrf.mxu0
      %v3849 = vadd.f32 0.0, %v3848
      %3850 = vmatmul.f32.gmra.mxu0 %v3643
      %v3851 = vpop.f32.mrf.mxu0
      %v3852 = vadd.f32 0.0, %v3851
      %3853 = vmatmul.f32.gmra.mxu0 %v3646
      %v3854 = vpop.f32.mrf.mxu0
      %v3855 = vadd.f32 0.0, %v3854
      %3856 = vmatmul.f32.gmra.mxu0 %v3649
      %v3857 = vpop.f32.mrf.mxu0
      %v3858 = vadd.f32 0.0, %v3857
      %3859 = vmatmul.f32.gmra.mxu0 %v3652
      %v3860 = vpop.f32.mrf.mxu0
      %v3861 = vadd.f32 0.0, %v3860
      %3862 = vmatmul.f32.gmra.mxu0 %v3655
      %v3863 = vpop.f32.mrf.mxu0
      %v3864 = vadd.f32 0.0, %v3863
      %3865 = vmatmul.f32.gmra.mxu0 %v3658
      %v3866 = vpop.f32.mrf.mxu0
      %v3867 = vadd.f32 0.0, %v3866
      %3868 = vmatmul.f32.gmra.mxu0 %v3661
      %v3869 = vpop.f32.mrf.mxu0
      %v3870 = vadd.f32 0.0, %v3869
      %3871 = vmatmul.f32.gmra.mxu0 %v3664
      %v3872 = vpop.f32.mrf.mxu0
      %v3873 = vadd.f32 0.0, %v3872
      %3874 = vmatmul.f32.gmra.mxu0 %v3667
      %v3875 = vpop.f32.mrf.mxu0
      %v3876 = vadd.f32 0.0, %v3875
      %3877 = vmatmul.f32.gmra.mxu0 %v3670
      %v3878 = vpop.f32.mrf.mxu0
      %v3879 = vadd.f32 0.0, %v3878
      %3880 = vmatmul.f32.gmra.mxu0 %v3673
      %v3881 = vpop.f32.mrf.mxu0
      %v3882 = vadd.f32 0.0, %v3881
      %3883 = vmatmul.f32.gmra.mxu0 %v3676
      %v3884 = vpop.f32.mrf.mxu0
      %v3885 = vadd.f32 0.0, %v3884
      %3886 = vmatmul.f32.gmra.mxu0 %v3679
      %v3887 = vpop.f32.mrf.mxu0
      %v3888 = vadd.f32 0.0, %v3887
      %3889 = vmatmul.f32.gmra.mxu0 %v3682
      %v3890 = vpop.f32.mrf.mxu0
      %v3891 = vadd.f32 0.0, %v3890
      %3892 = vmatmul.f32.gmra.mxu0 %v3685
      %v3893 = vpop.f32.mrf.mxu0
      %v3894 = vadd.f32 0.0, %v3893
      %3895 = vmatmul.f32.gmra.mxu0 %v3688
      %v3896 = vpop.f32.mrf.mxu0
      %v3897 = vadd.f32 0.0, %v3896
      %3898 = vmatmul.f32.gmra.mxu0 %v3691
      %v3899 = vpop.f32.mrf.mxu0
      %v3900 = vadd.f32 0.0, %v3899
      %3901 = vmatmul.f32.gmra.mxu0 %v3694
      %v3902 = vpop.f32.mrf.mxu0
      %v3903 = vadd.f32 0.0, %v3902
      %3904 = vmatmul.f32.gmra.mxu0 %v3697
      %v3905 = vpop.f32.mrf.mxu0
      %v3906 = vadd.f32 0.0, %v3905
      %3907 = vmatmul.f32.gmra.mxu0 %v3700
      %v3908 = vpop.f32.mrf.mxu0
      %v3909 = vadd.f32 0.0, %v3908
      %3910 = vmatmul.f32.gmra.mxu0 %v3703
      %v3911 = vpop.f32.mrf.mxu0
      %v3912 = vadd.f32 0.0, %v3911
      %3913 = vmatmul.f32.gmra.mxu0 %v3706
      %v3914 = vpop.f32.mrf.mxu0
      %v3915 = vadd.f32 0.0, %v3914
      %3916 = vmatmul.f32.gmra.mxu0 %v3709
      %v3917 = vpop.f32.mrf.mxu0
      %v3918 = vadd.f32 0.0, %v3917
      %3919 = vmatmul.f32.gmra.mxu0 %v3712
      %v3920 = vpop.f32.mrf.mxu0
      %v3921 = vadd.f32 0.0, %v3920
      %3922 = vmatmul.f32.gmra.mxu0 %v3715
      %v3923 = vpop.f32.mrf.mxu0
      %v3924 = vadd.f32 0.0, %v3923
      %3925 = vmatmul.f32.gmra.mxu0 %v3718
      %v3926 = vpop.f32.mrf.mxu0
      %v3927 = vadd.f32 0.0, %v3926
      %3928 = vmatmul.f32.gmra.mxu0 %v3721
      %v3929 = vpop.f32.mrf.mxu0
      %v3930 = vadd.f32 0.0, %v3929
      %3931 = vmatmul.f32.gmra.mxu0 %v3724
      %v3932 = vpop.f32.mrf.mxu0
      %v3933 = vadd.f32 0.0, %v3932
      %3934 = vmatmul.f32.gmra.mxu0 %v3727
      %v3935 = vpop.f32.mrf.mxu0
      %v3936 = vadd.f32 0.0, %v3935
      %3937 = vmatmul.f32.gmra.mxu0 %v3730
      %v3938 = vpop.f32.mrf.mxu0
      %v3939 = vadd.f32 0.0, %v3938
      %3940 = vmatmul.f32.gmra.mxu0 %v3733
      %v3941 = vpop.f32.mrf.mxu0
      %v3942 = vadd.f32 0.0, %v3941
      %3943 = vmatmul.f32.gmra.mxu0 %v3736
      %v3944 = vpop.f32.mrf.mxu0
      %v3945 = vadd.f32 0.0, %v3944
      %3946 = vmatmul.f32.gmra.mxu0 %v3739
      %v3947 = vpop.f32.mrf.mxu0
      %v3948 = vadd.f32 0.0, %v3947
      %3949 = vmatmul.f32.gmra.mxu0 %v3742
      %v3950 = vpop.f32.mrf.mxu0
      %v3951 = vadd.f32 0.0, %v3950
      %3952 = vmatmul.f32.gmra.mxu0 %v3745
      %v3953 = vpop.f32.mrf.mxu0
      %v3954 = vadd.f32 0.0, %v3953
      %3955 = vmatmul.f32.gmra.mxu0 %v3748
      %v3956 = vpop.f32.mrf.mxu0
      %v3957 = vadd.f32 0.0, %v3956
      %3958 = vmatmul.f32.gmra.mxu0 %v3751
      %v3959 = vpop.f32.mrf.mxu0
      %v3960 = vadd.f32 0.0, %v3959
      %3961 = vmatmul.f32.gmra.mxu0 %v3754
      %v3962 = vpop.f32.mrf.mxu0
      %v3963 = vadd.f32 0.0, %v3962
      %3964 = vmatmul.f32.gmra.mxu0 %v3757
      %v3965 = vpop.f32.mrf.mxu0
      %v3966 = vadd.f32 0.0, %v3965
      %3967 = vmatmul.f32.gmra.mxu0 %v3760
      %v3968 = vpop.f32.mrf.mxu0
      %v3969 = vadd.f32 0.0, %v3968
      %3970 = vmatmul.f32.gmra.mxu0 %v3763
      %v3971 = vpop.f32.mrf.mxu0
      %v3972 = vadd.f32 0.0, %v3971
      %3973 = vmatmul.f32.gmra.mxu0 %v3766
      %v3974 = vpop.f32.mrf.mxu0
      %v3975 = vadd.f32 0.0, %v3974
      %3976 = vmatmul.f32.gmra.mxu0 %v3769
      %v3977 = vpop.f32.mrf.mxu0
      %v3978 = vadd.f32 0.0, %v3977
      %3979 = vmatmul.f32.gmra.mxu0 %v3772
      %v3980 = vpop.f32.mrf.mxu0
      %v3981 = vadd.f32 0.0, %v3980
      %3982 = vmatmul.f32.gmra.mxu0 %v3775
      %v3983 = vpop.f32.mrf.mxu0
      %v3984 = vadd.f32 0.0, %v3983
      %3985 = vmatmul.f32.gmra.mxu0 %v3778
      %v3986 = vpop.f32.mrf.mxu0
      %v3987 = vadd.f32 0.0, %v3986
      %3988 = vdwg.mxu0
      %v3989 = vmul.f32 %v1715, %v3798
      %v3990 = vmul.f32 %v1716, %v3798
      %v3991 = vmul.f32 %v1717, %v3801
      %v3992 = vmul.f32 %v1718, %v3801
      %v3993 = vmul.f32 %v1719, %v3804
      %v3994 = vmul.f32 %v1720, %v3804
      %v3995 = vmul.f32 %v1721, %v3807
      %v3996 = vmul.f32 %v1722, %v3807
      %v3997 = vmul.f32 %v1723, %v3810
      %v3998 = vmul.f32 %v1724, %v3810
      %v3999 = vmul.f32 %v1725, %v3813
      %v4000 = vmul.f32 %v1726, %v3813
      %v4001 = vmul.f32 %v1727, %v3816
      %v4002 = vmul.f32 %v1728, %v3816
      %v4003 = vmul.f32 %v1729, %v3819
      %v4004 = vmul.f32 %v1730, %v3819
      %v4005 = vmul.f32 %v1731, %v3822
      %v4006 = vmul.f32 %v1732, %v3822
      %v4007 = vmul.f32 %v1733, %v3825
      %v4008 = vmul.f32 %v1734, %v3825
      %v4009 = vmul.f32 %v1735, %v3828
      %v4010 = vmul.f32 %v1736, %v3828
      %v4011 = vmul.f32 %v1737, %v3831
      %v4012 = vmul.f32 %v1738, %v3831
      %v4013 = vmul.f32 %v1739, %v3834
      %v4014 = vmul.f32 %v1740, %v3834
      %v4015 = vmul.f32 %v1741, %v3837
      %v4016 = vmul.f32 %v1742, %v3837
      %v4017 = vmul.f32 %v1743, %v3840
      %v4018 = vmul.f32 %v1744, %v3840
      %v4019 = vmul.f32 %v1745, %v3843
      %v4020 = vmul.f32 %v1746, %v3843
      %v4021 = vmul.f32 %v1747, %v3846
      %v4022 = vmul.f32 %v1748, %v3846
      %v4023 = vmul.f32 %v1749, %v3849
      %v4024 = vmul.f32 %v1750, %v3849
      %v4025 = vmul.f32 %v1751, %v3852
      %v4026 = vmul.f32 %v1752, %v3852
      %v4027 = vmul.f32 %v1753, %v3855
      %v4028 = vmul.f32 %v1754, %v3855
      %v4029 = vmul.f32 %v1755, %v3858
      %v4030 = vmul.f32 %v1756, %v3858
      %v4031 = vmul.f32 %v1757, %v3861
      %v4032 = vmul.f32 %v1758, %v3861
      %v4033 = vmul.f32 %v1759, %v3864
      %v4034 = vmul.f32 %v1760, %v3864
      %v4035 = vmul.f32 %v1761, %v3867
      %v4036 = vmul.f32 %v1762, %v3867
      %v4037 = vmul.f32 %v1763, %v3870
      %v4038 = vmul.f32 %v1764, %v3870
      %v4039 = vmul.f32 %v1765, %v3873
      %v4040 = vmul.f32 %v1766, %v3873
      %v4041 = vmul.f32 %v1767, %v3876
      %v4042 = vmul.f32 %v1768, %v3876
      %v4043 = vmul.f32 %v1769, %v3879
      %v4044 = vmul.f32 %v1770, %v3879
      %v4045 = vmul.f32 %v1771, %v3882
      %v4046 = vmul.f32 %v1772, %v3882
      %v4047 = vmul.f32 %v1773, %v3885
      %v4048 = vmul.f32 %v1774, %v3885
      %v4049 = vmul.f32 %v1775, %v3888
      %v4050 = vmul.f32 %v1776, %v3888
      %v4051 = vmul.f32 %v1777, %v3891
      %v4052 = vmul.f32 %v1778, %v3891
      %v4053 = vmul.f32 %v1779, %v3894
      %v4054 = vmul.f32 %v1780, %v3894
      %v4055 = vmul.f32 %v1781, %v3897
      %v4056 = vmul.f32 %v1782, %v3897
      %v4057 = vmul.f32 %v1783, %v3900
      %v4058 = vmul.f32 %v1784, %v3900
      %v4059 = vmul.f32 %v1785, %v3903
      %v4060 = vmul.f32 %v1786, %v3903
      %v4061 = vmul.f32 %v1787, %v3906
      %v4062 = vmul.f32 %v1788, %v3906
      %v4063 = vmul.f32 %v1789, %v3909
      %v4064 = vmul.f32 %v1790, %v3909
      %v4065 = vmul.f32 %v1791, %v3912
      %v4066 = vmul.f32 %v1792, %v3912
      %v4067 = vmul.f32 %v1793, %v3915
      %v4068 = vmul.f32 %v1794, %v3915
      %v4069 = vmul.f32 %v1795, %v3918
      %v4070 = vmul.f32 %v1796, %v3918
      %v4071 = vmul.f32 %v1797, %v3921
      %v4072 = vmul.f32 %v1798, %v3921
      %v4073 = vmul.f32 %v1799, %v3924
      %v4074 = vmul.f32 %v1800, %v3924
      %v4075 = vmul.f32 %v1801, %v3927
      %v4076 = vmul.f32 %v1802, %v3927
      %v4077 = vmul.f32 %v1803, %v3930
      %v4078 = vmul.f32 %v1804, %v3930
      %v4079 = vmul.f32 %v1805, %v3933
      %v4080 = vmul.f32 %v1806, %v3933
      %v4081 = vmul.f32 %v1807, %v3936
      %v4082 = vmul.f32 %v1808, %v3936
      %v4083 = vmul.f32 %v1809, %v3939
      %v4084 = vmul.f32 %v1810, %v3939
      %v4085 = vmul.f32 %v1811, %v3942
      %v4086 = vmul.f32 %v1812, %v3942
      %v4087 = vmul.f32 %v1813, %v3945
      %v4088 = vmul.f32 %v1814, %v3945
      %v4089 = vmul.f32 %v1815, %v3948
      %v4090 = vmul.f32 %v1816, %v3948
      %v4091 = vmul.f32 %v1817, %v3951
      %v4092 = vmul.f32 %v1818, %v3951
      %v4093 = vmul.f32 %v1819, %v3954
      %v4094 = vmul.f32 %v1820, %v3954
      %v4095 = vmul.f32 %v1821, %v3957
      %v4096 = vmul.f32 %v1822, %v3957
      %v4097 = vmul.f32 %v1823, %v3960
      %v4098 = vmul.f32 %v1824, %v3960
      %v4099 = vmul.f32 %v1825, %v3963
      %v4100 = vmul.f32 %v1826, %v3963
      %v4101 = vmul.f32 %v1827, %v3966
      %v4102 = vmul.f32 %v1828, %v3966
      %v4103 = vmul.f32 %v1829, %v3969
      %v4104 = vmul.f32 %v1830, %v3969
      %v4105 = vmul.f32 %v1831, %v3972
      %v4106 = vmul.f32 %v1832, %v3972
      %v4107 = vmul.f32 %v1833, %v3975
      %v4108 = vmul.f32 %v1834, %v3975
      %v4109 = vmul.f32 %v1835, %v3978
      %v4110 = vmul.f32 %v1836, %v3978
      %v4111 = vmul.f32 %v1837, %v3981
      %v4112 = vmul.f32 %v1838, %v3981
      %v4113 = vmul.f32 %v1839, %v3984
      %v4114 = vmul.f32 %v1840, %v3984
      %v4115 = vmul.f32 %v1841, %v3987
      %v4116 = vmul.f32 %v1842, %v3987
      %v4117 = vld [vmem:[%s3] sm:$0xff]
      %v4118 = vld [vmem:[%s3 + $0x8] sm:$0xff]
      %v4119 = vmul.f32 %v3989, %v4117
      %v4120 = vmul.f32 %v3990, %v4118
      %v4121 = vmul.f32 %v3991, %v4117
      %v4122 = vmul.f32 %v3992, %v4118
      %v4123 = vmul.f32 %v3993, %v4117
      %v4124 = vmul.f32 %v3994, %v4118
      %v4125 = vmul.f32 %v3995, %v4117
      %v4126 = vmul.f32 %v3996, %v4118
      %v4127 = vmul.f32 %v3997, %v4117
      %v4128 = vmul.f32 %v3998, %v4118
      %v4129 = vmul.f32 %v3999, %v4117
      %v4130 = vmul.f32 %v4000, %v4118
      %v4131 = vmul.f32 %v4001, %v4117
      %v4132 = vmul.f32 %v4002, %v4118
      %v4133 = vmul.f32 %v4003, %v4117
      %v4134 = vmul.f32 %v4004, %v4118
      %v4135 = vmul.f32 %v4005, %v4117
      %v4136 = vmul.f32 %v4006, %v4118
      %v4137 = vmul.f32 %v4007, %v4117
      %v4138 = vmul.f32 %v4008, %v4118
      %v4139 = vmul.f32 %v4009, %v4117
      %v4140 = vmul.f32 %v4010, %v4118
      %v4141 = vmul.f32 %v4011, %v4117
      %v4142 = vmul.f32 %v4012, %v4118
      %v4143 = vmul.f32 %v4013, %v4117
      %v4144 = vmul.f32 %v4014, %v4118
      %v4145 = vmul.f32 %v4015, %v4117
      %v4146 = vmul.f32 %v4016, %v4118
      %v4147 = vmul.f32 %v4017, %v4117
      %v4148 = vmul.f32 %v4018, %v4118
      %v4149 = vmul.f32 %v4019, %v4117
      %v4150 = vmul.f32 %v4020, %v4118
      %v4151 = vmul.f32 %v4021, %v4117
      %v4152 = vmul.f32 %v4022, %v4118
      %v4153 = vmul.f32 %v4023, %v4117
      %v4154 = vmul.f32 %v4024, %v4118
      %v4155 = vmul.f32 %v4025, %v4117
      %v4156 = vmul.f32 %v4026, %v4118
      %v4157 = vmul.f32 %v4027, %v4117
      %v4158 = vmul.f32 %v4028, %v4118
      %v4159 = vmul.f32 %v4029, %v4117
      %v4160 = vmul.f32 %v4030, %v4118
      %v4161 = vmul.f32 %v4031, %v4117
      %v4162 = vmul.f32 %v4032, %v4118
      %v4163 = vmul.f32 %v4033, %v4117
      %v4164 = vmul.f32 %v4034, %v4118
      %v4165 = vmul.f32 %v4035, %v4117
      %v4166 = vmul.f32 %v4036, %v4118
      %v4167 = vmul.f32 %v4037, %v4117
      %v4168 = vmul.f32 %v4038, %v4118
      %v4169 = vmul.f32 %v4039, %v4117
      %v4170 = vmul.f32 %v4040, %v4118
      %v4171 = vmul.f32 %v4041, %v4117
      %v4172 = vmul.f32 %v4042, %v4118
      %v4173 = vmul.f32 %v4043, %v4117
      %v4174 = vmul.f32 %v4044, %v4118
      %v4175 = vmul.f32 %v4045, %v4117
      %v4176 = vmul.f32 %v4046, %v4118
      %v4177 = vmul.f32 %v4047, %v4117
      %v4178 = vmul.f32 %v4048, %v4118
      %v4179 = vmul.f32 %v4049, %v4117
      %v4180 = vmul.f32 %v4050, %v4118
      %v4181 = vmul.f32 %v4051, %v4117
      %v4182 = vmul.f32 %v4052, %v4118
      %v4183 = vmul.f32 %v4053, %v4117
      %v4184 = vmul.f32 %v4054, %v4118
      %v4185 = vmul.f32 %v4055, %v4117
      %v4186 = vmul.f32 %v4056, %v4118
      %v4187 = vmul.f32 %v4057, %v4117
      %v4188 = vmul.f32 %v4058, %v4118
      %v4189 = vmul.f32 %v4059, %v4117
      %v4190 = vmul.f32 %v4060, %v4118
      %v4191 = vmul.f32 %v4061, %v4117
      %v4192 = vmul.f32 %v4062, %v4118
      %v4193 = vmul.f32 %v4063, %v4117
      %v4194 = vmul.f32 %v4064, %v4118
      %v4195 = vmul.f32 %v4065, %v4117
      %v4196 = vmul.f32 %v4066, %v4118
      %v4197 = vmul.f32 %v4067, %v4117
      %v4198 = vmul.f32 %v4068, %v4118
      %v4199 = vmul.f32 %v4069, %v4117
      %v4200 = vmul.f32 %v4070, %v4118
      %v4201 = vmul.f32 %v4071, %v4117
      %v4202 = vmul.f32 %v4072, %v4118
      %v4203 = vmul.f32 %v4073, %v4117
      %v4204 = vmul.f32 %v4074, %v4118
      %v4205 = vmul.f32 %v4075, %v4117
      %v4206 = vmul.f32 %v4076, %v4118
      %v4207 = vmul.f32 %v4077, %v4117
      %v4208 = vmul.f32 %v4078, %v4118
      %v4209 = vmul.f32 %v4079, %v4117
      %v4210 = vmul.f32 %v4080, %v4118
      %v4211 = vmul.f32 %v4081, %v4117
      %v4212 = vmul.f32 %v4082, %v4118
      %v4213 = vmul.f32 %v4083, %v4117
      %v4214 = vmul.f32 %v4084, %v4118
      %v4215 = vmul.f32 %v4085, %v4117
      %v4216 = vmul.f32 %v4086, %v4118
      %v4217 = vmul.f32 %v4087, %v4117
      %v4218 = vmul.f32 %v4088, %v4118
      %v4219 = vmul.f32 %v4089, %v4117
      %v4220 = vmul.f32 %v4090, %v4118
      %v4221 = vmul.f32 %v4091, %v4117
      %v4222 = vmul.f32 %v4092, %v4118
      %v4223 = vmul.f32 %v4093, %v4117
      %v4224 = vmul.f32 %v4094, %v4118
      %v4225 = vmul.f32 %v4095, %v4117
      %v4226 = vmul.f32 %v4096, %v4118
      %v4227 = vmul.f32 %v4097, %v4117
      %v4228 = vmul.f32 %v4098, %v4118
      %v4229 = vmul.f32 %v4099, %v4117
      %v4230 = vmul.f32 %v4100, %v4118
      %v4231 = vmul.f32 %v4101, %v4117
      %v4232 = vmul.f32 %v4102, %v4118
      %v4233 = vmul.f32 %v4103, %v4117
      %v4234 = vmul.f32 %v4104, %v4118
      %v4235 = vmul.f32 %v4105, %v4117
      %v4236 = vmul.f32 %v4106, %v4118
      %v4237 = vmul.f32 %v4107, %v4117
      %v4238 = vmul.f32 %v4108, %v4118
      %v4239 = vmul.f32 %v4109, %v4117
      %v4240 = vmul.f32 %v4110, %v4118
      %v4241 = vmul.f32 %v4111, %v4117
      %v4242 = vmul.f32 %v4112, %v4118
      %v4243 = vmul.f32 %v4113, %v4117
      %v4244 = vmul.f32 %v4114, %v4118
      %v4245 = vmul.f32 %v4115, %v4117
      %v4246 = vmul.f32 %v4116, %v4118
      %v4247 = vpack.c.bf16 %v4119, %v4119
      %v4248 = vpack.c.bf16 %v4120, %v4120
      %v4249 = vpack.c.bf16 %v4121, %v4121
      %v4250 = vpack.c.bf16 %v4122, %v4122
      %v4251 = vpack.c.bf16 %v4123, %v4123
      %v4252 = vpack.c.bf16 %v4124, %v4124
      %v4253 = vpack.c.bf16 %v4125, %v4125
      %v4254 = vpack.c.bf16 %v4126, %v4126
      %v4255 = vpack.c.bf16 %v4127, %v4127
      %v4256 = vpack.c.bf16 %v4128, %v4128
      %v4257 = vpack.c.bf16 %v4129, %v4129
      %v4258 = vpack.c.bf16 %v4130, %v4130
      %v4259 = vpack.c.bf16 %v4131, %v4131
      %v4260 = vpack.c.bf16 %v4132, %v4132
      %v4261 = vpack.c.bf16 %v4133, %v4133
      %v4262 = vpack.c.bf16 %v4134, %v4134
      %v4263 = vpack.c.bf16 %v4135, %v4135
      %v4264 = vpack.c.bf16 %v4136, %v4136
      %v4265 = vpack.c.bf16 %v4137, %v4137
      %v4266 = vpack.c.bf16 %v4138, %v4138
      %v4267 = vpack.c.bf16 %v4139, %v4139
      %v4268 = vpack.c.bf16 %v4140, %v4140
      %v4269 = vpack.c.bf16 %v4141, %v4141
      %v4270 = vpack.c.bf16 %v4142, %v4142
      %v4271 = vpack.c.bf16 %v4143, %v4143
      %v4272 = vpack.c.bf16 %v4144, %v4144
      %v4273 = vpack.c.bf16 %v4145, %v4145
      %v4274 = vpack.c.bf16 %v4146, %v4146
      %v4275 = vpack.c.bf16 %v4147, %v4147
      %v4276 = vpack.c.bf16 %v4148, %v4148
      %v4277 = vpack.c.bf16 %v4149, %v4149
      %v4278 = vpack.c.bf16 %v4150, %v4150
      %v4279 = vpack.c.bf16 %v4151, %v4151
      %v4280 = vpack.c.bf16 %v4152, %v4152
      %v4281 = vpack.c.bf16 %v4153, %v4153
      %v4282 = vpack.c.bf16 %v4154, %v4154
      %v4283 = vpack.c.bf16 %v4155, %v4155
      %v4284 = vpack.c.bf16 %v4156, %v4156
      %v4285 = vpack.c.bf16 %v4157, %v4157
      %v4286 = vpack.c.bf16 %v4158, %v4158
      %v4287 = vpack.c.bf16 %v4159, %v4159
      %v4288 = vpack.c.bf16 %v4160, %v4160
      %v4289 = vpack.c.bf16 %v4161, %v4161
      %v4290 = vpack.c.bf16 %v4162, %v4162
      %v4291 = vpack.c.bf16 %v4163, %v4163
      %v4292 = vpack.c.bf16 %v4164, %v4164
      %v4293 = vpack.c.bf16 %v4165, %v4165
      %v4294 = vpack.c.bf16 %v4166, %v4166
      %v4295 = vpack.c.bf16 %v4167, %v4167
      %v4296 = vpack.c.bf16 %v4168, %v4168
      %v4297 = vpack.c.bf16 %v4169, %v4169
      %v4298 = vpack.c.bf16 %v4170, %v4170
      %v4299 = vpack.c.bf16 %v4171, %v4171
      %v4300 = vpack.c.bf16 %v4172, %v4172
      %v4301 = vpack.c.bf16 %v4173, %v4173
      %v4302 = vpack.c.bf16 %v4174, %v4174
      %v4303 = vpack.c.bf16 %v4175, %v4175
      %v4304 = vpack.c.bf16 %v4176, %v4176
      %v4305 = vpack.c.bf16 %v4177, %v4177
      %v4306 = vpack.c.bf16 %v4178, %v4178
      %v4307 = vpack.c.bf16 %v4179, %v4179
      %v4308 = vpack.c.bf16 %v4180, %v4180
      %v4309 = vpack.c.bf16 %v4181, %v4181
      %v4310 = vpack.c.bf16 %v4182, %v4182
      %v4311 = vpack.c.bf16 %v4183, %v4183
      %v4312 = vpack.c.bf16 %v4184, %v4184
      %v4313 = vpack.c.bf16 %v4185, %v4185
      %v4314 = vpack.c.bf16 %v4186, %v4186
      %v4315 = vpack.c.bf16 %v4187, %v4187
      %v4316 = vpack.c.bf16 %v4188, %v4188
      %v4317 = vpack.c.bf16 %v4189, %v4189
      %v4318 = vpack.c.bf16 %v4190, %v4190
      %v4319 = vpack.c.bf16 %v4191, %v4191
      %v4320 = vpack.c.bf16 %v4192, %v4192
      %v4321 = vpack.c.bf16 %v4193, %v4193
      %v4322 = vpack.c.bf16 %v4194, %v4194
      %v4323 = vpack.c.bf16 %v4195, %v4195
      %v4324 = vpack.c.bf16 %v4196, %v4196
      %v4325 = vpack.c.bf16 %v4197, %v4197
      %v4326 = vpack.c.bf16 %v4198, %v4198
      %v4327 = vpack.c.bf16 %v4199, %v4199
      %v4328 = vpack.c.bf16 %v4200, %v4200
      %v4329 = vpack.c.bf16 %v4201, %v4201
      %v4330 = vpack.c.bf16 %v4202, %v4202
      %v4331 = vpack.c.bf16 %v4203, %v4203
      %v4332 = vpack.c.bf16 %v4204, %v4204
      %v4333 = vpack.c.bf16 %v4205, %v4205
      %v4334 = vpack.c.bf16 %v4206, %v4206
      %v4335 = vpack.c.bf16 %v4207, %v4207
      %v4336 = vpack.c.bf16 %v4208, %v4208
      %v4337 = vpack.c.bf16 %v4209, %v4209
      %v4338 = vpack.c.bf16 %v4210, %v4210
      %v4339 = vpack.c.bf16 %v4211, %v4211
      %v4340 = vpack.c.bf16 %v4212, %v4212
      %v4341 = vpack.c.bf16 %v4213, %v4213
      %v4342 = vpack.c.bf16 %v4214, %v4214
      %v4343 = vpack.c.bf16 %v4215, %v4215
      %v4344 = vpack.c.bf16 %v4216, %v4216
      %v4345 = vpack.c.bf16 %v4217, %v4217
      %v4346 = vpack.c.bf16 %v4218, %v4218
      %v4347 = vpack.c.bf16 %v4219, %v4219
      %v4348 = vpack.c.bf16 %v4220, %v4220
      %v4349 = vpack.c.bf16 %v4221, %v4221
      %v4350 = vpack.c.bf16 %v4222, %v4222
      %v4351 = vpack.c.bf16 %v4223, %v4223
      %v4352 = vpack.c.bf16 %v4224, %v4224
      %v4353 = vpack.c.bf16 %v4225, %v4225
      %v4354 = vpack.c.bf16 %v4226, %v4226
      %v4355 = vpack.c.bf16 %v4227, %v4227
      %v4356 = vpack.c.bf16 %v4228, %v4228
      %v4357 = vpack.c.bf16 %v4229, %v4229
      %v4358 = vpack.c.bf16 %v4230, %v4230
      %v4359 = vpack.c.bf16 %v4231, %v4231
      %v4360 = vpack.c.bf16 %v4232, %v4232
      %v4361 = vpack.c.bf16 %v4233, %v4233
      %v4362 = vpack.c.bf16 %v4234, %v4234
      %v4363 = vpack.c.bf16 %v4235, %v4235
      %v4364 = vpack.c.bf16 %v4236, %v4236
      %v4365 = vpack.c.bf16 %v4237, %v4237
      %v4366 = vpack.c.bf16 %v4238, %v4238
      %v4367 = vpack.c.bf16 %v4239, %v4239
      %v4368 = vpack.c.bf16 %v4240, %v4240
      %v4369 = vpack.c.bf16 %v4241, %v4241
      %v4370 = vpack.c.bf16 %v4242, %v4242
      %v4371 = vpack.c.bf16 %v4243, %v4243
      %v4372 = vpack.c.bf16 %v4244, %v4244
      %v4373 = vpack.c.bf16 %v4245, %v4245
      %v4374 = vpack.c.bf16 %v4246, %v4246
      %v4375 = vld [vmem:[%s4] sm:$0xf]
      %v4376 = vld [vmem:[%s4 + $0x4] sm:$0xf]
      %v4377 = vld [vmem:[%s5] sm:$0xff]
      %v4378 = vld [vmem:[%s5 + $0x8] sm:$0xff]
      %v4381 = vunpack.c.l.b16 %v4375
      %v4382 = vunpack.c.l.b16 %v4376
      %v4383 = vpack.c.b16 %v4382, %v4381
      %v4392 = vunpack.c.l.b16 %v4247
      %v4393 = vunpack.c.l.b16 %v4248
      %v4394 = vunpack.c.l.b16 %v4249
      %v4395 = vunpack.c.l.b16 %v4250
      %v4396 = vunpack.c.l.b16 %v4251
      %v4397 = vunpack.c.l.b16 %v4252
      %v4398 = vunpack.c.l.b16 %v4253
      %v4399 = vunpack.c.l.b16 %v4254
      %v4400 = vpack.c.b16 %v4393, %v4392
      %v4401 = vpack.c.b16 %v4395, %v4394
      %v4402 = vpack.c.b16 %v4397, %v4396
      %v4403 = vpack.c.b16 %v4399, %v4398
      %v4409 = vsel %vm399, %v4383, 0
      %4411 = vmatpush.bf16.msra.mxu0 0
      %4412 = vmatpush.bf16.msra.mxu0 0
      %4413 = vmatpush.bf16.msra.mxu0 0
      %4414 = vmatpush.bf16.msra.mxu0 0
      %4415 = vmatpush.bf16.msra.mxu0 %v4403
      %4416 = vmatpush.bf16.msra.mxu0 %v4402
      %4417 = vmatpush.bf16.msra.mxu0 %v4401
      %4418 = vmatpush.bf16.msra.mxu0 %v4400
      %4419 = vmatmul.bf16.gmra.mxu0 %v4409
      %v4420 = vpop.f32.mrf.mxu0
      %v4421 = vadd.f32 %v4377, %v4420
      %v4422 = vpop.f32.mrf.mxu0
      %v4423 = vadd.f32 %v4378, %v4422
      %4424 = vdwg.mxu0
      %4425 = vst.msk [vmem:[%s258] sm:$0xff] %vm399, %v4421
      %4426 = vst.msk [vmem:[%s258 + $0x8] sm:$0xff] %vm399, %v4423
      %v4435 = vunpack.c.l.b16 %v4255
      %v4436 = vunpack.c.l.b16 %v4256
      %v4437 = vunpack.c.l.b16 %v4257
      %v4438 = vunpack.c.l.b16 %v4258
      %v4439 = vunpack.c.l.b16 %v4259
      %v4440 = vunpack.c.l.b16 %v4260
      %v4441 = vunpack.c.l.b16 %v4261
      %v4442 = vunpack.c.l.b16 %v4262
      %v4443 = vpack.c.b16 %v4436, %v4435
      %v4444 = vpack.c.b16 %v4438, %v4437
      %v4445 = vpack.c.b16 %v4440, %v4439
      %v4446 = vpack.c.b16 %v4442, %v4441
      %4451 = vmatpush.bf16.msra.mxu0 0
      %4452 = vmatpush.bf16.msra.mxu0 0
      %4453 = vmatpush.bf16.msra.mxu0 0
      %4454 = vmatpush.bf16.msra.mxu0 0
      %4455 = vmatpush.bf16.msra.mxu0 %v4446
      %4456 = vmatpush.bf16.msra.mxu0 %v4445
      %4457 = vmatpush.bf16.msra.mxu0 %v4444
      %4458 = vmatpush.bf16.msra.mxu0 %v4443
      %4459 = vmatmul.bf16.gmra.mxu0 %v4409
      %v4460 = vpop.f32.mrf.mxu0
      %v4461 = vadd.f32 %v4377, %v4460
      %v4462 = vpop.f32.mrf.mxu0
      %v4463 = vadd.f32 %v4378, %v4462
      %4464 = vdwg.mxu0
      %s4465 = scalar_lea.vmem %s258, 16
      %4466 = vst.msk [vmem:[%s4465] sm:$0xff] %vm399, %v4461
      %4467 = vst.msk [vmem:[%s4465 + $0x8] sm:$0xff] %vm399, %v4463
      %v4476 = vunpack.c.l.b16 %v4263
      %v4477 = vunpack.c.l.b16 %v4264
      %v4478 = vunpack.c.l.b16 %v4265
      %v4479 = vunpack.c.l.b16 %v4266
      %v4480 = vunpack.c.l.b16 %v4267
      %v4481 = vunpack.c.l.b16 %v4268
      %v4482 = vunpack.c.l.b16 %v4269
      %v4483 = vunpack.c.l.b16 %v4270
      %v4484 = vpack.c.b16 %v4477, %v4476
      %v4485 = vpack.c.b16 %v4479, %v4478
      %v4486 = vpack.c.b16 %v4481, %v4480
      %v4487 = vpack.c.b16 %v4483, %v4482
      %4492 = vmatpush.bf16.msra.mxu0 0
      %4493 = vmatpush.bf16.msra.mxu0 0
      %4494 = vmatpush.bf16.msra.mxu0 0
      %4495 = vmatpush.bf16.msra.mxu0 0
      %4496 = vmatpush.bf16.msra.mxu0 %v4487
      %4497 = vmatpush.bf16.msra.mxu0 %v4486
      %4498 = vmatpush.bf16.msra.mxu0 %v4485
      %4499 = vmatpush.bf16.msra.mxu0 %v4484
      %4500 = vmatmul.bf16.gmra.mxu0 %v4409
      %v4501 = vpop.f32.mrf.mxu0
      %v4502 = vadd.f32 %v4377, %v4501
      %v4503 = vpop.f32.mrf.mxu0
      %v4504 = vadd.f32 %v4378, %v4503
      %4505 = vdwg.mxu0
      %s4506 = scalar_lea.vmem %s258, 32
      %4507 = vst.msk [vmem:[%s4506] sm:$0xff] %vm399, %v4502
      %4508 = vst.msk [vmem:[%s4506 + $0x8] sm:$0xff] %vm399, %v4504
      %v4517 = vunpack.c.l.b16 %v4271
      %v4518 = vunpack.c.l.b16 %v4272
      %v4519 = vunpack.c.l.b16 %v4273
      %v4520 = vunpack.c.l.b16 %v4274
      %v4521 = vunpack.c.l.b16 %v4275
      %v4522 = vunpack.c.l.b16 %v4276
      %v4523 = vunpack.c.l.b16 %v4277
      %v4524 = vunpack.c.l.b16 %v4278
      %v4525 = vpack.c.b16 %v4518, %v4517
      %v4526 = vpack.c.b16 %v4520, %v4519
      %v4527 = vpack.c.b16 %v4522, %v4521
      %v4528 = vpack.c.b16 %v4524, %v4523
      %4533 = vmatpush.bf16.msra.mxu0 0
      %4534 = vmatpush.bf16.msra.mxu0 0
      %4535 = vmatpush.bf16.msra.mxu0 0
      %4536 = vmatpush.bf16.msra.mxu0 0
      %4537 = vmatpush.bf16.msra.mxu0 %v4528
      %4538 = vmatpush.bf16.msra.mxu0 %v4527
      %4539 = vmatpush.bf16.msra.mxu0 %v4526
      %4540 = vmatpush.bf16.msra.mxu0 %v4525
      %4541 = vmatmul.bf16.gmra.mxu0 %v4409
      %v4542 = vpop.f32.mrf.mxu0
      %v4543 = vadd.f32 %v4377, %v4542
      %v4544 = vpop.f32.mrf.mxu0
      %v4545 = vadd.f32 %v4378, %v4544
      %4546 = vdwg.mxu0
      %s4547 = scalar_lea.vmem %s258, 48
      %4548 = vst.msk [vmem:[%s4547] sm:$0xff] %vm399, %v4543
      %4549 = vst.msk [vmem:[%s4547 + $0x8] sm:$0xff] %vm399, %v4545
      %v4558 = vunpack.c.l.b16 %v4279
      %v4559 = vunpack.c.l.b16 %v4280
      %v4560 = vunpack.c.l.b16 %v4281
      %v4561 = vunpack.c.l.b16 %v4282
      %v4562 = vunpack.c.l.b16 %v4283
      %v4563 = vunpack.c.l.b16 %v4284
      %v4564 = vunpack.c.l.b16 %v4285
      %v4565 = vunpack.c.l.b16 %v4286
      %v4566 = vpack.c.b16 %v4559, %v4558
      %v4567 = vpack.c.b16 %v4561, %v4560
      %v4568 = vpack.c.b16 %v4563, %v4562
      %v4569 = vpack.c.b16 %v4565, %v4564
      %4574 = vmatpush.bf16.msra.mxu0 0
      %4575 = vmatpush.bf16.msra.mxu0 0
      %4576 = vmatpush.bf16.msra.mxu0 0
      %4577 = vmatpush.bf16.msra.mxu0 0
      %4578 = vmatpush.bf16.msra.mxu0 %v4569
      %4579 = vmatpush.bf16.msra.mxu0 %v4568
      %4580 = vmatpush.bf16.msra.mxu0 %v4567
      %4581 = vmatpush.bf16.msra.mxu0 %v4566
      %4582 = vmatmul.bf16.gmra.mxu0 %v4409
      %v4583 = vpop.f32.mrf.mxu0
      %v4584 = vadd.f32 %v4377, %v4583
      %v4585 = vpop.f32.mrf.mxu0
      %v4586 = vadd.f32 %v4378, %v4585
      %4587 = vdwg.mxu0
      %s4588 = scalar_lea.vmem %s258, 64
      %4589 = vst.msk [vmem:[%s4588] sm:$0xff] %vm399, %v4584
      %4590 = vst.msk [vmem:[%s4588 + $0x8] sm:$0xff] %vm399, %v4586
      %v4599 = vunpack.c.l.b16 %v4287
      %v4600 = vunpack.c.l.b16 %v4288
      %v4601 = vunpack.c.l.b16 %v4289
      %v4602 = vunpack.c.l.b16 %v4290
      %v4603 = vunpack.c.l.b16 %v4291
      %v4604 = vunpack.c.l.b16 %v4292
      %v4605 = vunpack.c.l.b16 %v4293
      %v4606 = vunpack.c.l.b16 %v4294
      %v4607 = vpack.c.b16 %v4600, %v4599
      %v4608 = vpack.c.b16 %v4602, %v4601
      %v4609 = vpack.c.b16 %v4604, %v4603
      %v4610 = vpack.c.b16 %v4606, %v4605
      %4615 = vmatpush.bf16.msra.mxu0 0
      %4616 = vmatpush.bf16.msra.mxu0 0
      %4617 = vmatpush.bf16.msra.mxu0 0
      %4618 = vmatpush.bf16.msra.mxu0 0
      %4619 = vmatpush.bf16.msra.mxu0 %v4610
      %4620 = vmatpush.bf16.msra.mxu0 %v4609
      %4621 = vmatpush.bf16.msra.mxu0 %v4608
      %4622 = vmatpush.bf16.msra.mxu0 %v4607
      %4623 = vmatmul.bf16.gmra.mxu0 %v4409
      %v4624 = vpop.f32.mrf.mxu0
      %v4625 = vadd.f32 %v4377, %v4624
      %v4626 = vpop.f32.mrf.mxu0
      %v4627 = vadd.f32 %v4378, %v4626
      %4628 = vdwg.mxu0
      %s4629 = scalar_lea.vmem %s258, 80
      %4630 = vst.msk [vmem:[%s4629] sm:$0xff] %vm399, %v4625
      %4631 = vst.msk [vmem:[%s4629 + $0x8] sm:$0xff] %vm399, %v4627
      %v4640 = vunpack.c.l.b16 %v4295
      %v4641 = vunpack.c.l.b16 %v4296
      %v4642 = vunpack.c.l.b16 %v4297
      %v4643 = vunpack.c.l.b16 %v4298
      %v4644 = vunpack.c.l.b16 %v4299
      %v4645 = vunpack.c.l.b16 %v4300
      %v4646 = vunpack.c.l.b16 %v4301
      %v4647 = vunpack.c.l.b16 %v4302
      %v4648 = vpack.c.b16 %v4641, %v4640
      %v4649 = vpack.c.b16 %v4643, %v4642
      %v4650 = vpack.c.b16 %v4645, %v4644
      %v4651 = vpack.c.b16 %v4647, %v4646
      %4656 = vmatpush.bf16.msra.mxu0 0
      %4657 = vmatpush.bf16.msra.mxu0 0
      %4658 = vmatpush.bf16.msra.mxu0 0
      %4659 = vmatpush.bf16.msra.mxu0 0
      %4660 = vmatpush.bf16.msra.mxu0 %v4651
      %4661 = vmatpush.bf16.msra.mxu0 %v4650
      %4662 = vmatpush.bf16.msra.mxu0 %v4649
      %4663 = vmatpush.bf16.msra.mxu0 %v4648
      %4664 = vmatmul.bf16.gmra.mxu0 %v4409
      %v4665 = vpop.f32.mrf.mxu0
      %v4666 = vadd.f32 %v4377, %v4665
      %v4667 = vpop.f32.mrf.mxu0
      %v4668 = vadd.f32 %v4378, %v4667
      %4669 = vdwg.mxu0
      %s4670 = scalar_lea.vmem %s258, 96
      %4671 = vst.msk [vmem:[%s4670] sm:$0xff] %vm399, %v4666
      %4672 = vst.msk [vmem:[%s4670 + $0x8] sm:$0xff] %vm399, %v4668
      %v4681 = vunpack.c.l.b16 %v4303
      %v4682 = vunpack.c.l.b16 %v4304
      %v4683 = vunpack.c.l.b16 %v4305
      %v4684 = vunpack.c.l.b16 %v4306
      %v4685 = vunpack.c.l.b16 %v4307
      %v4686 = vunpack.c.l.b16 %v4308
      %v4687 = vunpack.c.l.b16 %v4309
      %v4688 = vunpack.c.l.b16 %v4310
      %v4689 = vpack.c.b16 %v4682, %v4681
      %v4690 = vpack.c.b16 %v4684, %v4683
      %v4691 = vpack.c.b16 %v4686, %v4685
      %v4692 = vpack.c.b16 %v4688, %v4687
      %4697 = vmatpush.bf16.msra.mxu0 0
      %4698 = vmatpush.bf16.msra.mxu0 0
      %4699 = vmatpush.bf16.msra.mxu0 0
      %4700 = vmatpush.bf16.msra.mxu0 0
      %4701 = vmatpush.bf16.msra.mxu0 %v4692
      %4702 = vmatpush.bf16.msra.mxu0 %v4691
      %4703 = vmatpush.bf16.msra.mxu0 %v4690
      %4704 = vmatpush.bf16.msra.mxu0 %v4689
      %4705 = vmatmul.bf16.gmra.mxu0 %v4409
      %v4706 = vpop.f32.mrf.mxu0
      %v4707 = vadd.f32 %v4377, %v4706
      %v4708 = vpop.f32.mrf.mxu0
      %v4709 = vadd.f32 %v4378, %v4708
      %4710 = vdwg.mxu0
      %s4711 = scalar_lea.vmem %s258, 112
      %4712 = vst.msk [vmem:[%s4711] sm:$0xff] %vm399, %v4707
      %4713 = vst.msk [vmem:[%s4711 + $0x8] sm:$0xff] %vm399, %v4709
      %v4722 = vunpack.c.l.b16 %v4311
      %v4723 = vunpack.c.l.b16 %v4312
      %v4724 = vunpack.c.l.b16 %v4313
      %v4725 = vunpack.c.l.b16 %v4314
      %v4726 = vunpack.c.l.b16 %v4315
      %v4727 = vunpack.c.l.b16 %v4316
      %v4728 = vunpack.c.l.b16 %v4317
      %v4729 = vunpack.c.l.b16 %v4318
      %v4730 = vpack.c.b16 %v4723, %v4722
      %v4731 = vpack.c.b16 %v4725, %v4724
      %v4732 = vpack.c.b16 %v4727, %v4726
      %v4733 = vpack.c.b16 %v4729, %v4728
      %4738 = vmatpush.bf16.msra.mxu0 0
      %4739 = vmatpush.bf16.msra.mxu0 0
      %4740 = vmatpush.bf16.msra.mxu0 0
      %4741 = vmatpush.bf16.msra.mxu0 0
      %4742 = vmatpush.bf16.msra.mxu0 %v4733
      %4743 = vmatpush.bf16.msra.mxu0 %v4732
      %4744 = vmatpush.bf16.msra.mxu0 %v4731
      %4745 = vmatpush.bf16.msra.mxu0 %v4730
      %4746 = vmatmul.bf16.gmra.mxu0 %v4409
      %v4747 = vpop.f32.mrf.mxu0
      %v4748 = vadd.f32 %v4377, %v4747
      %v4749 = vpop.f32.mrf.mxu0
      %v4750 = vadd.f32 %v4378, %v4749
      %4751 = vdwg.mxu0
      %s4752 = scalar_lea.vmem %s258, 128
      %4753 = vst.msk [vmem:[%s4752] sm:$0xff] %vm399, %v4748
      %4754 = vst.msk [vmem:[%s4752 + $0x8] sm:$0xff] %vm399, %v4750
      %v4763 = vunpack.c.l.b16 %v4319
      %v4764 = vunpack.c.l.b16 %v4320
      %v4765 = vunpack.c.l.b16 %v4321
      %v4766 = vunpack.c.l.b16 %v4322
      %v4767 = vunpack.c.l.b16 %v4323
      %v4768 = vunpack.c.l.b16 %v4324
      %v4769 = vunpack.c.l.b16 %v4325
      %v4770 = vunpack.c.l.b16 %v4326
      %v4771 = vpack.c.b16 %v4764, %v4763
      %v4772 = vpack.c.b16 %v4766, %v4765
      %v4773 = vpack.c.b16 %v4768, %v4767
      %v4774 = vpack.c.b16 %v4770, %v4769
      %4779 = vmatpush.bf16.msra.mxu0 0
      %4780 = vmatpush.bf16.msra.mxu0 0
      %4781 = vmatpush.bf16.msra.mxu0 0
      %4782 = vmatpush.bf16.msra.mxu0 0
      %4783 = vmatpush.bf16.msra.mxu0 %v4774
      %4784 = vmatpush.bf16.msra.mxu0 %v4773
      %4785 = vmatpush.bf16.msra.mxu0 %v4772
      %4786 = vmatpush.bf16.msra.mxu0 %v4771
      %4787 = vmatmul.bf16.gmra.mxu0 %v4409
      %v4788 = vpop.f32.mrf.mxu0
      %v4789 = vadd.f32 %v4377, %v4788
      %v4790 = vpop.f32.mrf.mxu0
      %v4791 = vadd.f32 %v4378, %v4790
      %4792 = vdwg.mxu0
      %s4793 = scalar_lea.vmem %s258, 144
      %4794 = vst.msk [vmem:[%s4793] sm:$0xff] %vm399, %v4789
      %4795 = vst.msk [vmem:[%s4793 + $0x8] sm:$0xff] %vm399, %v4791
      %v4804 = vunpack.c.l.b16 %v4327
      %v4805 = vunpack.c.l.b16 %v4328
      %v4806 = vunpack.c.l.b16 %v4329
      %v4807 = vunpack.c.l.b16 %v4330
      %v4808 = vunpack.c.l.b16 %v4331
      %v4809 = vunpack.c.l.b16 %v4332
      %v4810 = vunpack.c.l.b16 %v4333
      %v4811 = vunpack.c.l.b16 %v4334
      %v4812 = vpack.c.b16 %v4805, %v4804
      %v4813 = vpack.c.b16 %v4807, %v4806
      %v4814 = vpack.c.b16 %v4809, %v4808
      %v4815 = vpack.c.b16 %v4811, %v4810
      %4820 = vmatpush.bf16.msra.mxu0 0
      %4821 = vmatpush.bf16.msra.mxu0 0
      %4822 = vmatpush.bf16.msra.mxu0 0
      %4823 = vmatpush.bf16.msra.mxu0 0
      %4824 = vmatpush.bf16.msra.mxu0 %v4815
      %4825 = vmatpush.bf16.msra.mxu0 %v4814
      %4826 = vmatpush.bf16.msra.mxu0 %v4813
      %4827 = vmatpush.bf16.msra.mxu0 %v4812
      %4828 = vmatmul.bf16.gmra.mxu0 %v4409
      %v4829 = vpop.f32.mrf.mxu0
      %v4830 = vadd.f32 %v4377, %v4829
      %v4831 = vpop.f32.mrf.mxu0
      %v4832 = vadd.f32 %v4378, %v4831
      %4833 = vdwg.mxu0
      %s4834 = scalar_lea.vmem %s258, 160
      %4835 = vst.msk [vmem:[%s4834] sm:$0xff] %vm399, %v4830
      %4836 = vst.msk [vmem:[%s4834 + $0x8] sm:$0xff] %vm399, %v4832
      %v4845 = vunpack.c.l.b16 %v4335
      %v4846 = vunpack.c.l.b16 %v4336
      %v4847 = vunpack.c.l.b16 %v4337
      %v4848 = vunpack.c.l.b16 %v4338
      %v4849 = vunpack.c.l.b16 %v4339
      %v4850 = vunpack.c.l.b16 %v4340
      %v4851 = vunpack.c.l.b16 %v4341
      %v4852 = vunpack.c.l.b16 %v4342
      %v4853 = vpack.c.b16 %v4846, %v4845
      %v4854 = vpack.c.b16 %v4848, %v4847
      %v4855 = vpack.c.b16 %v4850, %v4849
      %v4856 = vpack.c.b16 %v4852, %v4851
      %4861 = vmatpush.bf16.msra.mxu0 0
      %4862 = vmatpush.bf16.msra.mxu0 0
      %4863 = vmatpush.bf16.msra.mxu0 0
      %4864 = vmatpush.bf16.msra.mxu0 0
      %4865 = vmatpush.bf16.msra.mxu0 %v4856
      %4866 = vmatpush.bf16.msra.mxu0 %v4855
      %4867 = vmatpush.bf16.msra.mxu0 %v4854
      %4868 = vmatpush.bf16.msra.mxu0 %v4853
      %4869 = vmatmul.bf16.gmra.mxu0 %v4409
      %v4870 = vpop.f32.mrf.mxu0
      %v4871 = vadd.f32 %v4377, %v4870
      %v4872 = vpop.f32.mrf.mxu0
      %v4873 = vadd.f32 %v4378, %v4872
      %4874 = vdwg.mxu0
      %s4875 = scalar_lea.vmem %s258, 176
      %4876 = vst.msk [vmem:[%s4875] sm:$0xff] %vm399, %v4871
      %4877 = vst.msk [vmem:[%s4875 + $0x8] sm:$0xff] %vm399, %v4873
      %v4886 = vunpack.c.l.b16 %v4343
      %v4887 = vunpack.c.l.b16 %v4344
      %v4888 = vunpack.c.l.b16 %v4345
      %v4889 = vunpack.c.l.b16 %v4346
      %v4890 = vunpack.c.l.b16 %v4347
      %v4891 = vunpack.c.l.b16 %v4348
      %v4892 = vunpack.c.l.b16 %v4349
      %v4893 = vunpack.c.l.b16 %v4350
      %v4894 = vpack.c.b16 %v4887, %v4886
      %v4895 = vpack.c.b16 %v4889, %v4888
      %v4896 = vpack.c.b16 %v4891, %v4890
      %v4897 = vpack.c.b16 %v4893, %v4892
      %4902 = vmatpush.bf16.msra.mxu0 0
      %4903 = vmatpush.bf16.msra.mxu0 0
      %4904 = vmatpush.bf16.msra.mxu0 0
      %4905 = vmatpush.bf16.msra.mxu0 0
      %4906 = vmatpush.bf16.msra.mxu0 %v4897
      %4907 = vmatpush.bf16.msra.mxu0 %v4896
      %4908 = vmatpush.bf16.msra.mxu0 %v4895
      %4909 = vmatpush.bf16.msra.mxu0 %v4894
      %4910 = vmatmul.bf16.gmra.mxu0 %v4409
      %v4911 = vpop.f32.mrf.mxu0
      %v4912 = vadd.f32 %v4377, %v4911
      %v4913 = vpop.f32.mrf.mxu0
      %v4914 = vadd.f32 %v4378, %v4913
      %4915 = vdwg.mxu0
      %s4916 = scalar_lea.vmem %s258, 192
      %4917 = vst.msk [vmem:[%s4916] sm:$0xff] %vm399, %v4912
      %4918 = vst.msk [vmem:[%s4916 + $0x8] sm:$0xff] %vm399, %v4914
      %v4927 = vunpack.c.l.b16 %v4351
      %v4928 = vunpack.c.l.b16 %v4352
      %v4929 = vunpack.c.l.b16 %v4353
      %v4930 = vunpack.c.l.b16 %v4354
      %v4931 = vunpack.c.l.b16 %v4355
      %v4932 = vunpack.c.l.b16 %v4356
      %v4933 = vunpack.c.l.b16 %v4357
      %v4934 = vunpack.c.l.b16 %v4358
      %v4935 = vpack.c.b16 %v4928, %v4927
      %v4936 = vpack.c.b16 %v4930, %v4929
      %v4937 = vpack.c.b16 %v4932, %v4931
      %v4938 = vpack.c.b16 %v4934, %v4933
      %4943 = vmatpush.bf16.msra.mxu0 0
      %4944 = vmatpush.bf16.msra.mxu0 0
      %4945 = vmatpush.bf16.msra.mxu0 0
      %4946 = vmatpush.bf16.msra.mxu0 0
      %4947 = vmatpush.bf16.msra.mxu0 %v4938
      %4948 = vmatpush.bf16.msra.mxu0 %v4937
      %4949 = vmatpush.bf16.msra.mxu0 %v4936
      %4950 = vmatpush.bf16.msra.mxu0 %v4935
      %4951 = vmatmul.bf16.gmra.mxu0 %v4409
      %v4952 = vpop.f32.mrf.mxu0
      %v4953 = vadd.f32 %v4377, %v4952
      %v4954 = vpop.f32.mrf.mxu0
      %v4955 = vadd.f32 %v4378, %v4954
      %4956 = vdwg.mxu0
      %s4957 = scalar_lea.vmem %s258, 208
      %4958 = vst.msk [vmem:[%s4957] sm:$0xff] %vm399, %v4953
      %4959 = vst.msk [vmem:[%s4957 + $0x8] sm:$0xff] %vm399, %v4955
      %v4968 = vunpack.c.l.b16 %v4359
      %v4969 = vunpack.c.l.b16 %v4360
      %v4970 = vunpack.c.l.b16 %v4361
      %v4971 = vunpack.c.l.b16 %v4362
      %v4972 = vunpack.c.l.b16 %v4363
      %v4973 = vunpack.c.l.b16 %v4364
      %v4974 = vunpack.c.l.b16 %v4365
      %v4975 = vunpack.c.l.b16 %v4366
      %v4976 = vpack.c.b16 %v4969, %v4968
      %v4977 = vpack.c.b16 %v4971, %v4970
      %v4978 = vpack.c.b16 %v4973, %v4972
      %v4979 = vpack.c.b16 %v4975, %v4974
      %4984 = vmatpush.bf16.msra.mxu0 0
      %4985 = vmatpush.bf16.msra.mxu0 0
      %4986 = vmatpush.bf16.msra.mxu0 0
      %4987 = vmatpush.bf16.msra.mxu0 0
      %4988 = vmatpush.bf16.msra.mxu0 %v4979
      %4989 = vmatpush.bf16.msra.mxu0 %v4978
      %4990 = vmatpush.bf16.msra.mxu0 %v4977
      %4991 = vmatpush.bf16.msra.mxu0 %v4976
      %4992 = vmatmul.bf16.gmra.mxu0 %v4409
      %v4993 = vpop.f32.mrf.mxu0
      %v4994 = vadd.f32 %v4377, %v4993
      %v4995 = vpop.f32.mrf.mxu0
      %v4996 = vadd.f32 %v4378, %v4995
      %4997 = vdwg.mxu0
      %s4998 = scalar_lea.vmem %s258, 224
      %4999 = vst.msk [vmem:[%s4998] sm:$0xff] %vm399, %v4994
      %5000 = vst.msk [vmem:[%s4998 + $0x8] sm:$0xff] %vm399, %v4996
      %v5009 = vunpack.c.l.b16 %v4367
      %v5010 = vunpack.c.l.b16 %v4368
      %v5011 = vunpack.c.l.b16 %v4369
      %v5012 = vunpack.c.l.b16 %v4370
      %v5013 = vunpack.c.l.b16 %v4371
      %v5014 = vunpack.c.l.b16 %v4372
      %v5015 = vunpack.c.l.b16 %v4373
      %v5016 = vunpack.c.l.b16 %v4374
      %v5017 = vpack.c.b16 %v5010, %v5009
      %v5018 = vpack.c.b16 %v5012, %v5011
      %v5019 = vpack.c.b16 %v5014, %v5013
      %v5020 = vpack.c.b16 %v5016, %v5015
      %5025 = vmatpush.bf16.msra.mxu0 0
      %5026 = vmatpush.bf16.msra.mxu0 0
      %5027 = vmatpush.bf16.msra.mxu0 0
      %5028 = vmatpush.bf16.msra.mxu0 0
      %5029 = vmatpush.bf16.msra.mxu0 %v5020
      %5030 = vmatpush.bf16.msra.mxu0 %v5019
      %5031 = vmatpush.bf16.msra.mxu0 %v5018
      %5032 = vmatpush.bf16.msra.mxu0 %v5017
      %5033 = vmatmul.bf16.gmra.mxu0 %v4409
      %v5034 = vpop.f32.mrf.mxu0
      %v5035 = vadd.f32 %v4377, %v5034
      %v5036 = vpop.f32.mrf.mxu0
      %v5037 = vadd.f32 %v4378, %v5036
      %5038 = vdwg.mxu0
      %s5039 = scalar_lea.vmem %s258, 240
      %5040 = vst.msk [vmem:[%s5039] sm:$0xff] %vm399, %v5035
      %5041 = vst.msk [vmem:[%s5039 + $0x8] sm:$0xff] %vm399, %v5037
      %s5042 = smul.u32 16, %s17
      %p5043 = scmp.lt.s32.totalorder %s5042, 31
      %s5044 = scalar_select %p5043, %s5042, 31
      %s5045 = smul.addr %s5044, 2
      %s5046 = smul.addr %s5045, 8
      %s5047 = scalar_lea.vmem %s6, %s5046
      // Predicated region
      $region45: #{patch_merging_forward.1} parent=43 // pred_check
        %p5048 = pneg %p166
      $region46: #{patch_merging_forward.1} parent=43 // pred_check_branch
        %5050 = sbr.rel (%p5048) target = $region48
      $region47: #{patch_merging_forward.1} parent=43 // pred_region
        %s5051 = smul.u32 16, %s17
      $region48: #{patch_merging_forward.1} parent=43 // pred_fallthru
        _
    $region44: #{patch_merging_forward.1} parent=5 // pred_fallthru
      _
    %p5052 = scmp.le.s32.totalorder 2, %s12
    // Predicated region
    $region49: #{patch_merging_forward.1} parent=5 // pred_check
      %p5053 = pneg %p5052
    $region50: #{patch_merging_forward.1} parent=5 // pred_check_branch
      %5055 = sbr.rel (%p5053) target = $region52
    $region51: #{patch_merging_forward.1} parent=5 // pred_region
      %s5056 = ssub.s32 %s12, 2
      // Predicated region
      $region53: #{patch_merging_forward.1} parent=51 // pred_check
        %p5057 = pneg %p172
      $region54: #{patch_merging_forward.1} parent=51 // pred_check_branch
        %5059 = sbr.rel (%p5057) target = $region56
      $region55: #{patch_merging_forward.1} parent=51 // pred_region
        %s5060 = smul.u32 16, %s18
        %p5061 = scmp.lt.s32.totalorder %s5060, 31
        %s5062 = scalar_select %p5061, %s5060, 31
        %s5063 = smul.addr %s5062, 2
        %s5064 = smul.addr %s5063, 8
        %s5065 = scalar_lea.vmem %s6, %s5064
      $region56: #{patch_merging_forward.1} parent=51 // pred_fallthru
        _
    $region52: #{patch_merging_forward.1} parent=5 // pred_fallthru
      _
  $region6: #{patch_merging_forward.1} parent=0 // loop_footer
    %s16 = sadd.s32 1, %s12
  $region7: #{patch_merging_forward.1} parent=0 // loop_footer_branch
    %11 = sbr.rel target = $region3
  $region8: #{patch_merging_forward.1} parent=0 // loop_exit
    _

</llo_original>
